<compile_context>
chip_gen: v5e
topology: v5e:2x2
jax: 0.10.0
libtpu: 0.0.40
codegen_flags: <defaults>
</compile_context>

<pallas_src>
import functools

import jax
import jax.numpy as jnp
from jax.experimental import pallas as pl
from jax.experimental.pallas import tpu as pltpu

# ------------------------- small synthetic config ---------------------------
VOCAB = 33          # ESM alphabet size
EMBED_DIM = 128     # (ESM-1b: 1280)
NUM_HEADS = 2       # (ESM-1b: 20)
HEAD_DIM = EMBED_DIM // NUM_HEADS
FFN_DIM = 256       # (ESM-1b: 5120)
NUM_LAYERS = 2      # (ESM-1b: 33) -> representations[33] == final-layer output after final LN
NUM_LABELS = 8
CONV_HID = 64       # (TAPE SimpleConv hidden: 512)
LANE = 128          # lane-dense padding of CONV_HID / NUM_LABELS inside the head
MAX_LEN = 64
LN_EPS = 1e-5
BN_EPS = 1e-5

BATCH = 2
SEQ = 16


# ------------------------------ kernel helpers -------------------------------
def _ln(x, g, b, eps=LN_EPS):
    mu = jnp.mean(x, axis=-1, keepdims=True)
    var = jnp.mean(jnp.square(x - mu), axis=-1, keepdims=True)
    return (x - mu) * jax.lax.rsqrt(var + eps) * g + b


# ------------------- fused encoder stack + classification head ----------------
def _model_kernel(x_ref, bias_ref, beg_ref, beb_ref,
                  alg_ref, alb_ref, wqkv_ref, bqkv_ref, wo_ref, bo_ref,
                  flg_ref, flb_ref, w1_ref, b1_ref, w2_ref, b2_ref,
                  ag_ref, ab_ref, bng_ref, bnb_ref,
                  hw1_ref, hb1_ref, hw2_ref, hb2_ref,
                  o_ref, acc_ref, *, num_heads, seq):
    layer = pl.program_id(0)
    bt, e = acc_ref.shape
    dh = e // num_heads

    @pl.when(layer == 0)
    def _():
        # emb_layer_norm_before fused into the first layer iteration
        acc_ref[...] = _ln(x_ref[...], beg_ref[...], beb_ref[...])

    x = acc_ref[...]                                  # (B*T, E) f32 residual stream (VMEM-resident)

    # ----- pre-LN multi-head self-attention + residual -----
    h = _ln(x, alg_ref[0], alb_ref[0]).astype(jnp.bfloat16)
    # fused QKV projection: one (bt,E) @ (E,3E) matmul (q-scale folded into wq/bq at init)
    qkv = jnp.dot(h, wqkv_ref[0], preferred_element_type=jnp.float32) + bqkv_ref[0]
    q = qkv[:, :e]
    k = qkv[:, e:2 * e].astype(jnp.bfloat16)
    v = qkv[:, 2 * e:]

    bias = bias_ref[...]                              # layer-invariant block-diagonal mask (input)
    lane = jax.lax.broadcasted_iota(jnp.int32, (bt, e), 1)
    contract_last = (((1,), (1,)), ((), ()))          # q @ k^T without materializing a transpose

    # Per-head math on full-width (K=128) operands: head-h lanes selected by masking, so each
    # head's context lands in its own lane range and their sum is the concatenated context.
    ctx = jnp.zeros((bt, e), jnp.float32)
    for hh in range(num_heads):                       # static head loop (2 heads at toy size)
        m = jnp.logical_and(lane >= hh * dh, lane < (hh + 1) * dh)
        qh = jnp.where(m, q, 0.0).astype(jnp.bfloat16)
        s = jax.lax.dot_general(qh, k, contract_last,
                                preferred_element_type=jnp.float32) + bias
        s = s - jnp.max(s, axis=-1, keepdims=True)
        p = jnp.exp(s)
        p = p * pl.reciprocal(jnp.sum(p, axis=-1, keepdims=True), approx=True)
        vh = jnp.where(m, v, 0.0).astype(jnp.bfloat16)
        ctx = ctx + jnp.dot(p.astype(jnp.bfloat16), vh, preferred_element_type=jnp.float32)
    # single full-K output projection
    x = x + jnp.dot(ctx.astype(jnp.bfloat16), wo_ref[0],
                    preferred_element_type=jnp.float32) + bo_ref[0]

    # ----- pre-LN feed-forward + residual -----
    h = _ln(x, flg_ref[0], flb_ref[0]).astype(jnp.bfloat16)
    h1 = jnp.dot(h, w1_ref[0], preferred_element_type=jnp.float32) + b1_ref[0]
    h1 = jax.nn.gelu(h1, approximate=True).astype(jnp.bfloat16)
    x = x + jnp.dot(h1, w2_ref[0], preferred_element_type=jnp.float32) + b2_ref[0]
    acc_ref[...] = x

    # ----- final LN + classification head fused into the last grid step -----
    @pl.when(layer == pl.num_programs(0) - 1)
    def _():
        y = _ln(x, ag_ref[...], ab_ref[...])          # emb_layer_norm_after

        # BatchNorm1d (training statistics): per-channel over all B*T positions (biased var)
        mu = jnp.mean(y, axis=0, keepdims=True)
        var = jnp.mean(jnp.square(y - mu), axis=0, keepdims=True)
        yn = (y - mu) * jax.lax.rsqrt(var + BN_EPS) * bng_ref[...] + bnb_ref[...]

        # position of each flattened row inside its sequence (for "same"-padding edge masks)
        pos = jax.lax.broadcasted_iota(jnp.int32, (bt, 1), 0) % seq

        def conv1d(a, w_ref, b_ref, ksize, pad):
            # center tap
            out = jnp.dot(a.astype(jnp.bfloat16), w_ref[pad],
                          preferred_element_type=jnp.float32) + b_ref[...]
            # off-center taps: sublane roll (XLU) + per-row validity mask, no shift matmuls
            for kk in range(ksize):
                d = kk - pad
                if d == 0:
                    continue
                tap = pltpu.roll(a, (-d) % bt, 0)     # tap[t] = a[(t + d) mod bt]
                valid = jnp.logical_and(pos + d >= 0, pos + d < seq)
                tap = jnp.where(valid, tap, 0.0).astype(jnp.bfloat16)
                out = out + jnp.dot(tap, w_ref[kk], preferred_element_type=jnp.float32)
            return out

        h1c = jnp.maximum(conv1d(yn, hw1_ref, hb1_ref, 5, 2), 0.0)   # Conv1d(E->hid,k=5,p=2)+ReLU
        o_ref[...] = conv1d(h1c, hw2_ref, hb2_ref, 3, 1)             # Conv1d(hid->labels,k=3,p=1)


def protein_bert_s2s(params, x, attn_bias, seq):
    bt, e = x.shape
    nl = params['wqkv'].shape[0]
    full_pre = [attn_bias, params['emb_ln_before_g'], params['emb_ln_before_b']]
    stacked = [params['attn_ln_g'], params['attn_ln_b'],
               params['wqkv'], params['bqkv'], params['wo'], params['bo'],
               params['ffn_ln_g'], params['ffn_ln_b'],
               params['w1'], params['b1'], params['w2'], params['b2']]
    head = [params['emb_ln_after_g'], params['emb_ln_after_b'],
            params['head_bn_g'], params['head_bn_b'],
            params['head_w1'], params['head_b1'],
            params['head_w2'], params['head_b2']]
    in_specs = [pl.BlockSpec((bt, e), lambda l: (0, 0))]
    in_specs += [pl.BlockSpec(w.shape, lambda l, nd=w.ndim: (0,) * nd) for w in full_pre]
    in_specs += [pl.BlockSpec((1,) + w.shape[1:],
                              lambda l, nd=w.ndim: (l,) + (0,) * (nd - 1)) for w in stacked]
    in_specs += [pl.BlockSpec(w.shape, lambda l, nd=w.ndim: (0,) * nd) for w in head]
    return pl.pallas_call(
        functools.partial(_model_kernel, num_heads=NUM_HEADS, seq=seq),
        out_shape=jax.ShapeDtypeStruct((bt, LANE), jnp.float32),     # lane-dense logits
        grid_spec=pltpu.PrefetchScalarGridSpec(
            num_scalar_prefetch=0,
            grid=(nl,),
            in_specs=in_specs,
            out_specs=pl.BlockSpec((bt, LANE), lambda l: (0, 0)),
            scratch_shapes=[pltpu.VMEM((bt, e), jnp.float32)]),      # residual stream
        compiler_params=pltpu.CompilerParams(
            dimension_semantics=("arbitrary",),
            vmem_limit_bytes=32 * 1024 * 1024),
    )(x, attn_bias, params['emb_ln_before_g'], params['emb_ln_before_b'],
      *stacked, *head)


# ------------------------------ model / forward -------------------------------
def init_params(key):
    kit = iter(jax.random.split(key, 64))

    def nrm(shape, scale=0.02):
        return (scale * jax.random.normal(next(kit), shape)).astype(jnp.float32)

    ones = lambda s: jnp.ones(s, jnp.float32)
    zeros = lambda s: jnp.zeros(s, jnp.float32)
    bf16 = lambda a: a.astype(jnp.bfloat16)
    L, E, F = NUM_LAYERS, EMBED_DIM, FFN_DIM
    qscale = HEAD_DIM ** -0.5

    # fused QKV projection; q-scale folded into BOTH wq and bq (correctness fix from review)
    wq = nrm((L, E, E)) * qscale
    wk = nrm((L, E, E))
    wv = nrm((L, E, E))
    bq = zeros((L, 1, E)) * qscale
    bk = zeros((L, 1, E))
    bv = zeros((L, 1, E))
    wqkv = bf16(jnp.concatenate([wq, wk, wv], axis=-1))     # (L, E, 3E)
    bqkv = jnp.concatenate([bq, bk, bv], axis=-1)           # (L, 1, 3E) f32

    # head conv weights zero-padded lane-dense (CONV_HID -> 128, NUM_LABELS -> 128)
    hw1 = jnp.zeros((5, E, LANE), jnp.float32).at[:, :, :CONV_HID].set(nrm((5, E, CONV_HID)))
    hw2 = jnp.zeros((3, LANE, LANE), jnp.float32).at[:, :CONV_HID, :NUM_LABELS].set(
        nrm((3, CONV_HID, NUM_LABELS)))

    return dict(
        embed_tokens=nrm((VOCAB, E)),
        pos_emb=nrm((MAX_LEN, E)),
        emb_ln_before_g=ones((1, E)), emb_ln_before_b=zeros((1, E)),
        emb_ln_after_g=ones((1, E)), emb_ln_after_b=zeros((1, E)),
        # per-layer weights stacked with a leading L axis (indexed by the layer grid step)
        attn_ln_g=ones((L, 1, E)), attn_ln_b=zeros((L, 1, E)),
        wqkv=wqkv, bqkv=bqkv,
        wo=bf16(nrm((L, E, E))), bo=zeros((L, 1, E)),
        ffn_ln_g=ones((L, 1, E)), ffn_ln_b=zeros((L, 1, E)),
        w1=bf16(nrm((L, E, F))), b1=zeros((L, 1, F)),
        w2=bf16(nrm((L, F, E))), b2=zeros((L, 1, E)),
        # classification head
        head_bn_g=ones((1, E)), head_bn_b=zeros((1, E)),
        head_w1=bf16(hw1), head_b1=zeros((1, LANE)),
        head_w2=bf16(hw2), head_b2=zeros((1, LANE)),
    )


def forward(params, input_ids, msa_ids=None, targets=None, finetune=True):
    # TODO(synk): msa_ids / targets(loss) / finetune have no forward-pass effect here (see header).
    del msa_ids, targets, finetune
    b, t = input_ids.shape
    # --- self.bert(input_ids, repr_layers=[33]) ---
    # TODO(synk): embedding gather + pos add left as XLA glue (in-kernel gather via scalar
    #             prefetch is a marginal win at these shapes).
    x = jnp.take(params['embed_tokens'], input_ids, axis=0)            # (B, T, E)
    x = x + params['pos_emb'][:t][None, :, :]                          # learned positional emb
    x = x.reshape(b * t, EMBED_DIM)                                    # collapse batch into rows
    # layer-invariant block-diagonal attention bias, computed once (not per layer)
    seq_ids = jnp.arange(b * t, dtype=jnp.int32) // t
    attn_bias = jnp.where(seq_ids[:, None] == seq_ids[None, :], 0.0, -1e30).astype(jnp.float32)
    # --- fused encoder + classify(sequence_output, targets=None) -> (sequence_logits,) ---
    y = protein_bert_s2s(params, x, attn_bias, seq=t)                  # (B*T, 128) lane-dense
    sequence_logits = y.reshape(b, t, LANE)[..., :NUM_LABELS]          # (B, T, NUM_LABELS)
    return (sequence_logits,)


if __name__ == "__main__":
    key = jax.random.PRNGKey(0)
    pkey, ikey = jax.random.split(key)
    params = init_params(pkey)
    input_ids = jax.random.randint(ikey, (BATCH, SEQ), 0, VOCAB, dtype=jnp.int32)

    (logits,) = forward(params, input_ids)
    logits = jax.block_until_ready(logits)

    assert logits.shape == (BATCH, SEQ, NUM_LABELS), logits.shape
    assert logits.dtype == jnp.float32
    assert bool(jnp.all(jnp.isfinite(logits)))
    print("KERNEL_OK")
</pallas_src>

<mosaic_0001>
module attributes {stable_mosaic.version = 11 : i64} {
  func.func @_model_kernel(%arg0: i32, %arg1: memref<32x128xf32, #tpu.memory_space<vmem>>, %arg2: memref<32x32xf32, #tpu.memory_space<vmem>>, %arg3: memref<1x128xf32, #tpu.memory_space<vmem>>, %arg4: memref<1x128xf32, #tpu.memory_space<vmem>>, %arg5: memref<1x1x128xf32, #tpu.memory_space<vmem>>, %arg6: memref<1x1x128xf32, #tpu.memory_space<vmem>>, %arg7: memref<1x128x384xbf16, #tpu.memory_space<vmem>>, %arg8: memref<1x1x384xf32, #tpu.memory_space<vmem>>, %arg9: memref<1x128x128xbf16, #tpu.memory_space<vmem>>, %arg10: memref<1x1x128xf32, #tpu.memory_space<vmem>>, %arg11: memref<1x1x128xf32, #tpu.memory_space<vmem>>, %arg12: memref<1x1x128xf32, #tpu.memory_space<vmem>>, %arg13: memref<1x128x256xbf16, #tpu.memory_space<vmem>>, %arg14: memref<1x1x256xf32, #tpu.memory_space<vmem>>, %arg15: memref<1x256x128xbf16, #tpu.memory_space<vmem>>, %arg16: memref<1x1x128xf32, #tpu.memory_space<vmem>>, %arg17: memref<1x128xf32, #tpu.memory_space<vmem>>, %arg18: memref<1x128xf32, #tpu.memory_space<vmem>>, %arg19: memref<1x128xf32, #tpu.memory_space<vmem>>, %arg20: memref<1x128xf32, #tpu.memory_space<vmem>>, %arg21: memref<5x128x128xbf16, #tpu.memory_space<vmem>>, %arg22: memref<1x128xf32, #tpu.memory_space<vmem>>, %arg23: memref<3x128x128xbf16, #tpu.memory_space<vmem>>, %arg24: memref<1x128xf32, #tpu.memory_space<vmem>>, %arg25: memref<32x128xf32, #tpu.memory_space<vmem>>, %arg26: memref<32x128xf32, #tpu.memory_space<vmem>>) attributes {dimension_semantics = [#tpu.dimension_semantics<arbitrary>], iteration_bounds = array<i64: 2>, scalar_prefetch = 0 : i64, scratch_operands = 1 : i64, tpu.core_type = #tpu.core_type<tc>, window_params = [{pipeline_mode = #tpu.pipeline_mode<synchronous>, transform_indices = @transform_0, window_bounds = array<i64: 32, 128>}, {pipeline_mode = #tpu.pipeline_mode<synchronous>, transform_indices = @transform_1, window_bounds = array<i64: 32, 32>}, {pipeline_mode = #tpu.pipeline_mode<synchronous>, transform_indices = @transform_2, window_bounds = array<i64: 1, 128>}, {pipeline_mode = #tpu.pipeline_mode<synchronous>, transform_indices = @transform_3, window_bounds = array<i64: 1, 128>}, {transform_indices = @transform_4, window_bounds = array<i64: 1, 1, 128>}, {transform_indices = @transform_5, window_bounds = array<i64: 1, 1, 128>}, {transform_indices = @transform_6, window_bounds = array<i64: 1, 128, 384>}, {transform_indices = @transform_7, window_bounds = array<i64: 1, 1, 384>}, {transform_indices = @transform_8, window_bounds = array<i64: 1, 128, 128>}, {transform_indices = @transform_9, window_bounds = array<i64: 1, 1, 128>}, {transform_indices = @transform_10, window_bounds = array<i64: 1, 1, 128>}, {transform_indices = @transform_11, window_bounds = array<i64: 1, 1, 128>}, {transform_indices = @transform_12, window_bounds = array<i64: 1, 128, 256>}, {transform_indices = @transform_13, window_bounds = array<i64: 1, 1, 256>}, {transform_indices = @transform_14, window_bounds = array<i64: 1, 256, 128>}, {transform_indices = @transform_15, window_bounds = array<i64: 1, 1, 128>}, {pipeline_mode = #tpu.pipeline_mode<synchronous>, transform_indices = @transform_16, window_bounds = array<i64: 1, 128>}, {pipeline_mode = #tpu.pipeline_mode<synchronous>, transform_indices = @transform_17, window_bounds = array<i64: 1, 128>}, {pipeline_mode = #tpu.pipeline_mode<synchronous>, transform_indices = @transform_18, window_bounds = array<i64: 1, 128>}, {pipeline_mode = #tpu.pipeline_mode<synchronous>, transform_indices = @transform_19, window_bounds = array<i64: 1, 128>}, {pipeline_mode = #tpu.pipeline_mode<synchronous>, transform_indices = @transform_20, window_bounds = array<i64: 5, 128, 128>}, {pipeline_mode = #tpu.pipeline_mode<synchronous>, transform_indices = @transform_21, window_bounds = array<i64: 1, 128>}, {pipeline_mode = #tpu.pipeline_mode<synchronous>, transform_indices = @transform_22, window_bounds = array<i64: 3, 128, 128>}, {pipeline_mode = #tpu.pipeline_mode<synchronous>, transform_indices = @transform_23, window_bounds = array<i64: 1, 128>}, {pipeline_mode = #tpu.pipeline_mode<synchronous>, transform_indices = @transform_24, window_bounds = array<i64: 32, 128>}]} {
    %c0_i32 = arith.constant 0 : i32
    %0 = arith.cmpi eq, %arg0, %c0_i32 : i32
    %1 = arith.extui %0 : i1 to i32
    %c0_i32_0 = arith.constant 0 : i32
    %2 = arith.cmpi ne, %1, %c0_i32_0 : i32
    scf.if %2 {
      %c0_75 = arith.constant 0 : index
      %c0_76 = arith.constant 0 : index
      %166 = vector.load %arg1[%c0_75, %c0_76] : memref<32x128xf32, #tpu.memory_space<vmem>>, vector<32x128xf32>
      %c0_77 = arith.constant 0 : index
      %c0_78 = arith.constant 0 : index
      %167 = vector.load %arg3[%c0_77, %c0_78] : memref<1x128xf32, #tpu.memory_space<vmem>>, vector<1x128xf32>
      %c0_79 = arith.constant 0 : index
      %c0_80 = arith.constant 0 : index
      %168 = vector.load %arg4[%c0_79, %c0_80] : memref<1x128xf32, #tpu.memory_space<vmem>>, vector<1x128xf32>
      %cst_81 = arith.constant dense<0.000000e+00> : vector<32xf32>
      %169 = vector.multi_reduction <add>, %166, %cst_81 [1] : vector<32x128xf32> to vector<32xf32>
      %170 = vector.shape_cast %169 : vector<32xf32> to vector<32x1xf32>
      %cst_82 = arith.constant 1.280000e+02 : f32
      %171 = vector.broadcast %cst_82 : f32 to vector<32x1xf32>
      %172 = arith.divf %170, %171 : vector<32x1xf32>
      %173 = vector.broadcast %172 : vector<32x1xf32> to vector<32x128xf32>
      %174 = arith.subf %166, %173 : vector<32x128xf32>
      %175 = arith.mulf %174, %174 : vector<32x128xf32>
      %cst_83 = arith.constant dense<0.000000e+00> : vector<32xf32>
      %176 = vector.multi_reduction <add>, %175, %cst_83 [1] : vector<32x128xf32> to vector<32xf32>
      %177 = vector.shape_cast %176 : vector<32xf32> to vector<32x1xf32>
      %cst_84 = arith.constant 1.280000e+02 : f32
      %178 = vector.broadcast %cst_84 : f32 to vector<32x1xf32>
      %179 = arith.divf %177, %178 : vector<32x1xf32>
      %180 = vector.broadcast %172 : vector<32x1xf32> to vector<32x128xf32>
      %181 = arith.subf %166, %180 : vector<32x128xf32>
      %cst_85 = arith.constant 9.99999974E-6 : f32
      %182 = vector.broadcast %cst_85 : f32 to vector<32x1xf32>
      %183 = arith.addf %179, %182 : vector<32x1xf32>
      %184 = math.rsqrt %183 : vector<32x1xf32>
      %185 = vector.broadcast %184 : vector<32x1xf32> to vector<32x128xf32>
      %186 = arith.mulf %181, %185 : vector<32x128xf32>
      %187 = vector.broadcast %167 : vector<1x128xf32> to vector<32x128xf32>
      %188 = arith.mulf %186, %187 : vector<32x128xf32>
      %189 = vector.broadcast %168 : vector<1x128xf32> to vector<32x128xf32>
      %190 = arith.addf %188, %189 : vector<32x128xf32>
      %c0_86 = arith.constant 0 : index
      %c0_87 = arith.constant 0 : index
      %191 = vector.load %arg26[%c0_86, %c0_87] : memref<32x128xf32, #tpu.memory_space<vmem>>, vector<32x128xf32>
      tpu.vector_store %arg26[%c0_86, %c0_87], %190 {strides = array<i32>} : memref<32x128xf32, #tpu.memory_space<vmem>>, vector<32x128xf32>,
    } else {
    }
    %c0 = arith.constant 0 : index
    %c0_1 = arith.constant 0 : index
    %3 = vector.load %arg26[%c0, %c0_1] : memref<32x128xf32, #tpu.memory_space<vmem>>, vector<32x128xf32>
    %c0_2 = arith.constant 0 : index
    %c0_3 = arith.constant 0 : index
    %c0_4 = arith.constant 0 : index
    %4 = vector.load %arg5[%c0_2, %c0_3, %c0_4] : memref<1x1x128xf32, #tpu.memory_space<vmem>>, vector<1x1x128xf32>
    %5 = vector.shape_cast %4 : vector<1x1x128xf32> to vector<1x128xf32>
    %c0_5 = arith.constant 0 : index
    %c0_6 = arith.constant 0 : index
    %c0_7 = arith.constant 0 : index
    %6 = vector.load %arg6[%c0_5, %c0_6, %c0_7] : memref<1x1x128xf32, #tpu.memory_space<vmem>>, vector<1x1x128xf32>
    %7 = vector.shape_cast %6 : vector<1x1x128xf32> to vector<1x128xf32>
    %cst = arith.constant dense<0.000000e+00> : vector<32xf32>
    %8 = vector.multi_reduction <add>, %3, %cst [1] : vector<32x128xf32> to vector<32xf32>
    %9 = vector.shape_cast %8 : vector<32xf32> to vector<32x1xf32>
    %cst_8 = arith.constant 1.280000e+02 : f32
    %10 = vector.broadcast %cst_8 : f32 to vector<32x1xf32>
    %11 = arith.divf %9, %10 : vector<32x1xf32>
    %12 = vector.broadcast %11 : vector<32x1xf32> to vector<32x128xf32>
    %13 = arith.subf %3, %12 : vector<32x128xf32>
    %14 = arith.mulf %13, %13 : vector<32x128xf32>
    %cst_9 = arith.constant dense<0.000000e+00> : vector<32xf32>
    %15 = vector.multi_reduction <add>, %14, %cst_9 [1] : vector<32x128xf32> to vector<32xf32>
    %16 = vector.shape_cast %15 : vector<32xf32> to vector<32x1xf32>
    %cst_10 = arith.constant 1.280000e+02 : f32
    %17 = vector.broadcast %cst_10 : f32 to vector<32x1xf32>
    %18 = arith.divf %16, %17 : vector<32x1xf32>
    %19 = vector.broadcast %11 : vector<32x1xf32> to vector<32x128xf32>
    %20 = arith.subf %3, %19 : vector<32x128xf32>
    %cst_11 = arith.constant 9.99999974E-6 : f32
    %21 = vector.broadcast %cst_11 : f32 to vector<32x1xf32>
    %22 = arith.addf %18, %21 : vector<32x1xf32>
    %23 = math.rsqrt %22 : vector<32x1xf32>
    %24 = vector.broadcast %23 : vector<32x1xf32> to vector<32x128xf32>
    %25 = arith.mulf %20, %24 : vector<32x128xf32>
    %26 = vector.broadcast %5 : vector<1x128xf32> to vector<32x128xf32>
    %27 = arith.mulf %25, %26 : vector<32x128xf32>
    %28 = vector.broadcast %7 : vector<1x128xf32> to vector<32x128xf32>
    %29 = arith.addf %27, %28 : vector<32x128xf32>
    %30 = arith.truncf %29 : vector<32x128xf32> to vector<32x128xbf16>
    %c0_12 = arith.constant 0 : index
    %c0_13 = arith.constant 0 : index
    %c0_14 = arith.constant 0 : index
    %31 = vector.load %arg7[%c0_12, %c0_13, %c0_14] : memref<1x128x384xbf16, #tpu.memory_space<vmem>>, vector<1x128x384xbf16>
    %32 = vector.shape_cast %31 : vector<1x128x384xbf16> to vector<128x384xbf16>
    %cst_15 = arith.constant dense<0.000000e+00> : vector<32x384xf32>
    %33 = tpu.matmul %30, %32, %cst_15 {dimension_numbers = #tpu.dot_dimension_numbers<[1], [0], [0], [1], [0, 0, 1, 1], [], []>} : vector<32x128xbf16>, vector<128x384xbf16>, vector<32x384xf32> -> vector<32x384xf32>
    %c0_16 = arith.constant 0 : index
    %c0_17 = arith.constant 0 : index
    %c0_18 = arith.constant 0 : index
    %34 = vector.load %arg8[%c0_16, %c0_17, %c0_18] : memref<1x1x384xf32, #tpu.memory_space<vmem>>, vector<1x1x384xf32>
    %35 = vector.shape_cast %34 : vector<1x1x384xf32> to vector<1x384xf32>
    %36 = vector.broadcast %35 : vector<1x384xf32> to vector<32x384xf32>
    %37 = arith.addf %33, %36 : vector<32x384xf32>
    %38 = vector.extract_strided_slice %37 {offsets = [0, 0], sizes = [32, 128], strides = [1, 1]} : vector<32x384xf32> to vector<32x128xf32>
    %39 = vector.extract_strided_slice %37 {offsets = [0, 128], sizes = [32, 128], strides = [1, 1]} : vector<32x384xf32> to vector<32x128xf32>
    %40 = arith.truncf %39 : vector<32x128xf32> to vector<32x128xbf16>
    %41 = vector.extract_strided_slice %37 {offsets = [0, 256], sizes = [32, 128], strides = [1, 1]} : vector<32x384xf32> to vector<32x128xf32>
    %c0_19 = arith.constant 0 : index
    %c0_20 = arith.constant 0 : index
    %42 = vector.load %arg2[%c0_19, %c0_20] : memref<32x32xf32, #tpu.memory_space<vmem>>, vector<32x32xf32>
    %43 = tpu.iota {dimensions = array<i32: 1>} : vector<32x128xi32>
    %cst_21 = arith.constant 0.000000e+00 : f32
    %44 = vector.broadcast %cst_21 : f32 to vector<32x128xf32>
    %c0_i32_22 = arith.constant 0 : i32
    %45 = vector.broadcast %c0_i32_22 : i32 to vector<32x128xi32>
    %46 = arith.cmpi sge, %43, %45 : vector<32x128xi32>
    %c64_i32 = arith.constant 64 : i32
    %47 = vector.broadcast %c64_i32 : i32 to vector<32x128xi32>
    %48 = arith.cmpi slt, %43, %47 : vector<32x128xi32>
    %49 = arith.andi %46, %48 : vector<32x128xi1>
    %cst_23 = arith.constant 0.000000e+00 : f32
    %50 = vector.broadcast %cst_23 : f32 to vector<32x128xf32>
    %51 = arith.select %49, %38, %50 : vector<32x128xi1>, vector<32x128xf32>
    %52 = arith.truncf %51 : vector<32x128xf32> to vector<32x128xbf16>
    %cst_24 = arith.constant dense<0.000000e+00> : vector<32x32xf32>
    %53 = tpu.matmul %52, %40, %cst_24 {dimension_numbers = #tpu.dot_dimension_numbers<[1], [1], [0], [0], [0, 0, 1, 0], [], []>} : vector<32x128xbf16>, vector<32x128xbf16>, vector<32x32xf32> -> vector<32x32xf32>
    %54 = arith.addf %53, %42 : vector<32x32xf32>
    %cst_25 = arith.constant dense<0xFF800000> : vector<32xf32>
    %55 = vector.multi_reduction <maximumf>, %54, %cst_25 [1] : vector<32x32xf32> to vector<32xf32>
    %56 = vector.shape_cast %55 : vector<32xf32> to vector<32x1xf32>
    %57 = vector.broadcast %56 : vector<32x1xf32> to vector<32x32xf32>
    %58 = arith.subf %54, %57 : vector<32x32xf32>
    %59 = math.exp %58 : vector<32x32xf32>
    %cst_26 = arith.constant dense<0.000000e+00> : vector<32xf32>
    %60 = vector.multi_reduction <add>, %59, %cst_26 [1] : vector<32x32xf32> to vector<32xf32>
    %61 = vector.shape_cast %60 : vector<32xf32> to vector<32x1xf32>
    %62 = tpu.reciprocal %61 {approx = true} : vector<32x1xf32> -> vector<32x1xf32>
    %63 = vector.broadcast %62 : vector<32x1xf32> to vector<32x32xf32>
    %64 = arith.mulf %59, %63 : vector<32x32xf32>
    %cst_27 = arith.constant 0.000000e+00 : f32
    %65 = vector.broadcast %cst_27 : f32 to vector<32x128xf32>
    %66 = arith.select %49, %41, %65 : vector<32x128xi1>, vector<32x128xf32>
    %67 = arith.truncf %66 : vector<32x128xf32> to vector<32x128xbf16>
    %68 = arith.truncf %64 : vector<32x32xf32> to vector<32x32xbf16>
    %cst_28 = arith.constant dense<0.000000e+00> : vector<32x128xf32>
    %69 = tpu.matmul %68, %67, %cst_28 {dimension_numbers = #tpu.dot_dimension_numbers<[1], [0], [0], [1], [0, 0, 1, 1], [], []>} : vector<32x32xbf16>, vector<32x128xbf16>, vector<32x128xf32> -> vector<32x128xf32>
    %70 = arith.addf %44, %69 : vector<32x128xf32>
    %c64_i32_29 = arith.constant 64 : i32
    %71 = vector.broadcast %c64_i32_29 : i32 to vector<32x128xi32>
    %72 = arith.cmpi sge, %43, %71 : vector<32x128xi32>
    %c128_i32 = arith.constant 128 : i32
    %73 = vector.broadcast %c128_i32 : i32 to vector<32x128xi32>
    %74 = arith.cmpi slt, %43, %73 : vector<32x128xi32>
    %75 = arith.andi %72, %74 : vector<32x128xi1>
    %cst_30 = arith.constant 0.000000e+00 : f32
    %76 = vector.broadcast %cst_30 : f32 to vector<32x128xf32>
    %77 = arith.select %75, %38, %76 : vector<32x128xi1>, vector<32x128xf32>
    %78 = arith.truncf %77 : vector<32x128xf32> to vector<32x128xbf16>
    %cst_31 = arith.constant dense<0.000000e+00> : vector<32x32xf32>
    %79 = tpu.matmul %78, %40, %cst_31 {dimension_numbers = #tpu.dot_dimension_numbers<[1], [1], [0], [0], [0, 0, 1, 0], [], []>} : vector<32x128xbf16>, vector<32x128xbf16>, vector<32x32xf32> -> vector<32x32xf32>
    %80 = arith.addf %79, %42 : vector<32x32xf32>
    %cst_32 = arith.constant dense<0xFF800000> : vector<32xf32>
    %81 = vector.multi_reduction <maximumf>, %80, %cst_32 [1] : vector<32x32xf32> to vector<32xf32>
    %82 = vector.shape_cast %81 : vector<32xf32> to vector<32x1xf32>
    %83 = vector.broadcast %82 : vector<32x1xf32> to vector<32x32xf32>
    %84 = arith.subf %80, %83 : vector<32x32xf32>
    %85 = math.exp %84 : vector<32x32xf32>
    %cst_33 = arith.constant dense<0.000000e+00> : vector<32xf32>
    %86 = vector.multi_reduction <add>, %85, %cst_33 [1] : vector<32x32xf32> to vector<32xf32>
    %87 = vector.shape_cast %86 : vector<32xf32> to vector<32x1xf32>
    %88 = tpu.reciprocal %87 {approx = true} : vector<32x1xf32> -> vector<32x1xf32>
    %89 = vector.broadcast %88 : vector<32x1xf32> to vector<32x32xf32>
    %90 = arith.mulf %85, %89 : vector<32x32xf32>
    %cst_34 = arith.constant 0.000000e+00 : f32
    %91 = vector.broadcast %cst_34 : f32 to vector<32x128xf32>
    %92 = arith.select %75, %41, %91 : vector<32x128xi1>, vector<32x128xf32>
    %93 = arith.truncf %92 : vector<32x128xf32> to vector<32x128xbf16>
    %94 = arith.truncf %90 : vector<32x32xf32> to vector<32x32xbf16>
    %cst_35 = arith.constant dense<0.000000e+00> : vector<32x128xf32>
    %95 = tpu.matmul %94, %93, %cst_35 {dimension_numbers = #tpu.dot_dimension_numbers<[1], [0], [0], [1], [0, 0, 1, 1], [], []>} : vector<32x32xbf16>, vector<32x128xbf16>, vector<32x128xf32> -> vector<32x128xf32>
    %96 = arith.addf %70, %95 : vector<32x128xf32>
    %97 = arith.truncf %96 : vector<32x128xf32> to vector<32x128xbf16>
    %c0_36 = arith.constant 0 : index
    %c0_37 = arith.constant 0 : index
    %c0_38 = arith.constant 0 : index
    %98 = vector.load %arg9[%c0_36, %c0_37, %c0_38] : memref<1x128x128xbf16, #tpu.memory_space<vmem>>, vector<1x128x128xbf16>
    %99 = vector.shape_cast %98 : vector<1x128x128xbf16> to vector<128x128xbf16>
    %cst_39 = arith.constant dense<0.000000e+00> : vector<32x128xf32>
    %100 = tpu.matmul %97, %99, %cst_39 {dimension_numbers = #tpu.dot_dimension_numbers<[1], [0], [0], [1], [0, 0, 1, 1], [], []>} : vector<32x128xbf16>, vector<128x128xbf16>, vector<32x128xf32> -> vector<32x128xf32>
    %101 = arith.addf %3, %100 : vector<32x128xf32>
    %c0_40 = arith.constant 0 : index
    %c0_41 = arith.constant 0 : index
    %c0_42 = arith.constant 0 : index
    %102 = vector.load %arg10[%c0_40, %c0_41, %c0_42] : memref<1x1x128xf32, #tpu.memory_space<vmem>>, vector<1x1x128xf32>
    %103 = vector.shape_cast %102 : vector<1x1x128xf32> to vector<1x128xf32>
    %104 = vector.broadcast %103 : vector<1x128xf32> to vector<32x128xf32>
    %105 = arith.addf %101, %104 : vector<32x128xf32>
    %c0_43 = arith.constant 0 : index
    %c0_44 = arith.constant 0 : index
    %c0_45 = arith.constant 0 : index
    %106 = vector.load %arg11[%c0_43, %c0_44, %c0_45] : memref<1x1x128xf32, #tpu.memory_space<vmem>>, vector<1x1x128xf32>
    %107 = vector.shape_cast %106 : vector<1x1x128xf32> to vector<1x128xf32>
    %c0_46 = arith.constant 0 : index
    %c0_47 = arith.constant 0 : index
    %c0_48 = arith.constant 0 : index
    %108 = vector.load %arg12[%c0_46, %c0_47, %c0_48] : memref<1x1x128xf32, #tpu.memory_space<vmem>>, vector<1x1x128xf32>
    %109 = vector.shape_cast %108 : vector<1x1x128xf32> to vector<1x128xf32>
    %cst_49 = arith.constant dense<0.000000e+00> : vector<32xf32>
    %110 = vector.multi_reduction <add>, %105, %cst_49 [1] : vector<32x128xf32> to vector<32xf32>
    %111 = vector.shape_cast %110 : vector<32xf32> to vector<32x1xf32>
    %cst_50 = arith.constant 1.280000e+02 : f32
    %112 = vector.broadcast %cst_50 : f32 to vector<32x1xf32>
    %113 = arith.divf %111, %112 : vector<32x1xf32>
    %114 = vector.broadcast %113 : vector<32x1xf32> to vector<32x128xf32>
    %115 = arith.subf %105, %114 : vector<32x128xf32>
    %116 = arith.mulf %115, %115 : vector<32x128xf32>
    %cst_51 = arith.constant dense<0.000000e+00> : vector<32xf32>
    %117 = vector.multi_reduction <add>, %116, %cst_51 [1] : vector<32x128xf32> to vector<32xf32>
    %118 = vector.shape_cast %117 : vector<32xf32> to vector<32x1xf32>
    %cst_52 = arith.constant 1.280000e+02 : f32
    %119 = vector.broadcast %cst_52 : f32 to vector<32x1xf32>
    %120 = arith.divf %118, %119 : vector<32x1xf32>
    %121 = vector.broadcast %113 : vector<32x1xf32> to vector<32x128xf32>
    %122 = arith.subf %105, %121 : vector<32x128xf32>
    %cst_53 = arith.constant 9.99999974E-6 : f32
    %123 = vector.broadcast %cst_53 : f32 to vector<32x1xf32>
    %124 = arith.addf %120, %123 : vector<32x1xf32>
    %125 = math.rsqrt %124 : vector<32x1xf32>
    %126 = vector.broadcast %125 : vector<32x1xf32> to vector<32x128xf32>
    %127 = arith.mulf %122, %126 : vector<32x128xf32>
    %128 = vector.broadcast %107 : vector<1x128xf32> to vector<32x128xf32>
    %129 = arith.mulf %127, %128 : vector<32x128xf32>
    %130 = vector.broadcast %109 : vector<1x128xf32> to vector<32x128xf32>
    %131 = arith.addf %129, %130 : vector<32x128xf32>
    %132 = arith.truncf %131 : vector<32x128xf32> to vector<32x128xbf16>
    %c0_54 = arith.constant 0 : index
    %c0_55 = arith.constant 0 : index
    %c0_56 = arith.constant 0 : index
    %133 = vector.load %arg13[%c0_54, %c0_55, %c0_56] : memref<1x128x256xbf16, #tpu.memory_space<vmem>>, vector<1x128x256xbf16>
    %134 = vector.shape_cast %133 : vector<1x128x256xbf16> to vector<128x256xbf16>
    %cst_57 = arith.constant dense<0.000000e+00> : vector<32x256xf32>
    %135 = tpu.matmul %132, %134, %cst_57 {dimension_numbers = #tpu.dot_dimension_numbers<[1], [0], [0], [1], [0, 0, 1, 1], [], []>} : vector<32x128xbf16>, vector<128x256xbf16>, vector<32x256xf32> -> vector<32x256xf32>
    %c0_58 = arith.constant 0 : index
    %c0_59 = arith.constant 0 : index
    %c0_60 = arith.constant 0 : index
    %136 = vector.load %arg14[%c0_58, %c0_59, %c0_60] : memref<1x1x256xf32, #tpu.memory_space<vmem>>, vector<1x1x256xf32>
    %137 = vector.shape_cast %136 : vector<1x1x256xf32> to vector<1x256xf32>
    %138 = vector.broadcast %137 : vector<1x256xf32> to vector<32x256xf32>
    %139 = arith.addf %135, %138 : vector<32x256xf32>
    %140 = arith.mulf %139, %139 : vector<32x256xf32>
    %141 = arith.mulf %139, %140 : vector<32x256xf32>
    %cst_61 = arith.constant 4.471500e-02 : f32
    %142 = vector.broadcast %cst_61 : f32 to vector<32x256xf32>
    %143 = arith.mulf %142, %141 : vector<32x256xf32>
    %144 = arith.addf %139, %143 : vector<32x256xf32>
    %cst_62 = arith.constant 0.797884583 : f32
    %145 = vector.broadcast %cst_62 : f32 to vector<32x256xf32>
    %146 = arith.mulf %145, %144 : vector<32x256xf32>
    %147 = math.tanh %146 : vector<32x256xf32>
    %cst_63 = arith.constant 1.000000e+00 : f32
    %148 = vector.broadcast %cst_63 : f32 to vector<32x256xf32>
    %149 = arith.addf %148, %147 : vector<32x256xf32>
    %cst_64 = arith.constant 5.000000e-01 : f32
    %150 = vector.broadcast %cst_64 : f32 to vector<32x256xf32>
    %151 = arith.mulf %150, %149 : vector<32x256xf32>
    %152 = arith.mulf %139, %151 : vector<32x256xf32>
    %153 = arith.truncf %152 : vector<32x256xf32> to vector<32x256xbf16>
    %c0_65 = arith.constant 0 : index
    %c0_66 = arith.constant 0 : index
    %c0_67 = arith.constant 0 : index
    %154 = vector.load %arg15[%c0_65, %c0_66, %c0_67] : memref<1x256x128xbf16, #tpu.memory_space<vmem>>, vector<1x256x128xbf16>
    %155 = vector.shape_cast %154 : vector<1x256x128xbf16> to vector<256x128xbf16>
    %cst_68 = arith.constant dense<0.000000e+00> : vector<32x128xf32>
    %156 = tpu.matmul %153, %155, %cst_68 {dimension_numbers = #tpu.dot_dimension_numbers<[1], [0], [0], [1], [0, 0, 1, 1], [], []>} : vector<32x256xbf16>, vector<256x128xbf16>, vector<32x128xf32> -> vector<32x128xf32>
    %157 = arith.addf %105, %156 : vector<32x128xf32>
    %c0_69 = arith.constant 0 : index
    %c0_70 = arith.constant 0 : index
    %c0_71 = arith.constant 0 : index
    %158 = vector.load %arg16[%c0_69, %c0_70, %c0_71] : memref<1x1x128xf32, #tpu.memory_space<vmem>>, vector<1x1x128xf32>
    %159 = vector.shape_cast %158 : vector<1x1x128xf32> to vector<1x128xf32>
    %160 = vector.broadcast %159 : vector<1x128xf32> to vector<32x128xf32>
    %161 = arith.addf %157, %160 : vector<32x128xf32>
    %c0_72 = arith.constant 0 : index
    %c0_73 = arith.constant 0 : index
    %162 = vector.load %arg26[%c0_72, %c0_73] : memref<32x128xf32, #tpu.memory_space<vmem>>, vector<32x128xf32>
    tpu.vector_store %arg26[%c0_72, %c0_73], %161 {strides = array<i32>} : memref<32x128xf32, #tpu.memory_space<vmem>>, vector<32x128xf32>,
    %c1_i32 = arith.constant 1 : i32
    %163 = arith.cmpi eq, %arg0, %c1_i32 : i32
    %164 = arith.extui %163 : i1 to i32
    %c0_i32_74 = arith.constant 0 : i32
    %165 = arith.cmpi ne, %164, %c0_i32_74 : i32
    scf.if %165 {
      %c0_75 = arith.constant 0 : index
      %c0_76 = arith.constant 0 : index
      %166 = vector.load %arg17[%c0_75, %c0_76] : memref<1x128xf32, #tpu.memory_space<vmem>>, vector<1x128xf32>
      %c0_77 = arith.constant 0 : index
      %c0_78 = arith.constant 0 : index
      %167 = vector.load %arg18[%c0_77, %c0_78] : memref<1x128xf32, #tpu.memory_space<vmem>>, vector<1x128xf32>
      %cst_79 = arith.constant dense<0.000000e+00> : vector<32xf32>
      %168 = vector.multi_reduction <add>, %161, %cst_79 [1] : vector<32x128xf32> to vector<32xf32>
      %169 = vector.shape_cast %168 : vector<32xf32> to vector<32x1xf32>
      %cst_80 = arith.constant 1.280000e+02 : f32
      %170 = vector.broadcast %cst_80 : f32 to vector<32x1xf32>
      %171 = arith.divf %169, %170 : vector<32x1xf32>
      %172 = vector.broadcast %171 : vector<32x1xf32> to vector<32x128xf32>
      %173 = arith.subf %161, %172 : vector<32x128xf32>
      %174 = arith.mulf %173, %173 : vector<32x128xf32>
      %cst_81 = arith.constant dense<0.000000e+00> : vector<32xf32>
      %175 = vector.multi_reduction <add>, %174, %cst_81 [1] : vector<32x128xf32> to vector<32xf32>
      %176 = vector.shape_cast %175 : vector<32xf32> to vector<32x1xf32>
      %cst_82 = arith.constant 1.280000e+02 : f32
      %177 = vector.broadcast %cst_82 : f32 to vector<32x1xf32>
      %178 = arith.divf %176, %177 : vector<32x1xf32>
      %179 = vector.broadcast %171 : vector<32x1xf32> to vector<32x128xf32>
      %180 = arith.subf %161, %179 : vector<32x128xf32>
      %cst_83 = arith.constant 9.99999974E-6 : f32
      %181 = vector.broadcast %cst_83 : f32 to vector<32x1xf32>
      %182 = arith.addf %178, %181 : vector<32x1xf32>
      %183 = math.rsqrt %182 : vector<32x1xf32>
      %184 = vector.broadcast %183 : vector<32x1xf32> to vector<32x128xf32>
      %185 = arith.mulf %180, %184 : vector<32x128xf32>
      %186 = vector.broadcast %166 : vector<1x128xf32> to vector<32x128xf32>
      %187 = arith.mulf %185, %186 : vector<32x128xf32>
      %188 = vector.broadcast %167 : vector<1x128xf32> to vector<32x128xf32>
      %189 = arith.addf %187, %188 : vector<32x128xf32>
      %cst_84 = arith.constant dense<0.000000e+00> : vector<128xf32>
      %190 = vector.multi_reduction <add>, %189, %cst_84 [0] : vector<32x128xf32> to vector<128xf32>
      %191 = vector.shape_cast %190 : vector<128xf32> to vector<1x128xf32>
      %cst_85 = arith.constant 3.200000e+01 : f32
      %192 = vector.broadcast %cst_85 : f32 to vector<1x128xf32>
      %193 = arith.divf %191, %192 : vector<1x128xf32>
      %194 = vector.broadcast %193 : vector<1x128xf32> to vector<32x128xf32>
      %195 = arith.subf %189, %194 : vector<32x128xf32>
      %196 = arith.mulf %195, %195 : vector<32x128xf32>
      %cst_86 = arith.constant dense<0.000000e+00> : vector<128xf32>
      %197 = vector.multi_reduction <add>, %196, %cst_86 [0] : vector<32x128xf32> to vector<128xf32>
      %198 = vector.shape_cast %197 : vector<128xf32> to vector<1x128xf32>
      %cst_87 = arith.constant 3.200000e+01 : f32
      %199 = vector.broadcast %cst_87 : f32 to vector<1x128xf32>
      %200 = arith.divf %198, %199 : vector<1x128xf32>
      %201 = vector.broadcast %193 : vector<1x128xf32> to vector<32x128xf32>
      %202 = arith.subf %189, %201 : vector<32x128xf32>
      %cst_88 = arith.constant 9.99999974E-6 : f32
      %203 = vector.broadcast %cst_88 : f32 to vector<1x128xf32>
      %204 = arith.addf %200, %203 : vector<1x128xf32>
      %205 = math.rsqrt %204 : vector<1x128xf32>
      %206 = vector.broadcast %205 : vector<1x128xf32> to vector<32x128xf32>
      %207 = arith.mulf %202, %206 : vector<32x128xf32>
      %c0_89 = arith.constant 0 : index
      %c0_90 = arith.constant 0 : index
      %208 = vector.load %arg19[%c0_89, %c0_90] : memref<1x128xf32, #tpu.memory_space<vmem>>, vector<1x128xf32>
      %209 = vector.broadcast %208 : vector<1x128xf32> to vector<32x128xf32>
      %210 = arith.mulf %207, %209 : vector<32x128xf32>
      %c0_91 = arith.constant 0 : index
      %c0_92 = arith.constant 0 : index
      %211 = vector.load %arg20[%c0_91, %c0_92] : memref<1x128xf32, #tpu.memory_space<vmem>>, vector<1x128xf32>
      %212 = vector.broadcast %211 : vector<1x128xf32> to vector<32x128xf32>
      %213 = arith.addf %210, %212 : vector<32x128xf32>
      %214 = tpu.iota {dimensions = array<i32: 0>} : vector<32x1xi32>
      %c16_i32 = arith.constant 16 : i32
      %c0_i32_93 = arith.constant 0 : i32
      %215 = arith.cmpi eq, %c16_i32, %c0_i32_93 : i32
      %c1_i32_94 = arith.constant 1 : i32
      %216 = arith.select %215, %c1_i32_94, %c16_i32 : i32
      %217 = vector.broadcast %216 : i32 to vector<32x1xi32>
      %218 = arith.remsi %214, %217 : vector<32x1xi32>
      %c0_i32_95 = arith.constant 0 : i32
      %219 = vector.broadcast %c0_i32_95 : i32 to vector<32x1xi32>
      %220 = arith.cmpi ne, %218, %219 : vector<32x1xi32>
      %c0_i32_96 = arith.constant 0 : i32
      %221 = vector.broadcast %c0_i32_96 : i32 to vector<32x1xi32>
      %222 = arith.cmpi slt, %218, %221 : vector<32x1xi32>
      %c0_i32_97 = arith.constant 0 : i32
      %223 = arith.cmpi slt, %216, %c0_i32_97 : i32
      %224 = vector.broadcast %223 : i1 to vector<32x1xi1>
      %225 = vector.broadcast %224 : vector<32x1xi1> to vector<32x1xi1>
      %226 = arith.xori %222, %225 : vector<32x1xi1>
      %227 = arith.andi %226, %220 : vector<32x1xi1>
      %228 = vector.broadcast %216 : i32 to vector<32x1xi32>
      %229 = arith.addi %218, %228 : vector<32x1xi32>
      %230 = arith.select %227, %229, %218 : vector<32x1xi1>, vector<32x1xi32>
      %231 = arith.truncf %213 : vector<32x128xf32> to vector<32x128xbf16>
      %c2 = arith.constant 2 : index
      %c0_98 = arith.constant 0 : index
      %c0_99 = arith.constant 0 : index
      %232 = vector.load %arg21[%c2, %c0_98, %c0_99] : memref<5x128x128xbf16, #tpu.memory_space<vmem>>, vector<1x128x128xbf16>
      %233 = vector.shape_cast %232 : vector<1x128x128xbf16> to vector<128x128xbf16>
      %cst_100 = arith.constant dense<0.000000e+00> : vector<32x128xf32>
      %234 = tpu.matmul %231, %233, %cst_100 {dimension_numbers = #tpu.dot_dimension_numbers<[1], [0], [0], [1], [0, 0, 1, 1], [], []>} : vector<32x128xbf16>, vector<128x128xbf16>, vector<32x128xf32> -> vector<32x128xf32>
      %c0_101 = arith.constant 0 : index
      %c0_102 = arith.constant 0 : index
      %235 = vector.load %arg22[%c0_101, %c0_102] : memref<1x128xf32, #tpu.memory_space<vmem>>, vector<1x128xf32>
      %236 = vector.broadcast %235 : vector<1x128xf32> to vector<32x128xf32>
      %237 = arith.addf %234, %236 : vector<32x128xf32>
      %c2_i32 = arith.constant 2 : i32
      %238 = tpu.dynamic_rotate %213 by %c2_i32 dim 0 : vector<32x128xf32>, i32 -> vector<32x128xf32>
      %c-2_i32 = arith.constant -2 : i32
      %239 = vector.broadcast %c-2_i32 : i32 to vector<32x1xi32>
      %240 = arith.addi %230, %239 : vector<32x1xi32>
      %c0_i32_103 = arith.constant 0 : i32
      %241 = vector.broadcast %c0_i32_103 : i32 to vector<32x1xi32>
      %242 = arith.cmpi sge, %240, %241 : vector<32x1xi32>
      %c-2_i32_104 = arith.constant -2 : i32
      %243 = vector.broadcast %c-2_i32_104 : i32 to vector<32x1xi32>
      %244 = arith.addi %230, %243 : vector<32x1xi32>
      %c16_i32_105 = arith.constant 16 : i32
      %245 = vector.broadcast %c16_i32_105 : i32 to vector<32x1xi32>
      %246 = arith.cmpi slt, %244, %245 : vector<32x1xi32>
      %247 = arith.andi %242, %246 : vector<32x1xi1>
      %cst_106 = arith.constant 0.000000e+00 : f32
      %248 = vector.shape_cast %247 : vector<32x1xi1> to vector<32x1xi1>
      %249 = vector.broadcast %248 : vector<32x1xi1> to vector<32x128xi1>
      %250 = vector.broadcast %cst_106 : f32 to vector<32x128xf32>
      %251 = arith.select %249, %238, %250 : vector<32x128xi1>, vector<32x128xf32>
      %252 = arith.truncf %251 : vector<32x128xf32> to vector<32x128xbf16>
      %c0_107 = arith.constant 0 : index
      %c0_108 = arith.constant 0 : index
      %c0_109 = arith.constant 0 : index
      %253 = vector.load %arg21[%c0_107, %c0_108, %c0_109] : memref<5x128x128xbf16, #tpu.memory_space<vmem>>, vector<1x128x128xbf16>
      %254 = vector.shape_cast %253 : vector<1x128x128xbf16> to vector<128x128xbf16>
      %cst_110 = arith.constant dense<0.000000e+00> : vector<32x128xf32>
      %255 = tpu.matmul %252, %254, %cst_110 {dimension_numbers = #tpu.dot_dimension_numbers<[1], [0], [0], [1], [0, 0, 1, 1], [], []>} : vector<32x128xbf16>, vector<128x128xbf16>, vector<32x128xf32> -> vector<32x128xf32>
      %256 = arith.addf %237, %255 : vector<32x128xf32>
      %c1_i32_111 = arith.constant 1 : i32
      %257 = tpu.dynamic_rotate %213 by %c1_i32_111 dim 0 : vector<32x128xf32>, i32 -> vector<32x128xf32>
      %c-1_i32 = arith.constant -1 : i32
      %258 = vector.broadcast %c-1_i32 : i32 to vector<32x1xi32>
      %259 = arith.addi %230, %258 : vector<32x1xi32>
      %c0_i32_112 = arith.constant 0 : i32
      %260 = vector.broadcast %c0_i32_112 : i32 to vector<32x1xi32>
      %261 = arith.cmpi sge, %259, %260 : vector<32x1xi32>
      %c-1_i32_113 = arith.constant -1 : i32
      %262 = vector.broadcast %c-1_i32_113 : i32 to vector<32x1xi32>
      %263 = arith.addi %230, %262 : vector<32x1xi32>
      %c16_i32_114 = arith.constant 16 : i32
      %264 = vector.broadcast %c16_i32_114 : i32 to vector<32x1xi32>
      %265 = arith.cmpi slt, %263, %264 : vector<32x1xi32>
      %266 = arith.andi %261, %265 : vector<32x1xi1>
      %cst_115 = arith.constant 0.000000e+00 : f32
      %267 = vector.shape_cast %266 : vector<32x1xi1> to vector<32x1xi1>
      %268 = vector.broadcast %267 : vector<32x1xi1> to vector<32x128xi1>
      %269 = vector.broadcast %cst_115 : f32 to vector<32x128xf32>
      %270 = arith.select %268, %257, %269 : vector<32x128xi1>, vector<32x128xf32>
      %271 = arith.truncf %270 : vector<32x128xf32> to vector<32x128xbf16>
      %c1 = arith.constant 1 : index
      %c0_116 = arith.constant 0 : index
      %c0_117 = arith.constant 0 : index
      %272 = vector.load %arg21[%c1, %c0_116, %c0_117] : memref<5x128x128xbf16, #tpu.memory_space<vmem>>, vector<1x128x128xbf16>
      %273 = vector.shape_cast %272 : vector<1x128x128xbf16> to vector<128x128xbf16>
      %cst_118 = arith.constant dense<0.000000e+00> : vector<32x128xf32>
      %274 = tpu.matmul %271, %273, %cst_118 {dimension_numbers = #tpu.dot_dimension_numbers<[1], [0], [0], [1], [0, 0, 1, 1], [], []>} : vector<32x128xbf16>, vector<128x128xbf16>, vector<32x128xf32> -> vector<32x128xf32>
      %275 = arith.addf %256, %274 : vector<32x128xf32>
      %c31_i32 = arith.constant 31 : i32
      %276 = tpu.dynamic_rotate %213 by %c31_i32 dim 0 : vector<32x128xf32>, i32 -> vector<32x128xf32>
      %c1_i32_119 = arith.constant 1 : i32
      %277 = vector.broadcast %c1_i32_119 : i32 to vector<32x1xi32>
      %278 = arith.addi %230, %277 : vector<32x1xi32>
      %c0_i32_120 = arith.constant 0 : i32
      %279 = vector.broadcast %c0_i32_120 : i32 to vector<32x1xi32>
      %280 = arith.cmpi sge, %278, %279 : vector<32x1xi32>
      %c1_i32_121 = arith.constant 1 : i32
      %281 = vector.broadcast %c1_i32_121 : i32 to vector<32x1xi32>
      %282 = arith.addi %230, %281 : vector<32x1xi32>
      %c16_i32_122 = arith.constant 16 : i32
      %283 = vector.broadcast %c16_i32_122 : i32 to vector<32x1xi32>
      %284 = arith.cmpi slt, %282, %283 : vector<32x1xi32>
      %285 = arith.andi %280, %284 : vector<32x1xi1>
      %cst_123 = arith.constant 0.000000e+00 : f32
      %286 = vector.shape_cast %285 : vector<32x1xi1> to vector<32x1xi1>
      %287 = vector.broadcast %286 : vector<32x1xi1> to vector<32x128xi1>
      %288 = vector.broadcast %cst_123 : f32 to vector<32x128xf32>
      %289 = arith.select %287, %276, %288 : vector<32x128xi1>, vector<32x128xf32>
      %290 = arith.truncf %289 : vector<32x128xf32> to vector<32x128xbf16>
      %c3 = arith.constant 3 : index
      %c0_124 = arith.constant 0 : index
      %c0_125 = arith.constant 0 : index
      %291 = vector.load %arg21[%c3, %c0_124, %c0_125] : memref<5x128x128xbf16, #tpu.memory_space<vmem>>, vector<1x128x128xbf16>
      %292 = vector.shape_cast %291 : vector<1x128x128xbf16> to vector<128x128xbf16>
      %cst_126 = arith.constant dense<0.000000e+00> : vector<32x128xf32>
      %293 = tpu.matmul %290, %292, %cst_126 {dimension_numbers = #tpu.dot_dimension_numbers<[1], [0], [0], [1], [0, 0, 1, 1], [], []>} : vector<32x128xbf16>, vector<128x128xbf16>, vector<32x128xf32> -> vector<32x128xf32>
      %294 = arith.addf %275, %293 : vector<32x128xf32>
      %c30_i32 = arith.constant 30 : i32
      %295 = tpu.dynamic_rotate %213 by %c30_i32 dim 0 : vector<32x128xf32>, i32 -> vector<32x128xf32>
      %c2_i32_127 = arith.constant 2 : i32
      %296 = vector.broadcast %c2_i32_127 : i32 to vector<32x1xi32>
      %297 = arith.addi %230, %296 : vector<32x1xi32>
      %c0_i32_128 = arith.constant 0 : i32
      %298 = vector.broadcast %c0_i32_128 : i32 to vector<32x1xi32>
      %299 = arith.cmpi sge, %297, %298 : vector<32x1xi32>
      %c2_i32_129 = arith.constant 2 : i32
      %300 = vector.broadcast %c2_i32_129 : i32 to vector<32x1xi32>
      %301 = arith.addi %230, %300 : vector<32x1xi32>
      %c16_i32_130 = arith.constant 16 : i32
      %302 = vector.broadcast %c16_i32_130 : i32 to vector<32x1xi32>
      %303 = arith.cmpi slt, %301, %302 : vector<32x1xi32>
      %304 = arith.andi %299, %303 : vector<32x1xi1>
      %cst_131 = arith.constant 0.000000e+00 : f32
      %305 = vector.shape_cast %304 : vector<32x1xi1> to vector<32x1xi1>
      %306 = vector.broadcast %305 : vector<32x1xi1> to vector<32x128xi1>
      %307 = vector.broadcast %cst_131 : f32 to vector<32x128xf32>
      %308 = arith.select %306, %295, %307 : vector<32x128xi1>, vector<32x128xf32>
      %309 = arith.truncf %308 : vector<32x128xf32> to vector<32x128xbf16>
      %c4 = arith.constant 4 : index
      %c0_132 = arith.constant 0 : index
      %c0_133 = arith.constant 0 : index
      %310 = vector.load %arg21[%c4, %c0_132, %c0_133] : memref<5x128x128xbf16, #tpu.memory_space<vmem>>, vector<1x128x128xbf16>
      %311 = vector.shape_cast %310 : vector<1x128x128xbf16> to vector<128x128xbf16>
      %cst_134 = arith.constant dense<0.000000e+00> : vector<32x128xf32>
      %312 = tpu.matmul %309, %311, %cst_134 {dimension_numbers = #tpu.dot_dimension_numbers<[1], [0], [0], [1], [0, 0, 1, 1], [], []>} : vector<32x128xbf16>, vector<128x128xbf16>, vector<32x128xf32> -> vector<32x128xf32>
      %313 = arith.addf %294, %312 : vector<32x128xf32>
      %cst_135 = arith.constant 0.000000e+00 : f32
      %314 = vector.broadcast %cst_135 : f32 to vector<32x128xf32>
      %315 = arith.maximumf %313, %314 : vector<32x128xf32>
      %316 = arith.truncf %315 : vector<32x128xf32> to vector<32x128xbf16>
      %c1_136 = arith.constant 1 : index
      %c0_137 = arith.constant 0 : index
      %c0_138 = arith.constant 0 : index
      %317 = vector.load %arg23[%c1_136, %c0_137, %c0_138] : memref<3x128x128xbf16, #tpu.memory_space<vmem>>, vector<1x128x128xbf16>
      %318 = vector.shape_cast %317 : vector<1x128x128xbf16> to vector<128x128xbf16>
      %cst_139 = arith.constant dense<0.000000e+00> : vector<32x128xf32>
      %319 = tpu.matmul %316, %318, %cst_139 {dimension_numbers = #tpu.dot_dimension_numbers<[1], [0], [0], [1], [0, 0, 1, 1], [], []>} : vector<32x128xbf16>, vector<128x128xbf16>, vector<32x128xf32> -> vector<32x128xf32>
      %c0_140 = arith.constant 0 : index
      %c0_141 = arith.constant 0 : index
      %320 = vector.load %arg24[%c0_140, %c0_141] : memref<1x128xf32, #tpu.memory_space<vmem>>, vector<1x128xf32>
      %321 = vector.broadcast %320 : vector<1x128xf32> to vector<32x128xf32>
      %322 = arith.addf %319, %321 : vector<32x128xf32>
      %c1_i32_142 = arith.constant 1 : i32
      %323 = tpu.dynamic_rotate %315 by %c1_i32_142 dim 0 : vector<32x128xf32>, i32 -> vector<32x128xf32>
      %c-1_i32_143 = arith.constant -1 : i32
      %324 = vector.broadcast %c-1_i32_143 : i32 to vector<32x1xi32>
      %325 = arith.addi %230, %324 : vector<32x1xi32>
      %c0_i32_144 = arith.constant 0 : i32
      %326 = vector.broadcast %c0_i32_144 : i32 to vector<32x1xi32>
      %327 = arith.cmpi sge, %325, %326 : vector<32x1xi32>
      %c-1_i32_145 = arith.constant -1 : i32
      %328 = vector.broadcast %c-1_i32_145 : i32 to vector<32x1xi32>
      %329 = arith.addi %230, %328 : vector<32x1xi32>
      %c16_i32_146 = arith.constant 16 : i32
      %330 = vector.broadcast %c16_i32_146 : i32 to vector<32x1xi32>
      %331 = arith.cmpi slt, %329, %330 : vector<32x1xi32>
      %332 = arith.andi %327, %331 : vector<32x1xi1>
      %cst_147 = arith.constant 0.000000e+00 : f32
      %333 = vector.shape_cast %332 : vector<32x1xi1> to vector<32x1xi1>
      %334 = vector.broadcast %333 : vector<32x1xi1> to vector<32x128xi1>
      %335 = vector.broadcast %cst_147 : f32 to vector<32x128xf32>
      %336 = arith.select %334, %323, %335 : vector<32x128xi1>, vector<32x128xf32>
      %337 = arith.truncf %336 : vector<32x128xf32> to vector<32x128xbf16>
      %c0_148 = arith.constant 0 : index
      %c0_149 = arith.constant 0 : index
      %c0_150 = arith.constant 0 : index
      %338 = vector.load %arg23[%c0_148, %c0_149, %c0_150] : memref<3x128x128xbf16, #tpu.memory_space<vmem>>, vector<1x128x128xbf16>
      %339 = vector.shape_cast %338 : vector<1x128x128xbf16> to vector<128x128xbf16>
      %cst_151 = arith.constant dense<0.000000e+00> : vector<32x128xf32>
      %340 = tpu.matmul %337, %339, %cst_151 {dimension_numbers = #tpu.dot_dimension_numbers<[1], [0], [0], [1], [0, 0, 1, 1], [], []>} : vector<32x128xbf16>, vector<128x128xbf16>, vector<32x128xf32> -> vector<32x128xf32>
      %341 = arith.addf %322, %340 : vector<32x128xf32>
      %c31_i32_152 = arith.constant 31 : i32
      %342 = tpu.dynamic_rotate %315 by %c31_i32_152 dim 0 : vector<32x128xf32>, i32 -> vector<32x128xf32>
      %c1_i32_153 = arith.constant 1 : i32
      %343 = vector.broadcast %c1_i32_153 : i32 to vector<32x1xi32>
      %344 = arith.addi %230, %343 : vector<32x1xi32>
      %c0_i32_154 = arith.constant 0 : i32
      %345 = vector.broadcast %c0_i32_154 : i32 to vector<32x1xi32>
      %346 = arith.cmpi sge, %344, %345 : vector<32x1xi32>
      %c1_i32_155 = arith.constant 1 : i32
      %347 = vector.broadcast %c1_i32_155 : i32 to vector<32x1xi32>
      %348 = arith.addi %230, %347 : vector<32x1xi32>
      %c16_i32_156 = arith.constant 16 : i32
      %349 = vector.broadcast %c16_i32_156 : i32 to vector<32x1xi32>
      %350 = arith.cmpi slt, %348, %349 : vector<32x1xi32>
      %351 = arith.andi %346, %350 : vector<32x1xi1>
      %cst_157 = arith.constant 0.000000e+00 : f32
      %352 = vector.shape_cast %351 : vector<32x1xi1> to vector<32x1xi1>
      %353 = vector.broadcast %352 : vector<32x1xi1> to vector<32x128xi1>
      %354 = vector.broadcast %cst_157 : f32 to vector<32x128xf32>
      %355 = arith.select %353, %342, %354 : vector<32x128xi1>, vector<32x128xf32>
      %356 = arith.truncf %355 : vector<32x128xf32> to vector<32x128xbf16>
      %c2_158 = arith.constant 2 : index
      %c0_159 = arith.constant 0 : index
      %c0_160 = arith.constant 0 : index
      %357 = vector.load %arg23[%c2_158, %c0_159, %c0_160] : memref<3x128x128xbf16, #tpu.memory_space<vmem>>, vector<1x128x128xbf16>
      %358 = vector.shape_cast %357 : vector<1x128x128xbf16> to vector<128x128xbf16>
      %cst_161 = arith.constant dense<0.000000e+00> : vector<32x128xf32>
      %359 = tpu.matmul %356, %358, %cst_161 {dimension_numbers = #tpu.dot_dimension_numbers<[1], [0], [0], [1], [0, 0, 1, 1], [], []>} : vector<32x128xbf16>, vector<128x128xbf16>, vector<32x128xf32> -> vector<32x128xf32>
      %360 = arith.addf %341, %359 : vector<32x128xf32>
      %c0_162 = arith.constant 0 : index
      %c0_163 = arith.constant 0 : index
      %361 = vector.load %arg25[%c0_162, %c0_163] : memref<32x128xf32, #tpu.memory_space<vmem>>, vector<32x128xf32>
      tpu.vector_store %arg25[%c0_162, %c0_163], %360 {strides = array<i32>} : memref<32x128xf32, #tpu.memory_space<vmem>>, vector<32x128xf32>,
    } else {
    }
    return
  }
  func.func @transform_0(%arg0: i32) -> (i32, i32) {
    %c0_i32 = arith.constant 0 : i32
    %c0_i32_0 = arith.constant 0 : i32
    %c0_i32_1 = arith.constant 0 : i32
    return %c0_i32, %c0_i32_0 : i32, i32
  }
  func.func @transform_1(%arg0: i32) -> (i32, i32) {
    %c0_i32 = arith.constant 0 : i32
    %c0_i32_0 = arith.constant 0 : i32
    %c0_i32_1 = arith.constant 0 : i32
    return %c0_i32, %c0_i32_0 : i32, i32
  }
  func.func @transform_2(%arg0: i32) -> (i32, i32) {
    %c0_i32 = arith.constant 0 : i32
    %c0_i32_0 = arith.constant 0 : i32
    %c0_i32_1 = arith.constant 0 : i32
    return %c0_i32, %c0_i32_0 : i32, i32
  }
  func.func @transform_3(%arg0: i32) -> (i32, i32) {
    %c0_i32 = arith.constant 0 : i32
    %c0_i32_0 = arith.constant 0 : i32
    %c0_i32_1 = arith.constant 0 : i32
    return %c0_i32, %c0_i32_0 : i32, i32
  }
  func.func @transform_4(%arg0: i32) -> (i32, i32, i32) {
    %c0_i32 = arith.constant 0 : i32
    %c0_i32_0 = arith.constant 0 : i32
    %c0_i32_1 = arith.constant 0 : i32
    return %arg0, %c0_i32, %c0_i32_0 : i32, i32, i32
  }
  func.func @transform_5(%arg0: i32) -> (i32, i32, i32) {
    %c0_i32 = arith.constant 0 : i32
    %c0_i32_0 = arith.constant 0 : i32
    %c0_i32_1 = arith.constant 0 : i32
    return %arg0, %c0_i32, %c0_i32_0 : i32, i32, i32
  }
  func.func @transform_6(%arg0: i32) -> (i32, i32, i32) {
    %c0_i32 = arith.constant 0 : i32
    %c0_i32_0 = arith.constant 0 : i32
    %c0_i32_1 = arith.constant 0 : i32
    return %arg0, %c0_i32, %c0_i32_0 : i32, i32, i32
  }
  func.func @transform_7(%arg0: i32) -> (i32, i32, i32) {
    %c0_i32 = arith.constant 0 : i32
    %c0_i32_0 = arith.constant 0 : i32
    %c0_i32_1 = arith.constant 0 : i32
    return %arg0, %c0_i32, %c0_i32_0 : i32, i32, i32
  }
  func.func @transform_8(%arg0: i32) -> (i32, i32, i32) {
    %c0_i32 = arith.constant 0 : i32
    %c0_i32_0 = arith.constant 0 : i32
    %c0_i32_1 = arith.constant 0 : i32
    return %arg0, %c0_i32, %c0_i32_0 : i32, i32, i32
  }
  func.func @transform_9(%arg0: i32) -> (i32, i32, i32) {
    %c0_i32 = arith.constant 0 : i32
    %c0_i32_0 = arith.constant 0 : i32
    %c0_i32_1 = arith.constant 0 : i32
    return %arg0, %c0_i32, %c0_i32_0 : i32, i32, i32
  }
  func.func @transform_10(%arg0: i32) -> (i32, i32, i32) {
    %c0_i32 = arith.constant 0 : i32
    %c0_i32_0 = arith.constant 0 : i32
    %c0_i32_1 = arith.constant 0 : i32
    return %arg0, %c0_i32, %c0_i32_0 : i32, i32, i32
  }
  func.func @transform_11(%arg0: i32) -> (i32, i32, i32) {
    %c0_i32 = arith.constant 0 : i32
    %c0_i32_0 = arith.constant 0 : i32
    %c0_i32_1 = arith.constant 0 : i32
    return %arg0, %c0_i32, %c0_i32_0 : i32, i32, i32
  }
  func.func @transform_12(%arg0: i32) -> (i32, i32, i32) {
    %c0_i32 = arith.constant 0 : i32
    %c0_i32_0 = arith.constant 0 : i32
    %c0_i32_1 = arith.constant 0 : i32
    return %arg0, %c0_i32, %c0_i32_0 : i32, i32, i32
  }
  func.func @transform_13(%arg0: i32) -> (i32, i32, i32) {
    %c0_i32 = arith.constant 0 : i32
    %c0_i32_0 = arith.constant 0 : i32
    %c0_i32_1 = arith.constant 0 : i32
    return %arg0, %c0_i32, %c0_i32_0 : i32, i32, i32
  }
  func.func @transform_14(%arg0: i32) -> (i32, i32, i32) {
    %c0_i32 = arith.constant 0 : i32
    %c0_i32_0 = arith.constant 0 : i32
    %c0_i32_1 = arith.constant 0 : i32
    return %arg0, %c0_i32, %c0_i32_0 : i32, i32, i32
  }
  func.func @transform_15(%arg0: i32) -> (i32, i32, i32) {
    %c0_i32 = arith.constant 0 : i32
    %c0_i32_0 = arith.constant 0 : i32
    %c0_i32_1 = arith.constant 0 : i32
    return %arg0, %c0_i32, %c0_i32_0 : i32, i32, i32
  }
  func.func @transform_16(%arg0: i32) -> (i32, i32) {
    %c0_i32 = arith.constant 0 : i32
    %c0_i32_0 = arith.constant 0 : i32
    %c0_i32_1 = arith.constant 0 : i32
    return %c0_i32, %c0_i32_0 : i32, i32
  }
  func.func @transform_17(%arg0: i32) -> (i32, i32) {
    %c0_i32 = arith.constant 0 : i32
    %c0_i32_0 = arith.constant 0 : i32
    %c0_i32_1 = arith.constant 0 : i32
    return %c0_i32, %c0_i32_0 : i32, i32
  }
  func.func @transform_18(%arg0: i32) -> (i32, i32) {
    %c0_i32 = arith.constant 0 : i32
    %c0_i32_0 = arith.constant 0 : i32
    %c0_i32_1 = arith.constant 0 : i32
    return %c0_i32, %c0_i32_0 : i32, i32
  }
  func.func @transform_19(%arg0: i32) -> (i32, i32) {
    %c0_i32 = arith.constant 0 : i32
    %c0_i32_0 = arith.constant 0 : i32
    %c0_i32_1 = arith.constant 0 : i32
    return %c0_i32, %c0_i32_0 : i32, i32
  }
  func.func @transform_20(%arg0: i32) -> (i32, i32, i32) {
    %c0_i32 = arith.constant 0 : i32
    %c0_i32_0 = arith.constant 0 : i32
    %c0_i32_1 = arith.constant 0 : i32
    %c0_i32_2 = arith.constant 0 : i32
    return %c0_i32, %c0_i32_0, %c0_i32_1 : i32, i32, i32
  }
  func.func @transform_21(%arg0: i32) -> (i32, i32) {
    %c0_i32 = arith.constant 0 : i32
    %c0_i32_0 = arith.constant 0 : i32
    %c0_i32_1 = arith.constant 0 : i32
    return %c0_i32, %c0_i32_0 : i32, i32
  }
  func.func @transform_22(%arg0: i32) -> (i32, i32, i32) {
    %c0_i32 = arith.constant 0 : i32
    %c0_i32_0 = arith.constant 0 : i32
    %c0_i32_1 = arith.constant 0 : i32
    %c0_i32_2 = arith.constant 0 : i32
    return %c0_i32, %c0_i32_0, %c0_i32_1 : i32, i32, i32
  }
  func.func @transform_23(%arg0: i32) -> (i32, i32) {
    %c0_i32 = arith.constant 0 : i32
    %c0_i32_0 = arith.constant 0 : i32
    %c0_i32_1 = arith.constant 0 : i32
    return %c0_i32, %c0_i32_0 : i32, i32
  }
  func.func @transform_24(%arg0: i32) -> (i32, i32) {
    %c0_i32 = arith.constant 0 : i32
    %c0_i32_0 = arith.constant 0 : i32
    %c0_i32_1 = arith.constant 0 : i32
    return %c0_i32, %c0_i32_0 : i32, i32
  }
}

</mosaic_0001>

<llo_original>
// kernel: tpu_custom_call.1
$region0: #{tpu_custom_call.1}
  #allocation0 [shape = 'u32[]', space=smem, size = 0x4, offset = 0x4, fixed_abs, tag = 'smem constant byte address 0x4 - core index']
  #allocation1 [shape = 'u32[72,128]{1,0:T(1,128)}', space=vmem, size = 0x9000, scoped, tag = 'internal scratch']
  #allocation2 [shape = 'f32[32,128]{1,0:T(8,128)}', space=vmem, size = 0x4000, scoped, tag = 'scratch operand']
  %s0 = inlined_call_operand.hbm [shape: f32[32,128], index: 0, kind: input, shape index: {}]
  %s1 = inlined_call_operand.hbm [shape: f32[32,32], index: 1, kind: input, shape index: {}]
  %s2 = inlined_call_operand.hbm [shape: f32[1,128], index: 2, kind: input, shape index: {}]
  %s3 = inlined_call_operand.hbm [shape: f32[1,128], index: 3, kind: input, shape index: {}]
  %s4 = inlined_call_operand.hbm [shape: f32[2,1,128], index: 4, kind: input, shape index: {}]
  %s5 = inlined_call_operand.hbm [shape: f32[2,1,128], index: 5, kind: input, shape index: {}]
  %s6 = inlined_call_operand.hbm [shape: bf16[2,128,384], index: 6, kind: input, shape index: {}]
  %s7 = inlined_call_operand.vmem [shape: f32[2,1,384], index: 7, kind: input, shape index: {}]
  %s8 = inlined_call_operand.hbm [shape: bf16[2,128,128], index: 8, kind: input, shape index: {}]
  %s9 = inlined_call_operand.hbm [shape: f32[2,1,128], index: 9, kind: input, shape index: {}]
  %s10 = inlined_call_operand.hbm [shape: f32[2,1,128], index: 10, kind: input, shape index: {}]
  %s11 = inlined_call_operand.hbm [shape: f32[2,1,128], index: 11, kind: input, shape index: {}]
  %s12 = inlined_call_operand.hbm [shape: bf16[2,128,256], index: 12, kind: input, shape index: {}]
  %s13 = inlined_call_operand.vmem [shape: f32[2,1,256], index: 13, kind: input, shape index: {}]
  %s14 = inlined_call_operand.hbm [shape: bf16[2,256,128], index: 14, kind: input, shape index: {}]
  %s15 = inlined_call_operand.vmem [shape: f32[2,1,128], index: 15, kind: input, shape index: {}]
  %s16 = inlined_call_operand.vmem [shape: f32[1,128], index: 16, kind: input, shape index: {}]
  %s17 = inlined_call_operand.vmem [shape: f32[1,128], index: 17, kind: input, shape index: {}]
  %s18 = inlined_call_operand.vmem [shape: f32[1,128], index: 18, kind: input, shape index: {}]
  %s19 = inlined_call_operand.vmem [shape: f32[1,128], index: 19, kind: input, shape index: {}]
  %s20 = inlined_call_operand.hbm [shape: bf16[5,128,128], index: 20, kind: input, shape index: {}]
  %s21 = inlined_call_operand.vmem [shape: f32[1,128], index: 21, kind: input, shape index: {}]
  %s22 = inlined_call_operand.hbm [shape: bf16[3,128,128], index: 22, kind: input, shape index: {}]
  %s23 = inlined_call_operand.vmem [shape: f32[1,128], index: 23, kind: input, shape index: {}]
  %s24 = inlined_call_operand.hbm [shape: f32[32,128], index: 24, kind: output, shape index: {}]
  %s25 = sld [smem:[#allocation0]]
  $region197: #{tpu_custom_call.1} parent=0
    _
  %s27 = ssub.s32 1, %s25
  %s28 = scalar_select 0, %s27, %s25
  $region1: #{tpu_custom_call.1} parent=0
    #allocation3 [shape = 'u8[16384]{0}', space=vmem, size = 0x4000, scoped, tag = 'input window, operand 0, single buffered']
    #allocation4 [shape = 's32[2]{0}', space=sflag, size = 0x8, scoped, tag = 'scoped memory for tpu_custom_call.1']
    #allocation5 [shape = 's32[2]{0}', space=sflag, size = 0x8, scoped, tag = 'scoped memory for tpu_custom_call.1']
    #allocation6 [shape = 'u8[16384]{0}', space=vmem, size = 0x4000, scoped, tag = 'input window, operand 1, single buffered']
    #allocation7 [shape = 's32[1]{0}', space=sflag, size = 0x4, scoped, tag = 'scoped memory for tpu_custom_call.1']
    #allocation8 [shape = 'u8[512]{0}', space=vmem, size = 0x400, scoped, tag = 'input window, operand 2, single buffered']
    #allocation9 [shape = 'u8[512]{0}', space=vmem, size = 0x400, scoped, tag = 'input window, operand 3, single buffered']
    #allocation10 [shape = 's32[1]{0}', space=sflag, size = 0x4, scoped, tag = 'scoped memory for tpu_custom_call.1']
    #allocation11 [shape = 'u8[1024]{0}', space=vmem, size = 0x400, scoped, tag = 'input window, operand 4']
    #allocation12 [shape = 'u8[1024]{0}', space=vmem, size = 0x400, scoped, tag = 'input window, operand 5']
    #allocation13 [shape = 'u8[196608]{0}', space=vmem, size = 0x30000, scoped, tag = 'input window, operand 6']
    #allocation14 [shape = 'u8[65536]{0}', space=vmem, size = 0x10000, scoped, tag = 'input window, operand 8']
    #allocation15 [shape = 'u8[1024]{0}', space=vmem, size = 0x400, scoped, tag = 'input window, operand 9']
    #allocation16 [shape = 'u8[1024]{0}', space=vmem, size = 0x400, scoped, tag = 'input window, operand 10']
    #allocation17 [shape = 'u8[1024]{0}', space=vmem, size = 0x400, scoped, tag = 'input window, operand 11']
    #allocation18 [shape = 'u8[131072]{0}', space=vmem, size = 0x20000, scoped, tag = 'input window, operand 12']
    #allocation19 [shape = 'u8[131072]{0}', space=vmem, size = 0x20000, scoped, tag = 'input window, operand 14']
    #allocation20 [shape = 'u8[163840]{0}', space=vmem, size = 0x28000, scoped, tag = 'input window, operand 20, single buffered']
    #allocation21 [shape = 'u8[98304]{0}', space=vmem, size = 0x18000, scoped, tag = 'input window, operand 22, single buffered']
    #allocation22 [shape = 'u8[16384]{0}', space=vmem, size = 0x4000, scoped, tag = 'output window, operand 0, single buffered']
    %29 = vsyncpa [#allocation4], 0
    %30 = vsyncpa [#allocation7], 0
    %31 = vsyncpa [#allocation10], 0
    %32 = vsyncpa [#allocation5], 0
    loop: start=0, step=1, limit=4
    $region2: #{tpu_custom_call.1} parent=1 // loop_pre_header
      _
    $region3: #{tpu_custom_call.1} parent=1 // loop_header
      %s34 = sphi 0, %s38
      %p35 = scmp.ge.s32.totalorder %s34, 4
      %s42 = sphi 0, %s42
      %s44 = sphi 0, %s42
      %s45 = sphi 0, %s44
      %s59 = sphi 0, %s45
      %s63 = sphi 0, %s63
      %s65 = sphi 0, %s63
      %s66 = sphi 0, %s65
      %s80 = sphi 0, %s66
      %s84 = sphi 0, %s84
      %s86 = sphi 0, %s84
      %s87 = sphi 0, %s86
      %s101 = sphi 0, %s87
      %s105 = sphi 0, %s105
      %s107 = sphi 0, %s105
      %s108 = sphi 0, %s107
      %s122 = sphi 0, %s108
      %s128 = sphi 0, %s130
      %s131 = sphi 0, %s128
      %s132 = sphi 0, %s131
      %s148 = sphi 0, %s132
      %s154 = sphi 0, %s156
      %s157 = sphi 0, %s154
      %s158 = sphi 0, %s157
      %s174 = sphi 0, %s158
      %s180 = sphi 0, %s182
      %s183 = sphi 0, %s180
      %s184 = sphi 0, %s183
      %s200 = sphi 0, %s184
      %s206 = sphi 0, %s208
      %s209 = sphi 0, %s206
      %s210 = sphi 0, %s209
      %s226 = sphi 0, %s210
      %s232 = sphi 0, %s234
      %s235 = sphi 0, %s232
      %s236 = sphi 0, %s235
      %s252 = sphi 0, %s236
      %s258 = sphi 0, %s260
      %s261 = sphi 0, %s258
      %s262 = sphi 0, %s261
      %s278 = sphi 0, %s262
      %s284 = sphi 0, %s286
      %s287 = sphi 0, %s284
      %s288 = sphi 0, %s287
      %s304 = sphi 0, %s288
      %s310 = sphi 0, %s312
      %s313 = sphi 0, %s310
      %s314 = sphi 0, %s313
      %s330 = sphi 0, %s314
      %s336 = sphi 0, %s338
      %s339 = sphi 0, %s336
      %s340 = sphi 0, %s339
      %s356 = sphi 0, %s340
      %s362 = sphi 0, %s364
      %s365 = sphi 0, %s362
      %s366 = sphi 0, %s365
      %s382 = sphi 0, %s366
      %s388 = sphi 0, %s390
      %s391 = sphi 0, %s388
      %s392 = sphi 0, %s391
      %s408 = sphi 0, %s392
      %s414 = sphi 0, %s416
      %s417 = sphi 0, %s414
      %s418 = sphi 0, %s417
      %s434 = sphi 0, %s418
      %s438 = sphi 0, %s438
      %s440 = sphi 0, %s438
      %s441 = sphi 0, %s440
      %s455 = sphi 0, %s441
      %s459 = sphi 0, %s459
      %s461 = sphi 0, %s459
      %s462 = sphi 0, %s461
      %s476 = sphi 0, %s462
      %s480 = sphi 0, %s480
      %s482 = sphi 0, %s480
      %s483 = sphi 0, %s482
      %s497 = sphi 0, %s483
      %s501 = sphi 0, %s501
      %s503 = sphi 0, %s501
      %s504 = sphi 0, %s503
      %s518 = sphi 0, %s504
      %s522 = sphi 0, %s522
      %s524 = sphi 0, %s522
      %s525 = sphi 0, %s524
      %s539 = sphi 0, %s525
      %s543 = sphi 0, %s543
      %s545 = sphi 0, %s543
      %s546 = sphi 0, %s545
      %s560 = sphi 0, %s546
      %s564 = sphi 0, %s564
      %s566 = sphi 0, %s564
      %s567 = sphi 0, %s566
      %s581 = sphi 0, %s567
      %s585 = sphi 0, %s585
      %s587 = sphi 0, %s585
      %s588 = sphi 0, %s587
      %s602 = sphi 0, %s588
      %s606 = sphi 0, %s606
      %s608 = sphi 0, %s606
      %s609 = sphi 0, %s608
      %s623 = sphi 0, %s609
    $region4: #{tpu_custom_call.1} parent=1 // loop_header_branch
      %37 = sbr.rel (%p35) target = $region8
    $region5: #{tpu_custom_call.1} parent=1 // loop_body
      %s39 = ssub.s32 %s34, 1
      %s40 = ssub.s32 %s34, 2
      %s41 = sadd.s32 %s34, 1
      %s43 = sadd.s32 %s42, 1
      %p46 = scmp.eq.s32.totalorder %s34, 1
      %p47 = scmp.ne.s32.totalorder %s42, %s44
      %p48 = scmp.eq.s32.totalorder %s34, 0
      %p49 = por %p47, %p48
      %p50 = scmp.ne.s32.totalorder %s42, %s44
      %p51 = scmp.eq.s32.totalorder %s39, 1
      %p52 = por %p50, %p51
      %p53 = scmp.ne.s32.totalorder %s44, %s45
      %p54 = scmp.eq.s32.totalorder %s39, 0
      %p55 = por %p53, %p54
      %p56 = scmp.ne.s32.totalorder %s44, %s45
      %p57 = scmp.eq.s32.totalorder %s40, 1
      %p58 = por %p56, %p57
      %p60 = scmp.ne.s32.totalorder %s45, %s59
      %p61 = scmp.eq.s32.totalorder %s40, 0
      %p62 = por %p60, %p61
      %s64 = sadd.s32 %s63, 1
      %p67 = scmp.eq.s32.totalorder %s34, 1
      %p68 = scmp.ne.s32.totalorder %s63, %s65
      %p69 = scmp.eq.s32.totalorder %s34, 0
      %p70 = por %p68, %p69
      %p71 = scmp.ne.s32.totalorder %s63, %s65
      %p72 = scmp.eq.s32.totalorder %s39, 1
      %p73 = por %p71, %p72
      %p74 = scmp.ne.s32.totalorder %s65, %s66
      %p75 = scmp.eq.s32.totalorder %s39, 0
      %p76 = por %p74, %p75
      %p77 = scmp.ne.s32.totalorder %s65, %s66
      %p78 = scmp.eq.s32.totalorder %s40, 1
      %p79 = por %p77, %p78
      %p81 = scmp.ne.s32.totalorder %s66, %s80
      %p82 = scmp.eq.s32.totalorder %s40, 0
      %p83 = por %p81, %p82
      %s85 = sadd.s32 %s84, 1
      %p88 = scmp.eq.s32.totalorder %s34, 1
      %p89 = scmp.ne.s32.totalorder %s84, %s86
      %p90 = scmp.eq.s32.totalorder %s34, 0
      %p91 = por %p89, %p90
      %p92 = scmp.ne.s32.totalorder %s84, %s86
      %p93 = scmp.eq.s32.totalorder %s39, 1
      %p94 = por %p92, %p93
      %p95 = scmp.ne.s32.totalorder %s86, %s87
      %p96 = scmp.eq.s32.totalorder %s39, 0
      %p97 = por %p95, %p96
      %p98 = scmp.ne.s32.totalorder %s86, %s87
      %p99 = scmp.eq.s32.totalorder %s40, 1
      %p100 = por %p98, %p99
      %p102 = scmp.ne.s32.totalorder %s87, %s101
      %p103 = scmp.eq.s32.totalorder %s40, 0
      %p104 = por %p102, %p103
      %s106 = sadd.s32 %s105, 1
      %p109 = scmp.eq.s32.totalorder %s34, 1
      %p110 = scmp.ne.s32.totalorder %s105, %s107
      %p111 = scmp.eq.s32.totalorder %s34, 0
      %p112 = por %p110, %p111
      %p113 = scmp.ne.s32.totalorder %s105, %s107
      %p114 = scmp.eq.s32.totalorder %s39, 1
      %p115 = por %p113, %p114
      %p116 = scmp.ne.s32.totalorder %s107, %s108
      %p117 = scmp.eq.s32.totalorder %s39, 0
      %p118 = por %p116, %p117
      %p119 = scmp.ne.s32.totalorder %s107, %s108
      %p120 = scmp.eq.s32.totalorder %s40, 1
      %p121 = por %p119, %p120
      %p123 = scmp.ne.s32.totalorder %s108, %s122
      %p124 = scmp.eq.s32.totalorder %s40, 0
      %p125 = por %p123, %p124
      %s126 = ssub.s32 %s34, %s41
      %p127 = scmp.eq.s32.totalorder %s126, 0
      %s129 = sadd.s32 %s128, 1
      %s130 = scalar_select %p127, %s128, %s129
      %p133 = pneg %p127
      %p134 = scmp.eq.s32.totalorder %s34, 1
      %p135 = por %p133, %p134
      %p136 = scmp.ne.s32.totalorder %s128, %s131
      %p137 = scmp.eq.s32.totalorder %s34, 0
      %p138 = por %p136, %p137
      %p139 = scmp.ne.s32.totalorder %s128, %s131
      %p140 = scmp.eq.s32.totalorder %s39, 1
      %p141 = por %p139, %p140
      %p142 = scmp.ne.s32.totalorder %s131, %s132
      %p143 = scmp.eq.s32.totalorder %s39, 0
      %p144 = por %p142, %p143
      %p145 = scmp.ne.s32.totalorder %s131, %s132
      %p146 = scmp.eq.s32.totalorder %s40, 1
      %p147 = por %p145, %p146
      %p149 = scmp.ne.s32.totalorder %s132, %s148
      %p150 = scmp.eq.s32.totalorder %s40, 0
      %p151 = por %p149, %p150
      %s152 = ssub.s32 %s34, %s41
      %p153 = scmp.eq.s32.totalorder %s152, 0
      %s155 = sadd.s32 %s154, 1
      %s156 = scalar_select %p153, %s154, %s155
      %p159 = pneg %p153
      %p160 = scmp.eq.s32.totalorder %s34, 1
      %p161 = por %p159, %p160
      %p162 = scmp.ne.s32.totalorder %s154, %s157
      %p163 = scmp.eq.s32.totalorder %s34, 0
      %p164 = por %p162, %p163
      %p165 = scmp.ne.s32.totalorder %s154, %s157
      %p166 = scmp.eq.s32.totalorder %s39, 1
      %p167 = por %p165, %p166
      %p168 = scmp.ne.s32.totalorder %s157, %s158
      %p169 = scmp.eq.s32.totalorder %s39, 0
      %p170 = por %p168, %p169
      %p171 = scmp.ne.s32.totalorder %s157, %s158
      %p172 = scmp.eq.s32.totalorder %s40, 1
      %p173 = por %p171, %p172
      %p175 = scmp.ne.s32.totalorder %s158, %s174
      %p176 = scmp.eq.s32.totalorder %s40, 0
      %p177 = por %p175, %p176
      %s178 = ssub.s32 %s34, %s41
      %p179 = scmp.eq.s32.totalorder %s178, 0
      %s181 = sadd.s32 %s180, 1
      %s182 = scalar_select %p179, %s180, %s181
      %p185 = pneg %p179
      %p186 = scmp.eq.s32.totalorder %s34, 1
      %p187 = por %p185, %p186
      %p188 = scmp.ne.s32.totalorder %s180, %s183
      %p189 = scmp.eq.s32.totalorder %s34, 0
      %p190 = por %p188, %p189
      %p191 = scmp.ne.s32.totalorder %s180, %s183
      %p192 = scmp.eq.s32.totalorder %s39, 1
      %p193 = por %p191, %p192
      %p194 = scmp.ne.s32.totalorder %s183, %s184
      %p195 = scmp.eq.s32.totalorder %s39, 0
      %p196 = por %p194, %p195
      %p197 = scmp.ne.s32.totalorder %s183, %s184
      %p198 = scmp.eq.s32.totalorder %s40, 1
      %p199 = por %p197, %p198
      %p201 = scmp.ne.s32.totalorder %s184, %s200
      %p202 = scmp.eq.s32.totalorder %s40, 0
      %p203 = por %p201, %p202
      %s204 = ssub.s32 %s34, %s41
      %p205 = scmp.eq.s32.totalorder %s204, 0
      %s207 = sadd.s32 %s206, 1
      %s208 = scalar_select %p205, %s206, %s207
      %p211 = pneg %p205
      %p212 = scmp.eq.s32.totalorder %s34, 1
      %p213 = por %p211, %p212
      %p214 = scmp.ne.s32.totalorder %s206, %s209
      %p215 = scmp.eq.s32.totalorder %s34, 0
      %p216 = por %p214, %p215
      %p217 = scmp.ne.s32.totalorder %s206, %s209
      %p218 = scmp.eq.s32.totalorder %s39, 1
      %p219 = por %p217, %p218
      %p220 = scmp.ne.s32.totalorder %s209, %s210
      %p221 = scmp.eq.s32.totalorder %s39, 0
      %p222 = por %p220, %p221
      %p223 = scmp.ne.s32.totalorder %s209, %s210
      %p224 = scmp.eq.s32.totalorder %s40, 1
      %p225 = por %p223, %p224
      %p227 = scmp.ne.s32.totalorder %s210, %s226
      %p228 = scmp.eq.s32.totalorder %s40, 0
      %p229 = por %p227, %p228
      %s230 = ssub.s32 %s34, %s41
      %p231 = scmp.eq.s32.totalorder %s230, 0
      %s233 = sadd.s32 %s232, 1
      %s234 = scalar_select %p231, %s232, %s233
      %p237 = pneg %p231
      %p238 = scmp.eq.s32.totalorder %s34, 1
      %p239 = por %p237, %p238
      %p240 = scmp.ne.s32.totalorder %s232, %s235
      %p241 = scmp.eq.s32.totalorder %s34, 0
      %p242 = por %p240, %p241
      %p243 = scmp.ne.s32.totalorder %s232, %s235
      %p244 = scmp.eq.s32.totalorder %s39, 1
      %p245 = por %p243, %p244
      %p246 = scmp.ne.s32.totalorder %s235, %s236
      %p247 = scmp.eq.s32.totalorder %s39, 0
      %p248 = por %p246, %p247
      %p249 = scmp.ne.s32.totalorder %s235, %s236
      %p250 = scmp.eq.s32.totalorder %s40, 1
      %p251 = por %p249, %p250
      %p253 = scmp.ne.s32.totalorder %s236, %s252
      %p254 = scmp.eq.s32.totalorder %s40, 0
      %p255 = por %p253, %p254
      %s256 = ssub.s32 %s34, %s41
      %p257 = scmp.eq.s32.totalorder %s256, 0
      %s259 = sadd.s32 %s258, 1
      %s260 = scalar_select %p257, %s258, %s259
      %p263 = pneg %p257
      %p264 = scmp.eq.s32.totalorder %s34, 1
      %p265 = por %p263, %p264
      %p266 = scmp.ne.s32.totalorder %s258, %s261
      %p267 = scmp.eq.s32.totalorder %s34, 0
      %p268 = por %p266, %p267
      %p269 = scmp.ne.s32.totalorder %s258, %s261
      %p270 = scmp.eq.s32.totalorder %s39, 1
      %p271 = por %p269, %p270
      %p272 = scmp.ne.s32.totalorder %s261, %s262
      %p273 = scmp.eq.s32.totalorder %s39, 0
      %p274 = por %p272, %p273
      %p275 = scmp.ne.s32.totalorder %s261, %s262
      %p276 = scmp.eq.s32.totalorder %s40, 1
      %p277 = por %p275, %p276
      %p279 = scmp.ne.s32.totalorder %s262, %s278
      %p280 = scmp.eq.s32.totalorder %s40, 0
      %p281 = por %p279, %p280
      %s282 = ssub.s32 %s34, %s41
      %p283 = scmp.eq.s32.totalorder %s282, 0
      %s285 = sadd.s32 %s284, 1
      %s286 = scalar_select %p283, %s284, %s285
      %p289 = pneg %p283
      %p290 = scmp.eq.s32.totalorder %s34, 1
      %p291 = por %p289, %p290
      %p292 = scmp.ne.s32.totalorder %s284, %s287
      %p293 = scmp.eq.s32.totalorder %s34, 0
      %p294 = por %p292, %p293
      %p295 = scmp.ne.s32.totalorder %s284, %s287
      %p296 = scmp.eq.s32.totalorder %s39, 1
      %p297 = por %p295, %p296
      %p298 = scmp.ne.s32.totalorder %s287, %s288
      %p299 = scmp.eq.s32.totalorder %s39, 0
      %p300 = por %p298, %p299
      %p301 = scmp.ne.s32.totalorder %s287, %s288
      %p302 = scmp.eq.s32.totalorder %s40, 1
      %p303 = por %p301, %p302
      %p305 = scmp.ne.s32.totalorder %s288, %s304
      %p306 = scmp.eq.s32.totalorder %s40, 0
      %p307 = por %p305, %p306
      %s308 = ssub.s32 %s34, %s41
      %p309 = scmp.eq.s32.totalorder %s308, 0
      %s311 = sadd.s32 %s310, 1
      %s312 = scalar_select %p309, %s310, %s311
      %p315 = pneg %p309
      %p316 = scmp.eq.s32.totalorder %s34, 1
      %p317 = por %p315, %p316
      %p318 = scmp.ne.s32.totalorder %s310, %s313
      %p319 = scmp.eq.s32.totalorder %s34, 0
      %p320 = por %p318, %p319
      %p321 = scmp.ne.s32.totalorder %s310, %s313
      %p322 = scmp.eq.s32.totalorder %s39, 1
      %p323 = por %p321, %p322
      %p324 = scmp.ne.s32.totalorder %s313, %s314
      %p325 = scmp.eq.s32.totalorder %s39, 0
      %p326 = por %p324, %p325
      %p327 = scmp.ne.s32.totalorder %s313, %s314
      %p328 = scmp.eq.s32.totalorder %s40, 1
      %p329 = por %p327, %p328
      %p331 = scmp.ne.s32.totalorder %s314, %s330
      %p332 = scmp.eq.s32.totalorder %s40, 0
      %p333 = por %p331, %p332
      %s334 = ssub.s32 %s34, %s41
      %p335 = scmp.eq.s32.totalorder %s334, 0
      %s337 = sadd.s32 %s336, 1
      %s338 = scalar_select %p335, %s336, %s337
      %p341 = pneg %p335
      %p342 = scmp.eq.s32.totalorder %s34, 1
      %p343 = por %p341, %p342
      %p344 = scmp.ne.s32.totalorder %s336, %s339
      %p345 = scmp.eq.s32.totalorder %s34, 0
      %p346 = por %p344, %p345
      %p347 = scmp.ne.s32.totalorder %s336, %s339
      %p348 = scmp.eq.s32.totalorder %s39, 1
      %p349 = por %p347, %p348
      %p350 = scmp.ne.s32.totalorder %s339, %s340
      %p351 = scmp.eq.s32.totalorder %s39, 0
      %p352 = por %p350, %p351
      %p353 = scmp.ne.s32.totalorder %s339, %s340
      %p354 = scmp.eq.s32.totalorder %s40, 1
      %p355 = por %p353, %p354
      %p357 = scmp.ne.s32.totalorder %s340, %s356
      %p358 = scmp.eq.s32.totalorder %s40, 0
      %p359 = por %p357, %p358
      %s360 = ssub.s32 %s34, %s41
      %p361 = scmp.eq.s32.totalorder %s360, 0
      %s363 = sadd.s32 %s362, 1
      %s364 = scalar_select %p361, %s362, %s363
      %p367 = pneg %p361
      %p368 = scmp.eq.s32.totalorder %s34, 1
      %p369 = por %p367, %p368
      %p370 = scmp.ne.s32.totalorder %s362, %s365
      %p371 = scmp.eq.s32.totalorder %s34, 0
      %p372 = por %p370, %p371
      %p373 = scmp.ne.s32.totalorder %s362, %s365
      %p374 = scmp.eq.s32.totalorder %s39, 1
      %p375 = por %p373, %p374
      %p376 = scmp.ne.s32.totalorder %s365, %s366
      %p377 = scmp.eq.s32.totalorder %s39, 0
      %p378 = por %p376, %p377
      %p379 = scmp.ne.s32.totalorder %s365, %s366
      %p380 = scmp.eq.s32.totalorder %s40, 1
      %p381 = por %p379, %p380
      %p383 = scmp.ne.s32.totalorder %s366, %s382
      %p384 = scmp.eq.s32.totalorder %s40, 0
      %p385 = por %p383, %p384
      %s386 = ssub.s32 %s34, %s41
      %p387 = scmp.eq.s32.totalorder %s386, 0
      %s389 = sadd.s32 %s388, 1
      %s390 = scalar_select %p387, %s388, %s389
      %p393 = pneg %p387
      %p394 = scmp.eq.s32.totalorder %s34, 1
      %p395 = por %p393, %p394
      %p396 = scmp.ne.s32.totalorder %s388, %s391
      %p397 = scmp.eq.s32.totalorder %s34, 0
      %p398 = por %p396, %p397
      %p399 = scmp.ne.s32.totalorder %s388, %s391
      %p400 = scmp.eq.s32.totalorder %s39, 1
      %p401 = por %p399, %p400
      %p402 = scmp.ne.s32.totalorder %s391, %s392
      %p403 = scmp.eq.s32.totalorder %s39, 0
      %p404 = por %p402, %p403
      %p405 = scmp.ne.s32.totalorder %s391, %s392
      %p406 = scmp.eq.s32.totalorder %s40, 1
      %p407 = por %p405, %p406
      %p409 = scmp.ne.s32.totalorder %s392, %s408
      %p410 = scmp.eq.s32.totalorder %s40, 0
      %p411 = por %p409, %p410
      %s412 = ssub.s32 %s34, %s41
      %p413 = scmp.eq.s32.totalorder %s412, 0
      %s415 = sadd.s32 %s414, 1
      %s416 = scalar_select %p413, %s414, %s415
      %p419 = pneg %p413
      %p420 = scmp.eq.s32.totalorder %s34, 1
      %p421 = por %p419, %p420
      %p422 = scmp.ne.s32.totalorder %s414, %s417
      %p423 = scmp.eq.s32.totalorder %s34, 0
      %p424 = por %p422, %p423
      %p425 = scmp.ne.s32.totalorder %s414, %s417
      %p426 = scmp.eq.s32.totalorder %s39, 1
      %p427 = por %p425, %p426
      %p428 = scmp.ne.s32.totalorder %s417, %s418
      %p429 = scmp.eq.s32.totalorder %s39, 0
      %p430 = por %p428, %p429
      %p431 = scmp.ne.s32.totalorder %s417, %s418
      %p432 = scmp.eq.s32.totalorder %s40, 1
      %p433 = por %p431, %p432
      %p435 = scmp.ne.s32.totalorder %s418, %s434
      %p436 = scmp.eq.s32.totalorder %s40, 0
      %p437 = por %p435, %p436
      %s439 = sadd.s32 %s438, 1
      %p442 = scmp.eq.s32.totalorder %s34, 1
      %p443 = scmp.ne.s32.totalorder %s438, %s440
      %p444 = scmp.eq.s32.totalorder %s34, 0
      %p445 = por %p443, %p444
      %p446 = scmp.ne.s32.totalorder %s438, %s440
      %p447 = scmp.eq.s32.totalorder %s39, 1
      %p448 = por %p446, %p447
      %p449 = scmp.ne.s32.totalorder %s440, %s441
      %p450 = scmp.eq.s32.totalorder %s39, 0
      %p451 = por %p449, %p450
      %p452 = scmp.ne.s32.totalorder %s440, %s441
      %p453 = scmp.eq.s32.totalorder %s40, 1
      %p454 = por %p452, %p453
      %p456 = scmp.ne.s32.totalorder %s441, %s455
      %p457 = scmp.eq.s32.totalorder %s40, 0
      %p458 = por %p456, %p457
      %s460 = sadd.s32 %s459, 1
      %p463 = scmp.eq.s32.totalorder %s34, 1
      %p464 = scmp.ne.s32.totalorder %s459, %s461
      %p465 = scmp.eq.s32.totalorder %s34, 0
      %p466 = por %p464, %p465
      %p467 = scmp.ne.s32.totalorder %s459, %s461
      %p468 = scmp.eq.s32.totalorder %s39, 1
      %p469 = por %p467, %p468
      %p470 = scmp.ne.s32.totalorder %s461, %s462
      %p471 = scmp.eq.s32.totalorder %s39, 0
      %p472 = por %p470, %p471
      %p473 = scmp.ne.s32.totalorder %s461, %s462
      %p474 = scmp.eq.s32.totalorder %s40, 1
      %p475 = por %p473, %p474
      %p477 = scmp.ne.s32.totalorder %s462, %s476
      %p478 = scmp.eq.s32.totalorder %s40, 0
      %p479 = por %p477, %p478
      %s481 = sadd.s32 %s480, 1
      %p484 = scmp.eq.s32.totalorder %s34, 1
      %p485 = scmp.ne.s32.totalorder %s480, %s482
      %p486 = scmp.eq.s32.totalorder %s34, 0
      %p487 = por %p485, %p486
      %p488 = scmp.ne.s32.totalorder %s480, %s482
      %p489 = scmp.eq.s32.totalorder %s39, 1
      %p490 = por %p488, %p489
      %p491 = scmp.ne.s32.totalorder %s482, %s483
      %p492 = scmp.eq.s32.totalorder %s39, 0
      %p493 = por %p491, %p492
      %p494 = scmp.ne.s32.totalorder %s482, %s483
      %p495 = scmp.eq.s32.totalorder %s40, 1
      %p496 = por %p494, %p495
      %p498 = scmp.ne.s32.totalorder %s483, %s497
      %p499 = scmp.eq.s32.totalorder %s40, 0
      %p500 = por %p498, %p499
      %s502 = sadd.s32 %s501, 1
      %p505 = scmp.eq.s32.totalorder %s34, 1
      %p506 = scmp.ne.s32.totalorder %s501, %s503
      %p507 = scmp.eq.s32.totalorder %s34, 0
      %p508 = por %p506, %p507
      %p509 = scmp.ne.s32.totalorder %s501, %s503
      %p510 = scmp.eq.s32.totalorder %s39, 1
      %p511 = por %p509, %p510
      %p512 = scmp.ne.s32.totalorder %s503, %s504
      %p513 = scmp.eq.s32.totalorder %s39, 0
      %p514 = por %p512, %p513
      %p515 = scmp.ne.s32.totalorder %s503, %s504
      %p516 = scmp.eq.s32.totalorder %s40, 1
      %p517 = por %p515, %p516
      %p519 = scmp.ne.s32.totalorder %s504, %s518
      %p520 = scmp.eq.s32.totalorder %s40, 0
      %p521 = por %p519, %p520
      %s523 = sadd.s32 %s522, 1
      %p526 = scmp.eq.s32.totalorder %s34, 1
      %p527 = scmp.ne.s32.totalorder %s522, %s524
      %p528 = scmp.eq.s32.totalorder %s34, 0
      %p529 = por %p527, %p528
      %p530 = scmp.ne.s32.totalorder %s522, %s524
      %p531 = scmp.eq.s32.totalorder %s39, 1
      %p532 = por %p530, %p531
      %p533 = scmp.ne.s32.totalorder %s524, %s525
      %p534 = scmp.eq.s32.totalorder %s39, 0
      %p535 = por %p533, %p534
      %p536 = scmp.ne.s32.totalorder %s524, %s525
      %p537 = scmp.eq.s32.totalorder %s40, 1
      %p538 = por %p536, %p537
      %p540 = scmp.ne.s32.totalorder %s525, %s539
      %p541 = scmp.eq.s32.totalorder %s40, 0
      %p542 = por %p540, %p541
      %s544 = sadd.s32 %s543, 1
      %p547 = scmp.eq.s32.totalorder %s34, 1
      %p548 = scmp.ne.s32.totalorder %s543, %s545
      %p549 = scmp.eq.s32.totalorder %s34, 0
      %p550 = por %p548, %p549
      %p551 = scmp.ne.s32.totalorder %s543, %s545
      %p552 = scmp.eq.s32.totalorder %s39, 1
      %p553 = por %p551, %p552
      %p554 = scmp.ne.s32.totalorder %s545, %s546
      %p555 = scmp.eq.s32.totalorder %s39, 0
      %p556 = por %p554, %p555
      %p557 = scmp.ne.s32.totalorder %s545, %s546
      %p558 = scmp.eq.s32.totalorder %s40, 1
      %p559 = por %p557, %p558
      %p561 = scmp.ne.s32.totalorder %s546, %s560
      %p562 = scmp.eq.s32.totalorder %s40, 0
      %p563 = por %p561, %p562
      %s565 = sadd.s32 %s564, 1
      %p568 = scmp.eq.s32.totalorder %s34, 1
      %p569 = scmp.ne.s32.totalorder %s564, %s566
      %p570 = scmp.eq.s32.totalorder %s34, 0
      %p571 = por %p569, %p570
      %p572 = scmp.ne.s32.totalorder %s564, %s566
      %p573 = scmp.eq.s32.totalorder %s39, 1
      %p574 = por %p572, %p573
      %p575 = scmp.ne.s32.totalorder %s566, %s567
      %p576 = scmp.eq.s32.totalorder %s39, 0
      %p577 = por %p575, %p576
      %p578 = scmp.ne.s32.totalorder %s566, %s567
      %p579 = scmp.eq.s32.totalorder %s40, 1
      %p580 = por %p578, %p579
      %p582 = scmp.ne.s32.totalorder %s567, %s581
      %p583 = scmp.eq.s32.totalorder %s40, 0
      %p584 = por %p582, %p583
      %s586 = sadd.s32 %s585, 1
      %p589 = scmp.eq.s32.totalorder %s34, 1
      %p590 = scmp.ne.s32.totalorder %s585, %s587
      %p591 = scmp.eq.s32.totalorder %s34, 0
      %p592 = por %p590, %p591
      %p593 = scmp.ne.s32.totalorder %s585, %s587
      %p594 = scmp.eq.s32.totalorder %s39, 1
      %p595 = por %p593, %p594
      %p596 = scmp.ne.s32.totalorder %s587, %s588
      %p597 = scmp.eq.s32.totalorder %s39, 0
      %p598 = por %p596, %p597
      %p599 = scmp.ne.s32.totalorder %s587, %s588
      %p600 = scmp.eq.s32.totalorder %s40, 1
      %p601 = por %p599, %p600
      %p603 = scmp.ne.s32.totalorder %s588, %s602
      %p604 = scmp.eq.s32.totalorder %s40, 0
      %p605 = por %p603, %p604
      %s607 = sadd.s32 %s606, 1
      %p610 = scmp.eq.s32.totalorder %s34, 1
      %p611 = scmp.ne.s32.totalorder %s606, %s608
      %p612 = scmp.eq.s32.totalorder %s34, 0
      %p613 = por %p611, %p612
      %p614 = scmp.ne.s32.totalorder %s606, %s608
      %p615 = scmp.eq.s32.totalorder %s39, 1
      %p616 = por %p614, %p615
      %p617 = scmp.ne.s32.totalorder %s608, %s609
      %p618 = scmp.eq.s32.totalorder %s39, 0
      %p619 = por %p617, %p618
      %p620 = scmp.ne.s32.totalorder %s608, %s609
      %p621 = scmp.eq.s32.totalorder %s40, 1
      %p622 = por %p620, %p621
      %p624 = scmp.ne.s32.totalorder %s609, %s623
      %p625 = scmp.eq.s32.totalorder %s40, 0
      %p626 = por %p624, %p625
      %p627 = scmp.le.s32.totalorder 1, %s34
      %p628 = scmp.lt.s32.totalorder %s34, 3
      %p629 = pnand %p627, %p628
      %p630 = pneg %p629
      // Predicated region
      $region9: #{tpu_custom_call.1} parent=5 // pred_check
        _
      $region10: #{tpu_custom_call.1} parent=5 // pred_check_branch
        %632 = sbr.rel (%p629) target = $region12
      $region11: #{tpu_custom_call.1} parent=5 // pred_region
        %s633 = ssub.s32 %s34, 1
        // Predicated region
        $region13: #{tpu_custom_call.1} parent=11 // pred_check
          %p634 = pneg %p55
        $region14: #{tpu_custom_call.1} parent=11 // pred_check_branch
          %636 = sbr.rel (%p634) target = $region16
        $region15: #{tpu_custom_call.1} parent=11 // pred_region
          %638 = vsyncadd [#allocation4], 0
          %s639 = sshll.u32 %s0, 4
          %s640 = int_to_ptr.hbm [resolvable:$true] %s639
          %s641 = sshll.u32 [#allocation3], 4
          %s642 = int_to_ptr.vmem [resolvable:$true] %s641
          %647 = dma.hbm_to_vmem [thread:$0]  %s640, 512, %s642, [#allocation4], 128, 128, 8
        $region16: #{tpu_custom_call.1} parent=11 // pred_fallthru
          _
        // Predicated region
        $region17: #{tpu_custom_call.1} parent=11 // pred_check
          %p648 = pneg %p76
        $region18: #{tpu_custom_call.1} parent=11 // pred_check_branch
          %650 = sbr.rel (%p648) target = $region20
        $region19: #{tpu_custom_call.1} parent=11 // pred_region
          %652 = vsyncadd [#allocation7], 0
          %s653 = sshll.u32 %s1, 4
          %s654 = int_to_ptr.hbm [resolvable:$true] %s653
          %s655 = sshll.u32 [#allocation6], 4
          %s656 = int_to_ptr.vmem [resolvable:$true] %s655
          %661 = dma.hbm_to_vmem [thread:$0]  %s654, 512, %s656, [#allocation7], 128, 128, 8
        $region20: #{tpu_custom_call.1} parent=11 // pred_fallthru
          _
        // Predicated region
        $region21: #{tpu_custom_call.1} parent=11 // pred_check
          %p662 = pneg %p97
        $region22: #{tpu_custom_call.1} parent=11 // pred_check_branch
          %664 = sbr.rel (%p662) target = $region24
        $region23: #{tpu_custom_call.1} parent=11 // pred_region
          %666 = vsyncadd [#allocation7], 0
          %s668 = sshll.u32 %s2, 4
          %s669 = int_to_ptr.hbm [resolvable:$true] %s668
          %s670 = sshll.u32 [#allocation8], 4
          %s671 = int_to_ptr.vmem [resolvable:$true] %s670
          %673 = dma.hbm_to_vmem [thread:$0]  %s669, 16, %s671, [#allocation7]
        $region24: #{tpu_custom_call.1} parent=11 // pred_fallthru
          _
        // Predicated region
        $region25: #{tpu_custom_call.1} parent=11 // pred_check
          %p674 = pneg %p118
        $region26: #{tpu_custom_call.1} parent=11 // pred_check_branch
          %676 = sbr.rel (%p674) target = $region28
        $region27: #{tpu_custom_call.1} parent=11 // pred_region
          %678 = vsyncadd [#allocation10], 0
          %s680 = sshll.u32 %s3, 4
          %s681 = int_to_ptr.hbm [resolvable:$true] %s680
          %s682 = sshll.u32 [#allocation9], 4
          %s683 = int_to_ptr.vmem [resolvable:$true] %s682
          %685 = dma.hbm_to_vmem [thread:$0]  %s681, 16, %s683, [#allocation10]
        $region28: #{tpu_custom_call.1} parent=11 // pred_fallthru
          _
        // Predicated region
        $region29: #{tpu_custom_call.1} parent=11 // pred_check
          %p686 = pneg %p451
        $region30: #{tpu_custom_call.1} parent=11 // pred_check_branch
          %688 = sbr.rel (%p686) target = $region32
        $region31: #{tpu_custom_call.1} parent=11 // pred_region
          _
        $region32: #{tpu_custom_call.1} parent=11 // pred_fallthru
          _
        // Predicated region
        $region33: #{tpu_custom_call.1} parent=11 // pred_check
          %p689 = pneg %p472
        $region34: #{tpu_custom_call.1} parent=11 // pred_check_branch
          %691 = sbr.rel (%p689) target = $region36
        $region35: #{tpu_custom_call.1} parent=11 // pred_region
          _
        $region36: #{tpu_custom_call.1} parent=11 // pred_fallthru
          _
        // Predicated region
        $region37: #{tpu_custom_call.1} parent=11 // pred_check
          %p692 = pneg %p493
        $region38: #{tpu_custom_call.1} parent=11 // pred_check_branch
          %694 = sbr.rel (%p692) target = $region40
        $region39: #{tpu_custom_call.1} parent=11 // pred_region
          _
        $region40: #{tpu_custom_call.1} parent=11 // pred_fallthru
          _
        // Predicated region
        $region41: #{tpu_custom_call.1} parent=11 // pred_check
          %p695 = pneg %p514
        $region42: #{tpu_custom_call.1} parent=11 // pred_check_branch
          %697 = sbr.rel (%p695) target = $region44
        $region43: #{tpu_custom_call.1} parent=11 // pred_region
          _
        $region44: #{tpu_custom_call.1} parent=11 // pred_fallthru
          _
        // Predicated region
        $region45: #{tpu_custom_call.1} parent=11 // pred_check
          %p698 = pneg %p535
        $region46: #{tpu_custom_call.1} parent=11 // pred_check_branch
          %700 = sbr.rel (%p698) target = $region48
        $region47: #{tpu_custom_call.1} parent=11 // pred_region
          %702 = vsyncadd [#allocation7], 0
          %s703 = sshll.u32 %s20, 4
          %s704 = int_to_ptr.hbm [resolvable:$true] %s703
          %s705 = sshll.u32 [#allocation20], 4
          %s706 = int_to_ptr.vmem [resolvable:$true] %s705
          %711 = dma.hbm_to_vmem [thread:$0]  %s704, 5120, %s706, [#allocation7], 64, 64, 4
        $region48: #{tpu_custom_call.1} parent=11 // pred_fallthru
          _
        // Predicated region
        $region49: #{tpu_custom_call.1} parent=11 // pred_check
          %p712 = pneg %p556
        $region50: #{tpu_custom_call.1} parent=11 // pred_check_branch
          %714 = sbr.rel (%p712) target = $region52
        $region51: #{tpu_custom_call.1} parent=11 // pred_region
          _
        $region52: #{tpu_custom_call.1} parent=11 // pred_fallthru
          _
        // Predicated region
        $region53: #{tpu_custom_call.1} parent=11 // pred_check
          %p715 = pneg %p577
        $region54: #{tpu_custom_call.1} parent=11 // pred_check_branch
          %717 = sbr.rel (%p715) target = $region56
        $region55: #{tpu_custom_call.1} parent=11 // pred_region
          %719 = vsyncadd [#allocation10], 0
          %s720 = sshll.u32 %s22, 4
          %s721 = int_to_ptr.hbm [resolvable:$true] %s720
          %s722 = sshll.u32 [#allocation21], 4
          %s723 = int_to_ptr.vmem [resolvable:$true] %s722
          %728 = dma.hbm_to_vmem [thread:$0]  %s721, 3072, %s723, [#allocation10], 64, 64, 4
        $region56: #{tpu_custom_call.1} parent=11 // pred_fallthru
          _
        // Predicated region
        $region57: #{tpu_custom_call.1} parent=11 // pred_check
          %p729 = pneg %p598
        $region58: #{tpu_custom_call.1} parent=11 // pred_check_branch
          %731 = sbr.rel (%p729) target = $region60
        $region59: #{tpu_custom_call.1} parent=11 // pred_region
          _
        $region60: #{tpu_custom_call.1} parent=11 // pred_fallthru
          _
      $region12: #{tpu_custom_call.1} parent=5 // pred_fallthru
        _
      %p732 = scmp.lt.s32.totalorder %s34, 2
      // Predicated region
      $region61: #{tpu_custom_call.1} parent=5 // pred_check
        %p733 = pneg %p732
      $region62: #{tpu_custom_call.1} parent=5 // pred_check_branch
        %735 = sbr.rel (%p733) target = $region64
      $region63: #{tpu_custom_call.1} parent=5 // pred_region
        // Predicated region
        $region65: #{tpu_custom_call.1} parent=63 // pred_check
          %p736 = pneg %p138
        $region66: #{tpu_custom_call.1} parent=63 // pred_check_branch
          %738 = sbr.rel (%p736) target = $region68
        $region67: #{tpu_custom_call.1} parent=63 // pred_region
          %s739 = sand.u32 %s34, 1
          %s740 = scalar_lea.sflag [#allocation4], %s739
          %s741 = sand.u32 %s128, 1
          %s742 = scalar_lea.vmem [#allocation11], %s741
          %744 = vsyncadd %s740, 0
          %s745 = scalar_lea.hbm %s4, %s34
          %s747 = sshll.u32 %s745, 4
          %s748 = int_to_ptr.hbm [resolvable:$true] %s747
          %s749 = sshll.u32 %s742, 4
          %s750 = int_to_ptr.vmem [resolvable:$true] %s749
          %752 = dma.hbm_to_vmem [thread:$0]  %s748, 16, %s750, %s740
        $region68: #{tpu_custom_call.1} parent=63 // pred_fallthru
          _
        // Predicated region
        $region69: #{tpu_custom_call.1} parent=63 // pred_check
          %p753 = pneg %p164
        $region70: #{tpu_custom_call.1} parent=63 // pred_check_branch
          %755 = sbr.rel (%p753) target = $region72
        $region71: #{tpu_custom_call.1} parent=63 // pred_region
          %s756 = sand.u32 %s34, 1
          %s757 = scalar_lea.sflag [#allocation4], %s756
          %s758 = sand.u32 %s154, 1
          %s759 = scalar_lea.vmem [#allocation12], %s758
          %761 = vsyncadd %s757, 0
          %s762 = scalar_lea.hbm %s5, %s34
          %s764 = sshll.u32 %s762, 4
          %s765 = int_to_ptr.hbm [resolvable:$true] %s764
          %s766 = sshll.u32 %s759, 4
          %s767 = int_to_ptr.vmem [resolvable:$true] %s766
          %769 = dma.hbm_to_vmem [thread:$0]  %s765, 16, %s767, %s757
        $region72: #{tpu_custom_call.1} parent=63 // pred_fallthru
          _
        // Predicated region
        $region73: #{tpu_custom_call.1} parent=63 // pred_check
          %p770 = pneg %p190
        $region74: #{tpu_custom_call.1} parent=63 // pred_check_branch
          %772 = sbr.rel (%p770) target = $region76
        $region75: #{tpu_custom_call.1} parent=63 // pred_region
          %s773 = sand.u32 %s34, 1
          %s774 = scalar_lea.sflag [#allocation4], %s773
          %s775 = sand.u32 %s180, 1
          %s776 = smul.addr %s775, 192
          %s777 = scalar_lea.vmem [#allocation13], %s776
          %779 = vsyncadd %s774, 0
          %s780 = smul.addr %s34, 48
          %s781 = smul.addr %s780, 4
          %s782 = scalar_lea.hbm %s6, %s781
          %s783 = sshll.u32 %s782, 4
          %s784 = int_to_ptr.hbm [resolvable:$true] %s783
          %s785 = sshll.u32 %s777, 4
          %s786 = int_to_ptr.vmem [resolvable:$true] %s785
          %791 = dma.hbm_to_vmem [thread:$0]  %s784, 3072, %s786, %s774, 192, 192, 12
        $region76: #{tpu_custom_call.1} parent=63 // pred_fallthru
          _
        // Predicated region
        $region77: #{tpu_custom_call.1} parent=63 // pred_check
          %p792 = pneg %p216
        $region78: #{tpu_custom_call.1} parent=63 // pred_check_branch
          %794 = sbr.rel (%p792) target = $region80
        $region79: #{tpu_custom_call.1} parent=63 // pred_region
          %p795 = scmp.lt.s32.totalorder %s34, 1
          %s796 = scalar_select %p795, %s34, 1
          %s797 = smul.addr %s796, 3
          %s798 = scalar_lea.vmem %s7, %s797
        $region80: #{tpu_custom_call.1} parent=63 // pred_fallthru
          _
        // Predicated region
        $region81: #{tpu_custom_call.1} parent=63 // pred_check
          %p799 = pneg %p242
        $region82: #{tpu_custom_call.1} parent=63 // pred_check_branch
          %801 = sbr.rel (%p799) target = $region84
        $region83: #{tpu_custom_call.1} parent=63 // pred_region
          %s802 = sand.u32 %s34, 1
          %s803 = scalar_lea.sflag [#allocation4], %s802
          %s804 = sand.u32 %s232, 1
          %s805 = smul.addr %s804, 64
          %s806 = scalar_lea.vmem [#allocation14], %s805
          %808 = vsyncadd %s803, 0
          %s809 = smul.addr %s34, 16
          %s810 = smul.addr %s809, 4
          %s811 = scalar_lea.hbm %s8, %s810
          %s812 = sshll.u32 %s811, 4
          %s813 = int_to_ptr.hbm [resolvable:$true] %s812
          %s814 = sshll.u32 %s806, 4
          %s815 = int_to_ptr.vmem [resolvable:$true] %s814
          %820 = dma.hbm_to_vmem [thread:$0]  %s813, 1024, %s815, %s803, 64, 64, 4
        $region84: #{tpu_custom_call.1} parent=63 // pred_fallthru
          _
        // Predicated region
        $region85: #{tpu_custom_call.1} parent=63 // pred_check
          %p821 = pneg %p268
        $region86: #{tpu_custom_call.1} parent=63 // pred_check_branch
          %823 = sbr.rel (%p821) target = $region88
        $region87: #{tpu_custom_call.1} parent=63 // pred_region
          %s824 = sand.u32 %s34, 1
          %s825 = scalar_lea.sflag [#allocation4], %s824
          %s826 = sand.u32 %s258, 1
          %s827 = scalar_lea.vmem [#allocation15], %s826
          %829 = vsyncadd %s825, 0
          %s830 = scalar_lea.hbm %s9, %s34
          %s832 = sshll.u32 %s830, 4
          %s833 = int_to_ptr.hbm [resolvable:$true] %s832
          %s834 = sshll.u32 %s827, 4
          %s835 = int_to_ptr.vmem [resolvable:$true] %s834
          %837 = dma.hbm_to_vmem [thread:$0]  %s833, 16, %s835, %s825
        $region88: #{tpu_custom_call.1} parent=63 // pred_fallthru
          _
        // Predicated region
        $region89: #{tpu_custom_call.1} parent=63 // pred_check
          %p838 = pneg %p294
        $region90: #{tpu_custom_call.1} parent=63 // pred_check_branch
          %840 = sbr.rel (%p838) target = $region92
        $region91: #{tpu_custom_call.1} parent=63 // pred_region
          %s841 = sand.u32 %s34, 1
          %s842 = scalar_lea.sflag [#allocation4], %s841
          %s843 = sand.u32 %s284, 1
          %s844 = scalar_lea.vmem [#allocation16], %s843
          %846 = vsyncadd %s842, 0
          %s847 = scalar_lea.hbm %s10, %s34
          %s849 = sshll.u32 %s847, 4
          %s850 = int_to_ptr.hbm [resolvable:$true] %s849
          %s851 = sshll.u32 %s844, 4
          %s852 = int_to_ptr.vmem [resolvable:$true] %s851
          %854 = dma.hbm_to_vmem [thread:$0]  %s850, 16, %s852, %s842
        $region92: #{tpu_custom_call.1} parent=63 // pred_fallthru
          _
        // Predicated region
        $region93: #{tpu_custom_call.1} parent=63 // pred_check
          %p855 = pneg %p320
        $region94: #{tpu_custom_call.1} parent=63 // pred_check_branch
          %857 = sbr.rel (%p855) target = $region96
        $region95: #{tpu_custom_call.1} parent=63 // pred_region
          %s858 = sand.u32 %s34, 1
          %s859 = scalar_lea.sflag [#allocation4], %s858
          %s860 = sand.u32 %s310, 1
          %s861 = scalar_lea.vmem [#allocation17], %s860
          %863 = vsyncadd %s859, 0
          %s864 = scalar_lea.hbm %s11, %s34
          %s866 = sshll.u32 %s864, 4
          %s867 = int_to_ptr.hbm [resolvable:$true] %s866
          %s868 = sshll.u32 %s861, 4
          %s869 = int_to_ptr.vmem [resolvable:$true] %s868
          %871 = dma.hbm_to_vmem [thread:$0]  %s867, 16, %s869, %s859
        $region96: #{tpu_custom_call.1} parent=63 // pred_fallthru
          _
        // Predicated region
        $region97: #{tpu_custom_call.1} parent=63 // pred_check
          %p872 = pneg %p346
        $region98: #{tpu_custom_call.1} parent=63 // pred_check_branch
          %874 = sbr.rel (%p872) target = $region100
        $region99: #{tpu_custom_call.1} parent=63 // pred_region
          %s875 = sand.u32 %s34, 1
          %s876 = scalar_lea.sflag [#allocation4], %s875
          %s877 = sand.u32 %s336, 1
          %s878 = smul.addr %s877, 128
          %s879 = scalar_lea.vmem [#allocation18], %s878
          %881 = vsyncadd %s876, 0
          %s882 = smul.addr %s34, 32
          %s883 = smul.addr %s882, 4
          %s884 = scalar_lea.hbm %s12, %s883
          %s885 = sshll.u32 %s884, 4
          %s886 = int_to_ptr.hbm [resolvable:$true] %s885
          %s887 = sshll.u32 %s879, 4
          %s888 = int_to_ptr.vmem [resolvable:$true] %s887
          %893 = dma.hbm_to_vmem [thread:$0]  %s886, 2048, %s888, %s876, 128, 128, 8
        $region100: #{tpu_custom_call.1} parent=63 // pred_fallthru
          _
        // Predicated region
        $region101: #{tpu_custom_call.1} parent=63 // pred_check
          %p894 = pneg %p372
        $region102: #{tpu_custom_call.1} parent=63 // pred_check_branch
          %896 = sbr.rel (%p894) target = $region104
        $region103: #{tpu_custom_call.1} parent=63 // pred_region
          %p897 = scmp.lt.s32.totalorder %s34, 1
          %s898 = scalar_select %p897, %s34, 1
          %s899 = smul.addr %s898, 2
          %s900 = scalar_lea.vmem %s13, %s899
        $region104: #{tpu_custom_call.1} parent=63 // pred_fallthru
          _
        // Predicated region
        $region105: #{tpu_custom_call.1} parent=63 // pred_check
          %p901 = pneg %p398
        $region106: #{tpu_custom_call.1} parent=63 // pred_check_branch
          %903 = sbr.rel (%p901) target = $region108
        $region107: #{tpu_custom_call.1} parent=63 // pred_region
          %s904 = sand.u32 %s34, 1
          %s905 = scalar_lea.sflag [#allocation4], %s904
          %s906 = sand.u32 %s388, 1
          %s907 = smul.addr %s906, 128
          %s908 = scalar_lea.vmem [#allocation19], %s907
          %910 = vsyncadd %s905, 0
          %s911 = smul.addr %s34, 32
          %s912 = smul.addr %s911, 4
          %s913 = scalar_lea.hbm %s14, %s912
          %s914 = sshll.u32 %s913, 4
          %s915 = int_to_ptr.hbm [resolvable:$true] %s914
          %s916 = sshll.u32 %s908, 4
          %s917 = int_to_ptr.vmem [resolvable:$true] %s916
          %922 = dma.hbm_to_vmem [thread:$0]  %s915, 2048, %s917, %s905, 64, 64, 4
        $region108: #{tpu_custom_call.1} parent=63 // pred_fallthru
          _
        // Predicated region
        $region109: #{tpu_custom_call.1} parent=63 // pred_check
          %p923 = pneg %p424
        $region110: #{tpu_custom_call.1} parent=63 // pred_check_branch
          %925 = sbr.rel (%p923) target = $region112
        $region111: #{tpu_custom_call.1} parent=63 // pred_region
          %p926 = scmp.lt.s32.totalorder %s34, 1
          %s927 = scalar_select %p926, %s34, 1
          %s928 = scalar_lea.vmem %s15, %s927
        $region112: #{tpu_custom_call.1} parent=63 // pred_fallthru
          _
      $region64: #{tpu_custom_call.1} parent=5 // pred_fallthru
        _
      %p929 = scmp.le.s32.totalorder 1, %s34
      %p930 = scmp.lt.s32.totalorder %s34, 3
      %p931 = pnand %p929, %p930
      %p932 = pneg %p931
      // Predicated region
      $region113: #{tpu_custom_call.1} parent=5 // pred_check
        _
      $region114: #{tpu_custom_call.1} parent=5 // pred_check_branch
        %934 = sbr.rel (%p931) target = $region116
      $region115: #{tpu_custom_call.1} parent=5 // pred_region
        %s935 = ssub.s32 %s34, 1
        // Predicated region
        $region117: #{tpu_custom_call.1} parent=115 // pred_check
          %p936 = pneg %p55
        $region118: #{tpu_custom_call.1} parent=115 // pred_check_branch
          %938 = sbr.rel (%p936) target = $region120
        $region119: #{tpu_custom_call.1} parent=115 // pred_region
          %940 = dma.done [#allocation4], 512
        $region120: #{tpu_custom_call.1} parent=115 // pred_fallthru
          _
        // Predicated region
        $region121: #{tpu_custom_call.1} parent=115 // pred_check
          %p941 = pneg %p76
        $region122: #{tpu_custom_call.1} parent=115 // pred_check_branch
          %943 = sbr.rel (%p941) target = $region124
        $region123: #{tpu_custom_call.1} parent=115 // pred_region
          %945 = dma.done [#allocation7], 512
        $region124: #{tpu_custom_call.1} parent=115 // pred_fallthru
          _
        // Predicated region
        $region125: #{tpu_custom_call.1} parent=115 // pred_check
          %p946 = pneg %p97
        $region126: #{tpu_custom_call.1} parent=115 // pred_check_branch
          %948 = sbr.rel (%p946) target = $region128
        $region127: #{tpu_custom_call.1} parent=115 // pred_region
          %950 = dma.done [#allocation7], 16
        $region128: #{tpu_custom_call.1} parent=115 // pred_fallthru
          _
        // Predicated region
        $region129: #{tpu_custom_call.1} parent=115 // pred_check
          %p951 = pneg %p118
        $region130: #{tpu_custom_call.1} parent=115 // pred_check_branch
          %953 = sbr.rel (%p951) target = $region132
        $region131: #{tpu_custom_call.1} parent=115 // pred_region
          %955 = dma.done [#allocation10], 16
        $region132: #{tpu_custom_call.1} parent=115 // pred_fallthru
          _
        %s956 = sand.u32 %s39, 1
        %s957 = scalar_lea.sflag [#allocation4], %s956
        %s958 = sand.u32 %s131, 1
        %s959 = scalar_lea.vmem [#allocation11], %s958
        // Predicated region
        $region133: #{tpu_custom_call.1} parent=115 // pred_check
          %p960 = pneg %p144
        $region134: #{tpu_custom_call.1} parent=115 // pred_check_branch
          %962 = sbr.rel (%p960) target = $region136
        $region135: #{tpu_custom_call.1} parent=115 // pred_region
          %964 = dma.done %s957, 16
        $region136: #{tpu_custom_call.1} parent=115 // pred_fallthru
          _
        %s965 = sand.u32 %s39, 1
        %s966 = scalar_lea.sflag [#allocation4], %s965
        %s967 = sand.u32 %s157, 1
        %s968 = scalar_lea.vmem [#allocation12], %s967
        // Predicated region
        $region137: #{tpu_custom_call.1} parent=115 // pred_check
          %p969 = pneg %p170
        $region138: #{tpu_custom_call.1} parent=115 // pred_check_branch
          %971 = sbr.rel (%p969) target = $region140
        $region139: #{tpu_custom_call.1} parent=115 // pred_region
          %973 = dma.done %s966, 16
        $region140: #{tpu_custom_call.1} parent=115 // pred_fallthru
          _
        %s974 = sand.u32 %s39, 1
        %s975 = scalar_lea.sflag [#allocation4], %s974
        %s976 = sand.u32 %s183, 1
        %s977 = smul.addr %s976, 192
        %s978 = scalar_lea.vmem [#allocation13], %s977
        // Predicated region
        $region141: #{tpu_custom_call.1} parent=115 // pred_check
          %p979 = pneg %p196
        $region142: #{tpu_custom_call.1} parent=115 // pred_check_branch
          %981 = sbr.rel (%p979) target = $region144
        $region143: #{tpu_custom_call.1} parent=115 // pred_region
          %983 = dma.done %s975, 3072
        $region144: #{tpu_custom_call.1} parent=115 // pred_fallthru
          _
        %s984 = sand.u32 %s39, 1
        %s985 = scalar_lea.sflag [#allocation4], %s984
        %s986 = sand.u32 %s235, 1
        %s987 = smul.addr %s986, 64
        %s988 = scalar_lea.vmem [#allocation14], %s987
        // Predicated region
        $region145: #{tpu_custom_call.1} parent=115 // pred_check
          %p989 = pneg %p248
        $region146: #{tpu_custom_call.1} parent=115 // pred_check_branch
          %991 = sbr.rel (%p989) target = $region148
        $region147: #{tpu_custom_call.1} parent=115 // pred_region
          %993 = dma.done %s985, 1024
        $region148: #{tpu_custom_call.1} parent=115 // pred_fallthru
          _
        %s994 = sand.u32 %s39, 1
        %s995 = scalar_lea.sflag [#allocation4], %s994
        %s996 = sand.u32 %s261, 1
        %s997 = scalar_lea.vmem [#allocation15], %s996
        // Predicated region
        $region149: #{tpu_custom_call.1} parent=115 // pred_check
          %p998 = pneg %p274
        $region150: #{tpu_custom_call.1} parent=115 // pred_check_branch
          %1000 = sbr.rel (%p998) target = $region152
        $region151: #{tpu_custom_call.1} parent=115 // pred_region
          %1002 = dma.done %s995, 16
        $region152: #{tpu_custom_call.1} parent=115 // pred_fallthru
          _
        %s1003 = sand.u32 %s39, 1
        %s1004 = scalar_lea.sflag [#allocation4], %s1003
        %s1005 = sand.u32 %s287, 1
        %s1006 = scalar_lea.vmem [#allocation16], %s1005
        // Predicated region
        $region153: #{tpu_custom_call.1} parent=115 // pred_check
          %p1007 = pneg %p300
        $region154: #{tpu_custom_call.1} parent=115 // pred_check_branch
          %1009 = sbr.rel (%p1007) target = $region156
        $region155: #{tpu_custom_call.1} parent=115 // pred_region
          %1011 = dma.done %s1004, 16
        $region156: #{tpu_custom_call.1} parent=115 // pred_fallthru
          _
        %s1012 = sand.u32 %s39, 1
        %s1013 = scalar_lea.sflag [#allocation4], %s1012
        %s1014 = sand.u32 %s313, 1
        %s1015 = scalar_lea.vmem [#allocation17], %s1014
        // Predicated region
        $region157: #{tpu_custom_call.1} parent=115 // pred_check
          %p1016 = pneg %p326
        $region158: #{tpu_custom_call.1} parent=115 // pred_check_branch
          %1018 = sbr.rel (%p1016) target = $region160
        $region159: #{tpu_custom_call.1} parent=115 // pred_region
          %1020 = dma.done %s1013, 16
        $region160: #{tpu_custom_call.1} parent=115 // pred_fallthru
          _
        %s1021 = sand.u32 %s39, 1
        %s1022 = scalar_lea.sflag [#allocation4], %s1021
        %s1023 = sand.u32 %s339, 1
        %s1024 = smul.addr %s1023, 128
        %s1025 = scalar_lea.vmem [#allocation18], %s1024
        // Predicated region
        $region161: #{tpu_custom_call.1} parent=115 // pred_check
          %p1026 = pneg %p352
        $region162: #{tpu_custom_call.1} parent=115 // pred_check_branch
          %1028 = sbr.rel (%p1026) target = $region164
        $region163: #{tpu_custom_call.1} parent=115 // pred_region
          %1030 = dma.done %s1022, 2048
        $region164: #{tpu_custom_call.1} parent=115 // pred_fallthru
          _
        %s1031 = sand.u32 %s39, 1
        %s1032 = scalar_lea.sflag [#allocation4], %s1031
        %s1033 = sand.u32 %s391, 1
        %s1034 = smul.addr %s1033, 128
        %s1035 = scalar_lea.vmem [#allocation19], %s1034
        // Predicated region
        $region165: #{tpu_custom_call.1} parent=115 // pred_check
          %p1036 = pneg %p404
        $region166: #{tpu_custom_call.1} parent=115 // pred_check_branch
          %1038 = sbr.rel (%p1036) target = $region168
        $region167: #{tpu_custom_call.1} parent=115 // pred_region
          %1040 = dma.done %s1032, 2048
        $region168: #{tpu_custom_call.1} parent=115 // pred_fallthru
          _
        // Predicated region
        $region169: #{tpu_custom_call.1} parent=115 // pred_check
          %p1041 = pneg %p535
        $region170: #{tpu_custom_call.1} parent=115 // pred_check_branch
          %1043 = sbr.rel (%p1041) target = $region172
        $region171: #{tpu_custom_call.1} parent=115 // pred_region
          %1045 = dma.done [#allocation7], 5120
        $region172: #{tpu_custom_call.1} parent=115 // pred_fallthru
          _
        // Predicated region
        $region173: #{tpu_custom_call.1} parent=115 // pred_check
          %p1046 = pneg %p577
        $region174: #{tpu_custom_call.1} parent=115 // pred_check_branch
          %1048 = sbr.rel (%p1046) target = $region176
        $region175: #{tpu_custom_call.1} parent=115 // pred_region
          %1050 = dma.done [#allocation10], 3072
        $region176: #{tpu_custom_call.1} parent=115 // pred_fallthru
          _
        %p1051 = pneg %p55
        %p1052 = pneg %p52
        %p1053 = pneg %p76
        %p1054 = pneg %p73
        %p1055 = pneg %p97
        %p1056 = pneg %p94
        %p1057 = pneg %p118
        %p1058 = pneg %p115
        %s1059 = sand.u32 %s39, 1
        %s1060 = scalar_lea.sflag [#allocation4], %s1059
        %s1061 = sand.u32 %s131, 1
        %s1062 = scalar_lea.vmem [#allocation11], %s1061
        %p1063 = pneg %p144
        %p1064 = pneg %p141
        %s1065 = sand.u32 %s39, 1
        %s1066 = scalar_lea.sflag [#allocation4], %s1065
        %s1067 = sand.u32 %s157, 1
        %s1068 = scalar_lea.vmem [#allocation12], %s1067
        %p1069 = pneg %p170
        %p1070 = pneg %p167
        %s1071 = sand.u32 %s39, 1
        %s1072 = scalar_lea.sflag [#allocation4], %s1071
        %s1073 = sand.u32 %s183, 1
        %s1074 = smul.addr %s1073, 192
        %s1075 = scalar_lea.vmem [#allocation13], %s1074
        %p1076 = pneg %p196
        %p1077 = pneg %p193
        %p1078 = scmp.lt.s32.totalorder %s39, 1
        %s1079 = scalar_select %p1078, %s39, 1
        %s1080 = smul.addr %s1079, 3
        %s1081 = scalar_lea.vmem %s7, %s1080
        %p1082 = pneg %p222
        %p1083 = pneg %p219
        %s1084 = sand.u32 %s39, 1
        %s1085 = scalar_lea.sflag [#allocation4], %s1084
        %s1086 = sand.u32 %s235, 1
        %s1087 = smul.addr %s1086, 64
        %s1088 = scalar_lea.vmem [#allocation14], %s1087
        %p1089 = pneg %p248
        %p1090 = pneg %p245
        %s1091 = sand.u32 %s39, 1
        %s1092 = scalar_lea.sflag [#allocation4], %s1091
        %s1093 = sand.u32 %s261, 1
        %s1094 = scalar_lea.vmem [#allocation15], %s1093
        %p1095 = pneg %p274
        %p1096 = pneg %p271
        %s1097 = sand.u32 %s39, 1
        %s1098 = scalar_lea.sflag [#allocation4], %s1097
        %s1099 = sand.u32 %s287, 1
        %s1100 = scalar_lea.vmem [#allocation16], %s1099
        %p1101 = pneg %p300
        %p1102 = pneg %p297
        %s1103 = sand.u32 %s39, 1
        %s1104 = scalar_lea.sflag [#allocation4], %s1103
        %s1105 = sand.u32 %s313, 1
        %s1106 = scalar_lea.vmem [#allocation17], %s1105
        %p1107 = pneg %p326
        %p1108 = pneg %p323
        %s1109 = sand.u32 %s39, 1
        %s1110 = scalar_lea.sflag [#allocation4], %s1109
        %s1111 = sand.u32 %s339, 1
        %s1112 = smul.addr %s1111, 128
        %s1113 = scalar_lea.vmem [#allocation18], %s1112
        %p1114 = pneg %p352
        %p1115 = pneg %p349
        %p1116 = scmp.lt.s32.totalorder %s39, 1
        %s1117 = scalar_select %p1116, %s39, 1
        %s1118 = smul.addr %s1117, 2
        %s1119 = scalar_lea.vmem %s13, %s1118
        %p1120 = pneg %p378
        %p1121 = pneg %p375
        %s1122 = sand.u32 %s39, 1
        %s1123 = scalar_lea.sflag [#allocation4], %s1122
        %s1124 = sand.u32 %s391, 1
        %s1125 = smul.addr %s1124, 128
        %s1126 = scalar_lea.vmem [#allocation19], %s1125
        %p1127 = pneg %p404
        %p1128 = pneg %p401
        %p1129 = scmp.lt.s32.totalorder %s39, 1
        %s1130 = scalar_select %p1129, %s39, 1
        %s1131 = scalar_lea.vmem %s15, %s1130
        %p1132 = pneg %p430
        %p1133 = pneg %p427
        %p1134 = pneg %p451
        %p1135 = pneg %p448
        %p1136 = pneg %p472
        %p1137 = pneg %p469
        %p1138 = pneg %p493
        %p1139 = pneg %p490
        %p1140 = pneg %p514
        %p1141 = pneg %p511
        %p1142 = pneg %p535
        %p1143 = pneg %p532
        %p1144 = pneg %p556
        %p1145 = pneg %p553
        %p1146 = pneg %p577
        %p1147 = pneg %p574
        %p1148 = pneg %p598
        %p1149 = pneg %p595
        %p1150 = pneg %p619
        %p1151 = pneg %p616
        %p1152 = scmp.lt.s32.totalorder %s39, 1
        %s1153 = scalar_select %p1152, %s39, 1
        %s1154 = smul.addr %s1153, 3
        %s1155 = scalar_lea.vmem %s7, %s1154
        %p1156 = scmp.lt.s32.totalorder %s39, 1
        %s1157 = scalar_select %p1156, %s39, 1
        %s1158 = smul.addr %s1157, 2
        %s1159 = scalar_lea.vmem %s13, %s1158
        %p1160 = scmp.lt.s32.totalorder %s39, 1
        %s1161 = scalar_select %p1160, %s39, 1
        %s1162 = scalar_lea.vmem %s15, %s1161
        %p1164 = scmp.eq.s32.totalorder %s39, 0
        // Predicated region
        $region177: #{tpu_custom_call.1} parent=115 // pred_check
          %p1165 = pneg %p1164
        $region178: #{tpu_custom_call.1} parent=115 // pred_check_branch
          %1167 = sbr.rel (%p1165) target = $region180
        $region179: #{tpu_custom_call.1} parent=115 // pred_region
          %v1168 = vld [vmem:[#allocation3] sm:$0xff]
          %v1169 = vld [vmem:[#allocation3 + $0x8] sm:$0xff]
          %v1170 = vld [vmem:[#allocation3 + $0x10] sm:$0xff]
          %v1171 = vld [vmem:[#allocation3 + $0x18] sm:$0xff]
          %v1172 = vld [vmem:[#allocation8] sm:$0x1]
          %v1173 = vld [vmem:[#allocation9] sm:$0x1]
          %1174 = vadd.xlane.f32.xlu0 %v1168
          %v1175 = vpop.xlane.xlu0 %1174
          %1176 = vadd.xlane.f32.xlu0 %v1169
          %v1177 = vpop.xlane.xlu0 %1176
          %1178 = vadd.xlane.f32.xlu0 %v1170
          %v1179 = vpop.xlane.xlu0 %1178
          %1180 = vadd.xlane.f32.xlu0 %v1171
          %v1181 = vpop.xlane.xlu0 %1180
          %v1182 = vrcp.pop 128.0
          %v1183 = vmul.f32 128.0, %v1182
          %v1184 = vsub.f32 1.0, %v1183
          %v1185 = vmul.f32 %v1182, %v1184
          %v1186 = vadd.f32 %v1182, %v1185
          %vm1187 = vweird.f32 %v1182
          %v1188 = vsel %vm1187, %v1182, %v1186
          %v1189 = vmul.f32 %v1175, %v1188
          %v1190 = vmul.f32 %v1177, %v1188
          %v1191 = vmul.f32 %v1179, %v1188
          %v1192 = vmul.f32 %v1181, %v1188
          %v1193 = vsub.f32 %v1168, %v1189
          %v1194 = vsub.f32 %v1169, %v1190
          %v1195 = vsub.f32 %v1170, %v1191
          %v1196 = vsub.f32 %v1171, %v1192
          %v1197 = vmul.f32 %v1193, %v1193
          %v1198 = vmul.f32 %v1194, %v1194
          %v1199 = vmul.f32 %v1195, %v1195
          %v1200 = vmul.f32 %v1196, %v1196
          %1201 = vadd.xlane.f32.xlu0 %v1197
          %v1202 = vpop.xlane.xlu0 %1201
          %1203 = vadd.xlane.f32.xlu0 %v1198
          %v1204 = vpop.xlane.xlu0 %1203
          %1205 = vadd.xlane.f32.xlu0 %v1199
          %v1206 = vpop.xlane.xlu0 %1205
          %1207 = vadd.xlane.f32.xlu0 %v1200
          %v1208 = vpop.xlane.xlu0 %1207
          %v1209 = vmul.f32 %v1202, %v1188
          %v1210 = vmul.f32 %v1204, %v1188
          %v1211 = vmul.f32 %v1206, %v1188
          %v1212 = vmul.f32 %v1208, %v1188
          %v1213 = vadd.f32 %v1209, 1e-05
          %v1214 = vadd.f32 %v1210, 1e-05
          %v1215 = vadd.f32 %v1211, 1e-05
          %v1216 = vadd.f32 %v1212, 1e-05
          %v1217 = vrsqrt.pop %v1213
          %v1218 = vmul.f32 %v1217, %v1213
          %v1219 = vmul.f32 %v1218, %v1217
          %v1220 = vmul.f32 0.5, %v1219
          %v1221 = vsub.f32 1.5, %v1220
          %v1222 = vmul.f32 %v1217, %v1221
          %vm1223 = vweird.f32 %v1213
          %vm1224 = vweird.f32 %v1217
          %vm1225 = vmor %vm1223, %vm1224
          %v1226 = vsel %vm1225, %v1217, %v1222
          %v1227 = vrsqrt.pop %v1214
          %v1228 = vmul.f32 %v1227, %v1214
          %v1229 = vmul.f32 %v1228, %v1227
          %v1230 = vmul.f32 0.5, %v1229
          %v1231 = vsub.f32 1.5, %v1230
          %v1232 = vmul.f32 %v1227, %v1231
          %vm1233 = vweird.f32 %v1214
          %vm1234 = vweird.f32 %v1227
          %vm1235 = vmor %vm1233, %vm1234
          %v1236 = vsel %vm1235, %v1227, %v1232
          %v1237 = vrsqrt.pop %v1215
          %v1238 = vmul.f32 %v1237, %v1215
          %v1239 = vmul.f32 %v1238, %v1237
          %v1240 = vmul.f32 0.5, %v1239
          %v1241 = vsub.f32 1.5, %v1240
          %v1242 = vmul.f32 %v1237, %v1241
          %vm1243 = vweird.f32 %v1215
          %vm1244 = vweird.f32 %v1237
          %vm1245 = vmor %vm1243, %vm1244
          %v1246 = vsel %vm1245, %v1237, %v1242
          %v1247 = vrsqrt.pop %v1216
          %v1248 = vmul.f32 %v1247, %v1216
          %v1249 = vmul.f32 %v1248, %v1247
          %v1250 = vmul.f32 0.5, %v1249
          %v1251 = vsub.f32 1.5, %v1250
          %v1252 = vmul.f32 %v1247, %v1251
          %vm1253 = vweird.f32 %v1216
          %vm1254 = vweird.f32 %v1247
          %vm1255 = vmor %vm1253, %vm1254
          %v1256 = vsel %vm1255, %v1247, %v1252
          %v1257 = vmul.f32 %v1193, %v1226
          %v1258 = vmul.f32 %v1194, %v1236
          %v1259 = vmul.f32 %v1195, %v1246
          %v1260 = vmul.f32 %v1196, %v1256
          %v1262 = vperm.slane %v1172, 0
          %v1264 = vmul.f32 %v1257, %v1262
          %v1265 = vmul.f32 %v1258, %v1262
          %v1266 = vmul.f32 %v1259, %v1262
          %v1267 = vmul.f32 %v1260, %v1262
          %v1269 = vperm.slane %v1173, 0
          %v1271 = vadd.f32 %v1264, %v1269
          %v1272 = vadd.f32 %v1265, %v1269
          %v1273 = vadd.f32 %v1266, %v1269
          %v1274 = vadd.f32 %v1267, %v1269
          %1275 = vst [vmem:[#allocation2] sm:$0xff] %v1271
          %1276 = vst [vmem:[#allocation2 + $0x8] sm:$0xff] %v1272
          %1277 = vst [vmem:[#allocation2 + $0x10] sm:$0xff] %v1273
          %1278 = vst [vmem:[#allocation2 + $0x18] sm:$0xff] %v1274
        $region180: #{tpu_custom_call.1} parent=115 // pred_fallthru
          _
        %v1279 = vld [vmem:[#allocation2] sm:$0xff]
        %v1280 = vld [vmem:[#allocation2 + $0x8] sm:$0xff]
        %v1281 = vld [vmem:[#allocation2 + $0x10] sm:$0xff]
        %v1282 = vld [vmem:[#allocation2 + $0x18] sm:$0xff]
        %v1283 = vld [vmem:[%s959] sm:$0x1]
        %v1284 = vld [vmem:[%s968] sm:$0x1]
        %1285 = vadd.xlane.f32.xlu0 %v1279
        %v1286 = vpop.xlane.xlu0 %1285
        %1287 = vadd.xlane.f32.xlu0 %v1280
        %v1288 = vpop.xlane.xlu0 %1287
        %1289 = vadd.xlane.f32.xlu0 %v1281
        %v1290 = vpop.xlane.xlu0 %1289
        %1291 = vadd.xlane.f32.xlu0 %v1282
        %v1292 = vpop.xlane.xlu0 %1291
        %v1293 = vrcp.pop 128.0
        %v1294 = vmul.f32 128.0, %v1293
        %v1295 = vsub.f32 1.0, %v1294
        %v1296 = vmul.f32 %v1293, %v1295
        %v1297 = vadd.f32 %v1293, %v1296
        %vm1298 = vweird.f32 %v1293
        %v1299 = vsel %vm1298, %v1293, %v1297
        %v1300 = vmul.f32 %v1286, %v1299
        %v1301 = vmul.f32 %v1288, %v1299
        %v1302 = vmul.f32 %v1290, %v1299
        %v1303 = vmul.f32 %v1292, %v1299
        %v1304 = vsub.f32 %v1279, %v1300
        %v1305 = vsub.f32 %v1280, %v1301
        %v1306 = vsub.f32 %v1281, %v1302
        %v1307 = vsub.f32 %v1282, %v1303
        %v1308 = vmul.f32 %v1304, %v1304
        %v1309 = vmul.f32 %v1305, %v1305
        %v1310 = vmul.f32 %v1306, %v1306
        %v1311 = vmul.f32 %v1307, %v1307
        %1312 = vadd.xlane.f32.xlu0 %v1308
        %v1313 = vpop.xlane.xlu0 %1312
        %1314 = vadd.xlane.f32.xlu0 %v1309
        %v1315 = vpop.xlane.xlu0 %1314
        %1316 = vadd.xlane.f32.xlu0 %v1310
        %v1317 = vpop.xlane.xlu0 %1316
        %1318 = vadd.xlane.f32.xlu0 %v1311
        %v1319 = vpop.xlane.xlu0 %1318
        %v1320 = vmul.f32 %v1313, %v1299
        %v1321 = vmul.f32 %v1315, %v1299
        %v1322 = vmul.f32 %v1317, %v1299
        %v1323 = vmul.f32 %v1319, %v1299
        %v1324 = vadd.f32 %v1320, 1e-05
        %v1325 = vadd.f32 %v1321, 1e-05
        %v1326 = vadd.f32 %v1322, 1e-05
        %v1327 = vadd.f32 %v1323, 1e-05
        %v1328 = vrsqrt.pop %v1324
        %v1329 = vmul.f32 %v1328, %v1324
        %v1330 = vmul.f32 %v1329, %v1328
        %v1331 = vmul.f32 0.5, %v1330
        %v1332 = vsub.f32 1.5, %v1331
        %v1333 = vmul.f32 %v1328, %v1332
        %vm1334 = vweird.f32 %v1324
        %vm1335 = vweird.f32 %v1328
        %vm1336 = vmor %vm1334, %vm1335
        %v1337 = vsel %vm1336, %v1328, %v1333
        %v1338 = vrsqrt.pop %v1325
        %v1339 = vmul.f32 %v1338, %v1325
        %v1340 = vmul.f32 %v1339, %v1338
        %v1341 = vmul.f32 0.5, %v1340
        %v1342 = vsub.f32 1.5, %v1341
        %v1343 = vmul.f32 %v1338, %v1342
        %vm1344 = vweird.f32 %v1325
        %vm1345 = vweird.f32 %v1338
        %vm1346 = vmor %vm1344, %vm1345
        %v1347 = vsel %vm1346, %v1338, %v1343
        %v1348 = vrsqrt.pop %v1326
        %v1349 = vmul.f32 %v1348, %v1326
        %v1350 = vmul.f32 %v1349, %v1348
        %v1351 = vmul.f32 0.5, %v1350
        %v1352 = vsub.f32 1.5, %v1351
        %v1353 = vmul.f32 %v1348, %v1352
        %vm1354 = vweird.f32 %v1326
        %vm1355 = vweird.f32 %v1348
        %vm1356 = vmor %vm1354, %vm1355
        %v1357 = vsel %vm1356, %v1348, %v1353
        %v1358 = vrsqrt.pop %v1327
        %v1359 = vmul.f32 %v1358, %v1327
        %v1360 = vmul.f32 %v1359, %v1358
        %v1361 = vmul.f32 0.5, %v1360
        %v1362 = vsub.f32 1.5, %v1361
        %v1363 = vmul.f32 %v1358, %v1362
        %vm1364 = vweird.f32 %v1327
        %vm1365 = vweird.f32 %v1358
        %vm1366 = vmor %vm1364, %vm1365
        %v1367 = vsel %vm1366, %v1358, %v1363
        %v1368 = vmul.f32 %v1304, %v1337
        %v1369 = vmul.f32 %v1305, %v1347
        %v1370 = vmul.f32 %v1306, %v1357
        %v1371 = vmul.f32 %v1307, %v1367
        %v1373 = vperm.slane %v1283, 0
        %v1375 = vmul.f32 %v1368, %v1373
        %v1376 = vmul.f32 %v1369, %v1373
        %v1377 = vmul.f32 %v1370, %v1373
        %v1378 = vmul.f32 %v1371, %v1373
        %v1380 = vperm.slane %v1284, 0
        %v1382 = vadd.f32 %v1375, %v1380
        %v1383 = vadd.f32 %v1376, %v1380
        %v1384 = vadd.f32 %v1377, %v1380
        %v1385 = vadd.f32 %v1378, %v1380
        %v1386 = vpack.c.bf16 %v1383, %v1382
        %v1387 = vpack.c.bf16 %v1385, %v1384
        %v1388 = vld [vmem:[%s978] sm:$0xff]
        %v1389 = vld [vmem:[%s978 + $0x8] sm:$0xf]
        %v1390 = vld [vmem:[%s978 + $0xc] sm:$0xff]
        %v1391 = vld [vmem:[%s978 + $0x14] sm:$0xf]
        %v1392 = vld [vmem:[%s978 + $0x18] sm:$0xff]
        %v1393 = vld [vmem:[%s978 + $0x20] sm:$0xf]
        %v1394 = vld [vmem:[%s978 + $0x24] sm:$0xff]
        %v1395 = vld [vmem:[%s978 + $0x2c] sm:$0xf]
        %v1396 = vld [vmem:[%s978 + $0x30] sm:$0xff]
        %v1397 = vld [vmem:[%s978 + $0x38] sm:$0xf]
        %v1398 = vld [vmem:[%s978 + $0x3c] sm:$0xff]
        %v1399 = vld [vmem:[%s978 + $0x44] sm:$0xf]
        %v1400 = vld [vmem:[%s978 + $0x48] sm:$0xff]
        %v1401 = vld [vmem:[%s978 + $0x50] sm:$0xf]
        %v1402 = vld [vmem:[%s978 + $0x54] sm:$0xff]
        %v1403 = vld [vmem:[%s978 + $0x5c] sm:$0xf]
        %v1404 = vld [vmem:[%s978 + $0x60] sm:$0xff]
        %v1405 = vld [vmem:[%s978 + $0x68] sm:$0xf]
        %v1406 = vld [vmem:[%s978 + $0x6c] sm:$0xff]
        %v1407 = vld [vmem:[%s978 + $0x74] sm:$0xf]
        %v1408 = vld [vmem:[%s978 + $0x78] sm:$0xff]
        %v1409 = vld [vmem:[%s978 + $0x80] sm:$0xf]
        %v1410 = vld [vmem:[%s978 + $0x84] sm:$0xff]
        %v1411 = vld [vmem:[%s978 + $0x8c] sm:$0xf]
        %v1412 = vld [vmem:[%s978 + $0x90] sm:$0xff]
        %v1413 = vld [vmem:[%s978 + $0x98] sm:$0xf]
        %v1414 = vld [vmem:[%s978 + $0x9c] sm:$0xff]
        %v1415 = vld [vmem:[%s978 + $0xa4] sm:$0xf]
        %v1416 = vld [vmem:[%s978 + $0xa8] sm:$0xff]
        %v1417 = vld [vmem:[%s978 + $0xb0] sm:$0xf]
        %v1418 = vld [vmem:[%s978 + $0xb4] sm:$0xff]
        %v1419 = vld [vmem:[%s978 + $0xbc] sm:$0xf]
        %v1420 = vld [vmem:[%s1155] sm:$0x7]
        %v1422 = vperm.slane %v1420, 0
        %v1423 = vperm.slane %v1420, 1
        %v1424 = vperm.slane %v1420, 2
        %v1460 = vunpack.c.l.b16 %v1388
        %v1461 = vunpack.c.h.b16 %v1388
        %v1462 = vunpack.c.l.b16 %v1389
        %v1463 = vunpack.c.l.b16 %v1390
        %v1464 = vunpack.c.h.b16 %v1390
        %v1465 = vunpack.c.l.b16 %v1391
        %v1466 = vunpack.c.l.b16 %v1392
        %v1467 = vunpack.c.h.b16 %v1392
        %v1468 = vunpack.c.l.b16 %v1393
        %v1469 = vunpack.c.l.b16 %v1394
        %v1470 = vunpack.c.h.b16 %v1394
        %v1471 = vunpack.c.l.b16 %v1395
        %v1472 = vunpack.c.l.b16 %v1396
        %v1473 = vunpack.c.h.b16 %v1396
        %v1474 = vunpack.c.l.b16 %v1397
        %v1475 = vunpack.c.l.b16 %v1398
        %v1476 = vunpack.c.h.b16 %v1398
        %v1477 = vunpack.c.l.b16 %v1399
        %v1478 = vunpack.c.l.b16 %v1400
        %v1479 = vunpack.c.h.b16 %v1400
        %v1480 = vunpack.c.l.b16 %v1401
        %v1481 = vunpack.c.l.b16 %v1402
        %v1482 = vunpack.c.h.b16 %v1402
        %v1483 = vunpack.c.l.b16 %v1403
        %v1484 = vunpack.c.l.b16 %v1404
        %v1485 = vunpack.c.h.b16 %v1404
        %v1486 = vunpack.c.l.b16 %v1405
        %v1487 = vunpack.c.l.b16 %v1406
        %v1488 = vunpack.c.h.b16 %v1406
        %v1489 = vunpack.c.l.b16 %v1407
        %v1490 = vunpack.c.l.b16 %v1408
        %v1491 = vunpack.c.h.b16 %v1408
        %v1492 = vunpack.c.l.b16 %v1409
        %v1493 = vunpack.c.l.b16 %v1410
        %v1494 = vunpack.c.h.b16 %v1410
        %v1495 = vunpack.c.l.b16 %v1411
        %v1496 = vunpack.c.l.b16 %v1412
        %v1497 = vunpack.c.h.b16 %v1412
        %v1498 = vunpack.c.l.b16 %v1413
        %v1499 = vunpack.c.l.b16 %v1414
        %v1500 = vunpack.c.h.b16 %v1414
        %v1501 = vunpack.c.l.b16 %v1415
        %v1502 = vunpack.c.l.b16 %v1416
        %v1503 = vunpack.c.h.b16 %v1416
        %v1504 = vunpack.c.l.b16 %v1417
        %v1505 = vunpack.c.l.b16 %v1418
        %v1506 = vunpack.c.h.b16 %v1418
        %v1507 = vunpack.c.l.b16 %v1419
        %v1508 = vpack.c.b16 %v1463, %v1460
        %v1509 = vpack.c.b16 %v1464, %v1461
        %v1510 = vpack.c.b16 %v1465, %v1462
        %v1511 = vpack.c.b16 %v1469, %v1466
        %v1512 = vpack.c.b16 %v1470, %v1467
        %v1513 = vpack.c.b16 %v1471, %v1468
        %v1514 = vpack.c.b16 %v1475, %v1472
        %v1515 = vpack.c.b16 %v1476, %v1473
        %v1516 = vpack.c.b16 %v1477, %v1474
        %v1517 = vpack.c.b16 %v1481, %v1478
        %v1518 = vpack.c.b16 %v1482, %v1479
        %v1519 = vpack.c.b16 %v1483, %v1480
        %v1520 = vpack.c.b16 %v1487, %v1484
        %v1521 = vpack.c.b16 %v1488, %v1485
        %v1522 = vpack.c.b16 %v1489, %v1486
        %v1523 = vpack.c.b16 %v1493, %v1490
        %v1524 = vpack.c.b16 %v1494, %v1491
        %v1525 = vpack.c.b16 %v1495, %v1492
        %v1526 = vpack.c.b16 %v1499, %v1496
        %v1527 = vpack.c.b16 %v1500, %v1497
        %v1528 = vpack.c.b16 %v1501, %v1498
        %v1529 = vpack.c.b16 %v1505, %v1502
        %v1530 = vpack.c.b16 %v1506, %v1503
        %v1531 = vpack.c.b16 %v1507, %v1504
        %1556 = vmatpush.bf16.msra.mxu0 %v1529
        %1557 = vmatpush.bf16.msra.mxu0 %v1526
        %1558 = vmatpush.bf16.msra.mxu0 %v1523
        %1559 = vmatpush.bf16.msra.mxu0 %v1520
        %1560 = vmatpush.bf16.msra.mxu0 %v1517
        %1561 = vmatpush.bf16.msra.mxu0 %v1514
        %1562 = vmatpush.bf16.msra.mxu0 %v1511
        %1563 = vmatpush.bf16.msra.mxu0 %v1508
        %1564 = vmatmul.bf16.gmra.mxu0 %v1386
        %v1565 = vpop.f32.mrf.mxu0
        %v1566 = vadd.f32 %v1422, %v1565
        %v1567 = vpop.f32.mrf.mxu0
        %v1568 = vadd.f32 %v1422, %v1567
        %1569 = vmatmul.bf16.gmra.mxu0 %v1387
        %v1570 = vpop.f32.mrf.mxu0
        %v1571 = vadd.f32 %v1422, %v1570
        %v1572 = vpop.f32.mrf.mxu0
        %v1573 = vadd.f32 %v1422, %v1572
        %1574 = vdwg.mxu0
        %1575 = vmatpush.bf16.msra.mxu0 %v1530
        %1576 = vmatpush.bf16.msra.mxu0 %v1527
        %1577 = vmatpush.bf16.msra.mxu0 %v1524
        %1578 = vmatpush.bf16.msra.mxu0 %v1521
        %1579 = vmatpush.bf16.msra.mxu0 %v1518
        %1580 = vmatpush.bf16.msra.mxu0 %v1515
        %1581 = vmatpush.bf16.msra.mxu0 %v1512
        %1582 = vmatpush.bf16.msra.mxu0 %v1509
        %1583 = vmatmul.bf16.gmra.mxu0 %v1386
        %v1584 = vpop.f32.mrf.mxu0
        %v1585 = vadd.f32 %v1423, %v1584
        %v1586 = vpop.f32.mrf.mxu0
        %v1587 = vadd.f32 %v1423, %v1586
        %1588 = vmatmul.bf16.gmra.mxu0 %v1387
        %v1589 = vpop.f32.mrf.mxu0
        %v1590 = vadd.f32 %v1423, %v1589
        %v1591 = vpop.f32.mrf.mxu0
        %v1592 = vadd.f32 %v1423, %v1591
        %1593 = vdwg.mxu0
        %1594 = vmatpush.bf16.msra.mxu0 %v1531
        %1595 = vmatpush.bf16.msra.mxu0 %v1528
        %1596 = vmatpush.bf16.msra.mxu0 %v1525
        %1597 = vmatpush.bf16.msra.mxu0 %v1522
        %1598 = vmatpush.bf16.msra.mxu0 %v1519
        %1599 = vmatpush.bf16.msra.mxu0 %v1516
        %1600 = vmatpush.bf16.msra.mxu0 %v1513
        %1601 = vmatpush.bf16.msra.mxu0 %v1510
        %1602 = vmatmul.bf16.gmra.mxu0 %v1386
        %v1603 = vpop.f32.mrf.mxu0
        %v1604 = vadd.f32 %v1424, %v1603
        %v1605 = vpop.f32.mrf.mxu0
        %v1606 = vadd.f32 %v1424, %v1605
        %1607 = vmatmul.bf16.gmra.mxu0 %v1387
        %v1608 = vpop.f32.mrf.mxu0
        %v1609 = vadd.f32 %v1424, %v1608
        %v1610 = vpop.f32.mrf.mxu0
        %v1611 = vadd.f32 %v1424, %v1610
        %1612 = vdwg.mxu0
        %v1613 = vpack.c.bf16 %v1587, %v1585
        %v1614 = vpack.c.bf16 %v1592, %v1590
        %v1615 = vld [vmem:[#allocation6] sm:$0xff]
        %v1616 = vld [vmem:[#allocation6 + $0x8] sm:$0xff]
        %v1617 = vld [vmem:[#allocation6 + $0x10] sm:$0xff]
        %v1618 = vld [vmem:[#allocation6 + $0x18] sm:$0xff]
        %v1619 = vlaneseq
        %v1620 = vand.u32 %v1619, 127
        %vm1621 = vcmp.ge.s32.totalorder %v1620, 0
        %vm1622 = vcmp.lt.s32.totalorder %v1620, 64
        %vm1623 = vmand %vm1621, %vm1622
        %v1624 = vsel %vm1623, %v1566, 0.0
        %v1625 = vsel %vm1623, %v1568, 0.0
        %v1626 = vsel %vm1623, %v1571, 0.0
        %v1627 = vsel %vm1623, %v1573, 0.0
        %v1628 = vpack.c.bf16 %v1625, %v1624
        %v1629 = vpack.c.bf16 %v1627, %v1626
        %1630 = vmatpush.bf16.xpose.msra.mxu0 0
        %1631 = vmatpush.bf16.xpose.msra.mxu0 0
        %1632 = vmatpush.bf16.xpose.msra.mxu0 0
        %1633 = vmatpush.bf16.xpose.msra.mxu0 0
        %1634 = vmatpush.bf16.xpose.msra.mxu0 0
        %1635 = vmatpush.bf16.xpose.msra.mxu0 0
        %1636 = vmatpush.bf16.xpose.msra.mxu0 %v1614
        %1637 = vmatpush.bf16.xpose.msra.mxu0 %v1613
        %1638 = vmatmul.bf16.gmra.mxu0 %v1628
        %v1639 = vpop.f32.mrf.mxu0
        %v1640 = vadd.f32 %v1615, %v1639
        %v1641 = vpop.f32.mrf.mxu0
        %v1642 = vadd.f32 %v1616, %v1641
        %1643 = vmatmul.bf16.gmra.mxu0 %v1629
        %v1644 = vpop.f32.mrf.mxu0
        %v1645 = vadd.f32 %v1617, %v1644
        %v1646 = vpop.f32.mrf.mxu0
        %v1647 = vadd.f32 %v1618, %v1646
        %1648 = vdwg.mxu0
        %vm1649 = vcmask 261120
        %v1650 = vsel %vm1649, %v1640, -inf
        %1651 = vmax.xlane.f32.xlu0 %v1650
        %v1652 = vpop.xlane.xlu0 %1651
        %v1653 = vsel %vm1649, %v1642, -inf
        %1654 = vmax.xlane.f32.xlu0 %v1653
        %v1655 = vpop.xlane.xlu0 %1654
        %v1656 = vsel %vm1649, %v1645, -inf
        %1657 = vmax.xlane.f32.xlu0 %v1656
        %v1658 = vpop.xlane.xlu0 %1657
        %v1659 = vsel %vm1649, %v1647, -inf
        %1660 = vmax.xlane.f32.xlu0 %v1659
        %v1661 = vpop.xlane.xlu0 %1660
        %v1662 = vsub.f32 %v1640, %v1652
        %v1663 = vsub.f32 %v1642, %v1655
        %v1664 = vsub.f32 %v1645, %v1658
        %v1665 = vsub.f32 %v1647, %v1661
        %v1666 = vmul.f32 %v1662, 1.442695
        %v1667 = vpow.pop %v1666
        %v1668 = vmul.f32 %v1663, 1.442695
        %v1669 = vpow.pop %v1668
        %v1670 = vmul.f32 %v1664, 1.442695
        %v1671 = vpow.pop %v1670
        %v1672 = vmul.f32 %v1665, 1.442695
        %v1673 = vpow.pop %v1672
        %v1674 = vsel %vm1649, %v1667, 0.0
        %1675 = vadd.xlane.f32.xlu0 %v1674
        %v1676 = vpop.xlane.xlu0 %1675
        %v1677 = vsel %vm1649, %v1669, 0.0
        %1678 = vadd.xlane.f32.xlu0 %v1677
        %v1679 = vpop.xlane.xlu0 %1678
        %v1680 = vsel %vm1649, %v1671, 0.0
        %1681 = vadd.xlane.f32.xlu0 %v1680
        %v1682 = vpop.xlane.xlu0 %1681
        %v1683 = vsel %vm1649, %v1673, 0.0
        %1684 = vadd.xlane.f32.xlu0 %v1683
        %v1685 = vpop.xlane.xlu0 %1684
        %v1686 = vrcp.pop %v1676
        %v1687 = vrcp.pop %v1679
        %v1688 = vrcp.pop %v1682
        %v1689 = vrcp.pop %v1685
        %v1690 = vmul.f32 %v1667, %v1686
        %v1691 = vmul.f32 %v1669, %v1687
        %v1692 = vmul.f32 %v1671, %v1688
        %v1693 = vmul.f32 %v1673, %v1689
        %v1694 = vsel %vm1623, %v1604, 0.0
        %v1695 = vsel %vm1623, %v1606, 0.0
        %v1696 = vsel %vm1623, %v1609, 0.0
        %v1697 = vsel %vm1623, %v1611, 0.0
        %v1698 = vpack.c.bf16 %v1695, %v1694
        %v1699 = vpack.c.bf16 %v1697, %v1696
        %v1700 = vpack.c.bf16 %v1691, %v1690
        %v1701 = vpack.c.bf16 %v1693, %v1692
        %vm1702 = vcmp.ge.s32.totalorder %v1620, 64
        %vm1703 = vcmp.lt.s32.totalorder %v1620, 128
        %vm1704 = vmand %vm1702, %vm1703
        %v1705 = vsel %vm1704, %v1566, 0.0
        %v1706 = vsel %vm1704, %v1568, 0.0
        %v1707 = vsel %vm1704, %v1571, 0.0
        %v1708 = vsel %vm1704, %v1573, 0.0
        %v1709 = vpack.c.bf16 %v1706, %v1705
        %v1710 = vpack.c.bf16 %v1708, %v1707
        %1711 = vmatpush.bf16.xpose.msra.mxu0 0
        %1712 = vmatpush.bf16.xpose.msra.mxu0 0
        %1713 = vmatpush.bf16.xpose.msra.mxu0 0
        %1714 = vmatpush.bf16.xpose.msra.mxu0 0
        %1715 = vmatpush.bf16.xpose.msra.mxu0 0
        %1716 = vmatpush.bf16.xpose.msra.mxu0 0
        %1717 = vmatpush.bf16.xpose.msra.mxu0 %v1614
        %1718 = vmatpush.bf16.xpose.msra.mxu0 %v1613
        %1719 = vmatmul.bf16.gmra.mxu0 %v1709
        %v1720 = vpop.f32.mrf.mxu0
        %v1721 = vadd.f32 %v1615, %v1720
        %v1722 = vpop.f32.mrf.mxu0
        %v1723 = vadd.f32 %v1616, %v1722
        %1724 = vmatmul.bf16.gmra.mxu0 %v1710
        %v1725 = vpop.f32.mrf.mxu0
        %v1726 = vadd.f32 %v1617, %v1725
        %v1727 = vpop.f32.mrf.mxu0
        %v1728 = vadd.f32 %v1618, %v1727
        %1729 = vdwg.mxu0
        %v1730 = vsel %vm1649, %v1721, -inf
        %1731 = vmax.xlane.f32.xlu0 %v1730
        %v1732 = vpop.xlane.xlu0 %1731
        %v1733 = vsel %vm1649, %v1723, -inf
        %1734 = vmax.xlane.f32.xlu0 %v1733
        %v1735 = vpop.xlane.xlu0 %1734
        %v1736 = vsel %vm1649, %v1726, -inf
        %1737 = vmax.xlane.f32.xlu0 %v1736
        %v1738 = vpop.xlane.xlu0 %1737
        %v1739 = vsel %vm1649, %v1728, -inf
        %1740 = vmax.xlane.f32.xlu0 %v1739
        %v1741 = vpop.xlane.xlu0 %1740
        %v1742 = vsub.f32 %v1721, %v1732
        %v1743 = vsub.f32 %v1723, %v1735
        %v1744 = vsub.f32 %v1726, %v1738
        %v1745 = vsub.f32 %v1728, %v1741
        %v1746 = vmul.f32 %v1742, 1.442695
        %v1747 = vpow.pop %v1746
        %v1748 = vmul.f32 %v1743, 1.442695
        %v1749 = vpow.pop %v1748
        %v1750 = vmul.f32 %v1744, 1.442695
        %v1751 = vpow.pop %v1750
        %v1752 = vmul.f32 %v1745, 1.442695
        %v1753 = vpow.pop %v1752
        %v1754 = vsel %vm1649, %v1747, 0.0
        %1755 = vadd.xlane.f32.xlu0 %v1754
        %v1756 = vpop.xlane.xlu0 %1755
        %v1757 = vsel %vm1649, %v1749, 0.0
        %1758 = vadd.xlane.f32.xlu0 %v1757
        %v1759 = vpop.xlane.xlu0 %1758
        %v1760 = vsel %vm1649, %v1751, 0.0
        %1761 = vadd.xlane.f32.xlu0 %v1760
        %v1762 = vpop.xlane.xlu0 %1761
        %v1763 = vsel %vm1649, %v1753, 0.0
        %1764 = vadd.xlane.f32.xlu0 %v1763
        %v1765 = vpop.xlane.xlu0 %1764
        %v1766 = vrcp.pop %v1756
        %v1767 = vrcp.pop %v1759
        %v1768 = vrcp.pop %v1762
        %v1769 = vrcp.pop %v1765
        %v1770 = vmul.f32 %v1747, %v1766
        %v1771 = vmul.f32 %v1749, %v1767
        %v1772 = vmul.f32 %v1751, %v1768
        %v1773 = vmul.f32 %v1753, %v1769
        %v1774 = vsel %vm1704, %v1604, 0.0
        %v1775 = vsel %vm1704, %v1606, 0.0
        %v1776 = vsel %vm1704, %v1609, 0.0
        %v1777 = vsel %vm1704, %v1611, 0.0
        %v1778 = vpack.c.bf16 %v1775, %v1774
        %v1779 = vpack.c.bf16 %v1777, %v1776
        %v1780 = vpack.c.bf16 %v1771, %v1770
        %v1781 = vpack.c.bf16 %v1773, %v1772
        %v1783 = vsel %vm1649, %v1780, 0
        %v1786 = vsel %vm1649, %v1781, 0
        %1788 = vmatpush.bf16.msra.mxu0 0
        %1789 = vmatpush.bf16.msra.mxu0 0
        %1790 = vmatpush.bf16.msra.mxu0 0
        %1791 = vmatpush.bf16.msra.mxu0 0
        %1792 = vmatpush.bf16.msra.mxu0 0
        %1793 = vmatpush.bf16.msra.mxu0 0
        %1794 = vmatpush.bf16.msra.mxu0 %v1779
        %1795 = vmatpush.bf16.msra.mxu0 %v1778
        %1796 = vmatmul.bf16.gmra.mxu0 %v1783
        %v1797 = vpop.f32.mrf.mxu0
        %v1798 = vadd.f32 0.0, %v1797
        %v1799 = vpop.f32.mrf.mxu0
        %v1800 = vadd.f32 0.0, %v1799
        %1801 = vmatmul.bf16.gmra.mxu0 %v1786
        %v1802 = vpop.f32.mrf.mxu0
        %v1803 = vadd.f32 0.0, %v1802
        %v1804 = vpop.f32.mrf.mxu0
        %v1805 = vadd.f32 0.0, %v1804
        %1806 = vdwg.mxu0
        %v1808 = vsel %vm1649, %v1700, 0
        %v1811 = vsel %vm1649, %v1701, 0
        %1813 = vmatpush.bf16.msra.mxu0 0
        %1814 = vmatpush.bf16.msra.mxu0 0
        %1815 = vmatpush.bf16.msra.mxu0 0
        %1816 = vmatpush.bf16.msra.mxu0 0
        %1817 = vmatpush.bf16.msra.mxu0 0
        %1818 = vmatpush.bf16.msra.mxu0 0
        %1819 = vmatpush.bf16.msra.mxu0 %v1699
        %1820 = vmatpush.bf16.msra.mxu0 %v1698
        %1821 = vmatmul.bf16.gmra.mxu0 %v1808
        %v1822 = vpop.f32.mrf.mxu0
        %v1823 = vadd.f32 %v1798, %v1822
        %v1824 = vpop.f32.mrf.mxu0
        %v1825 = vadd.f32 %v1800, %v1824
        %1826 = vmatmul.bf16.gmra.mxu0 %v1811
        %v1827 = vpop.f32.mrf.mxu0
        %v1828 = vadd.f32 %v1803, %v1827
        %v1829 = vpop.f32.mrf.mxu0
        %v1830 = vadd.f32 %v1805, %v1829
        %1831 = vdwg.mxu0
        %v1832 = vpack.c.bf16 %v1825, %v1823
        %v1833 = vpack.c.bf16 %v1830, %v1828
        %v1834 = vld [vmem:[%s988] sm:$0xf]
        %v1835 = vld [vmem:[%s988 + $0x4] sm:$0xf]
        %v1836 = vld [vmem:[%s988 + $0x8] sm:$0xf]
        %v1837 = vld [vmem:[%s988 + $0xc] sm:$0xf]
        %v1838 = vld [vmem:[%s988 + $0x10] sm:$0xf]
        %v1839 = vld [vmem:[%s988 + $0x14] sm:$0xf]
        %v1840 = vld [vmem:[%s988 + $0x18] sm:$0xf]
        %v1841 = vld [vmem:[%s988 + $0x1c] sm:$0xf]
        %v1842 = vld [vmem:[%s988 + $0x20] sm:$0xf]
        %v1843 = vld [vmem:[%s988 + $0x24] sm:$0xf]
        %v1844 = vld [vmem:[%s988 + $0x28] sm:$0xf]
        %v1845 = vld [vmem:[%s988 + $0x2c] sm:$0xf]
        %v1846 = vld [vmem:[%s988 + $0x30] sm:$0xf]
        %v1847 = vld [vmem:[%s988 + $0x34] sm:$0xf]
        %v1848 = vld [vmem:[%s988 + $0x38] sm:$0xf]
        %v1849 = vld [vmem:[%s988 + $0x3c] sm:$0xf]
        %v1866 = vunpack.c.l.b16 %v1834
        %v1867 = vunpack.c.l.b16 %v1835
        %v1868 = vunpack.c.l.b16 %v1836
        %v1869 = vunpack.c.l.b16 %v1837
        %v1870 = vunpack.c.l.b16 %v1838
        %v1871 = vunpack.c.l.b16 %v1839
        %v1872 = vunpack.c.l.b16 %v1840
        %v1873 = vunpack.c.l.b16 %v1841
        %v1874 = vunpack.c.l.b16 %v1842
        %v1875 = vunpack.c.l.b16 %v1843
        %v1876 = vunpack.c.l.b16 %v1844
        %v1877 = vunpack.c.l.b16 %v1845
        %v1878 = vunpack.c.l.b16 %v1846
        %v1879 = vunpack.c.l.b16 %v1847
        %v1880 = vunpack.c.l.b16 %v1848
        %v1881 = vunpack.c.l.b16 %v1849
        %v1882 = vpack.c.b16 %v1867, %v1866
        %v1883 = vpack.c.b16 %v1869, %v1868
        %v1884 = vpack.c.b16 %v1871, %v1870
        %v1885 = vpack.c.b16 %v1873, %v1872
        %v1886 = vpack.c.b16 %v1875, %v1874
        %v1887 = vpack.c.b16 %v1877, %v1876
        %v1888 = vpack.c.b16 %v1879, %v1878
        %v1889 = vpack.c.b16 %v1881, %v1880
        %1898 = vmatpush.bf16.msra.mxu0 %v1889
        %1899 = vmatpush.bf16.msra.mxu0 %v1888
        %1900 = vmatpush.bf16.msra.mxu0 %v1887
        %1901 = vmatpush.bf16.msra.mxu0 %v1886
        %1902 = vmatpush.bf16.msra.mxu0 %v1885
        %1903 = vmatpush.bf16.msra.mxu0 %v1884
        %1904 = vmatpush.bf16.msra.mxu0 %v1883
        %1905 = vmatpush.bf16.msra.mxu0 %v1882
        %1906 = vmatmul.bf16.gmra.mxu0 %v1832
        %v1907 = vpop.f32.mrf.mxu0
        %v1908 = vadd.f32 0.0, %v1907
        %v1909 = vpop.f32.mrf.mxu0
        %v1910 = vadd.f32 0.0, %v1909
        %1911 = vmatmul.bf16.gmra.mxu0 %v1833
        %v1912 = vpop.f32.mrf.mxu0
        %v1913 = vadd.f32 0.0, %v1912
        %v1914 = vpop.f32.mrf.mxu0
        %v1915 = vadd.f32 0.0, %v1914
        %1916 = vdwg.mxu0
        %v1917 = vadd.f32 %v1279, %v1908
        %v1918 = vadd.f32 %v1280, %v1910
        %v1919 = vadd.f32 %v1281, %v1913
        %v1920 = vadd.f32 %v1282, %v1915
        %v1921 = vld [vmem:[%s997] sm:$0x1]
        %v1923 = vperm.slane %v1921, 0
        %v1925 = vadd.f32 %v1917, %v1923
        %v1926 = vadd.f32 %v1918, %v1923
        %v1927 = vadd.f32 %v1919, %v1923
        %v1928 = vadd.f32 %v1920, %v1923
        %v1929 = vld [vmem:[%s1006] sm:$0x1]
        %v1930 = vld [vmem:[%s1015] sm:$0x1]
        %1931 = vadd.xlane.f32.xlu0 %v1925
        %v1932 = vpop.xlane.xlu0 %1931
        %1933 = vadd.xlane.f32.xlu0 %v1926
        %v1934 = vpop.xlane.xlu0 %1933
        %1935 = vadd.xlane.f32.xlu0 %v1927
        %v1936 = vpop.xlane.xlu0 %1935
        %1937 = vadd.xlane.f32.xlu0 %v1928
        %v1938 = vpop.xlane.xlu0 %1937
        %v1939 = vmul.f32 %v1932, %v1299
        %v1940 = vmul.f32 %v1934, %v1299
        %v1941 = vmul.f32 %v1936, %v1299
        %v1942 = vmul.f32 %v1938, %v1299
        %v1943 = vsub.f32 %v1925, %v1939
        %v1944 = vsub.f32 %v1926, %v1940
        %v1945 = vsub.f32 %v1927, %v1941
        %v1946 = vsub.f32 %v1928, %v1942
        %v1947 = vmul.f32 %v1943, %v1943
        %v1948 = vmul.f32 %v1944, %v1944
        %v1949 = vmul.f32 %v1945, %v1945
        %v1950 = vmul.f32 %v1946, %v1946
        %1951 = vadd.xlane.f32.xlu0 %v1947
        %v1952 = vpop.xlane.xlu0 %1951
        %1953 = vadd.xlane.f32.xlu0 %v1948
        %v1954 = vpop.xlane.xlu0 %1953
        %1955 = vadd.xlane.f32.xlu0 %v1949
        %v1956 = vpop.xlane.xlu0 %1955
        %1957 = vadd.xlane.f32.xlu0 %v1950
        %v1958 = vpop.xlane.xlu0 %1957
        %v1959 = vmul.f32 %v1952, %v1299
        %v1960 = vmul.f32 %v1954, %v1299
        %v1961 = vmul.f32 %v1956, %v1299
        %v1962 = vmul.f32 %v1958, %v1299
        %v1963 = vadd.f32 %v1959, 1e-05
        %v1964 = vadd.f32 %v1960, 1e-05
        %v1965 = vadd.f32 %v1961, 1e-05
        %v1966 = vadd.f32 %v1962, 1e-05
        %v1967 = vrsqrt.pop %v1963
        %v1968 = vmul.f32 %v1967, %v1963
        %v1969 = vmul.f32 %v1968, %v1967
        %v1970 = vmul.f32 0.5, %v1969
        %v1971 = vsub.f32 1.5, %v1970
        %v1972 = vmul.f32 %v1967, %v1971
        %vm1973 = vweird.f32 %v1963
        %vm1974 = vweird.f32 %v1967
        %vm1975 = vmor %vm1973, %vm1974
        %v1976 = vsel %vm1975, %v1967, %v1972
        %v1977 = vrsqrt.pop %v1964
        %v1978 = vmul.f32 %v1977, %v1964
        %v1979 = vmul.f32 %v1978, %v1977
        %v1980 = vmul.f32 0.5, %v1979
        %v1981 = vsub.f32 1.5, %v1980
        %v1982 = vmul.f32 %v1977, %v1981
        %vm1983 = vweird.f32 %v1964
        %vm1984 = vweird.f32 %v1977
        %vm1985 = vmor %vm1983, %vm1984
        %v1986 = vsel %vm1985, %v1977, %v1982
        %v1987 = vrsqrt.pop %v1965
        %v1988 = vmul.f32 %v1987, %v1965
        %v1989 = vmul.f32 %v1988, %v1987
        %v1990 = vmul.f32 0.5, %v1989
        %v1991 = vsub.f32 1.5, %v1990
        %v1992 = vmul.f32 %v1987, %v1991
        %vm1993 = vweird.f32 %v1965
        %vm1994 = vweird.f32 %v1987
        %vm1995 = vmor %vm1993, %vm1994
        %v1996 = vsel %vm1995, %v1987, %v1992
        %v1997 = vrsqrt.pop %v1966
        %v1998 = vmul.f32 %v1997, %v1966
        %v1999 = vmul.f32 %v1998, %v1997
        %v2000 = vmul.f32 0.5, %v1999
        %v2001 = vsub.f32 1.5, %v2000
        %v2002 = vmul.f32 %v1997, %v2001
        %vm2003 = vweird.f32 %v1966
        %vm2004 = vweird.f32 %v1997
        %vm2005 = vmor %vm2003, %vm2004
        %v2006 = vsel %vm2005, %v1997, %v2002
        %v2007 = vmul.f32 %v1943, %v1976
        %v2008 = vmul.f32 %v1944, %v1986
        %v2009 = vmul.f32 %v1945, %v1996
        %v2010 = vmul.f32 %v1946, %v2006
        %v2012 = vperm.slane %v1929, 0
        %v2014 = vmul.f32 %v2007, %v2012
        %v2015 = vmul.f32 %v2008, %v2012
        %v2016 = vmul.f32 %v2009, %v2012
        %v2017 = vmul.f32 %v2010, %v2012
        %v2019 = vperm.slane %v1930, 0
        %v2021 = vadd.f32 %v2014, %v2019
        %v2022 = vadd.f32 %v2015, %v2019
        %v2023 = vadd.f32 %v2016, %v2019
        %v2024 = vadd.f32 %v2017, %v2019
        %v2025 = vpack.c.bf16 %v2022, %v2021
        %v2026 = vpack.c.bf16 %v2024, %v2023
        %v2027 = vld [vmem:[%s1025] sm:$0xff]
        %v2028 = vld [vmem:[%s1025 + $0x8] sm:$0xff]
        %v2029 = vld [vmem:[%s1025 + $0x10] sm:$0xff]
        %v2030 = vld [vmem:[%s1025 + $0x18] sm:$0xff]
        %v2031 = vld [vmem:[%s1025 + $0x20] sm:$0xff]
        %v2032 = vld [vmem:[%s1025 + $0x28] sm:$0xff]
        %v2033 = vld [vmem:[%s1025 + $0x30] sm:$0xff]
        %v2034 = vld [vmem:[%s1025 + $0x38] sm:$0xff]
        %v2035 = vld [vmem:[%s1025 + $0x40] sm:$0xff]
        %v2036 = vld [vmem:[%s1025 + $0x48] sm:$0xff]
        %v2037 = vld [vmem:[%s1025 + $0x50] sm:$0xff]
        %v2038 = vld [vmem:[%s1025 + $0x58] sm:$0xff]
        %v2039 = vld [vmem:[%s1025 + $0x60] sm:$0xff]
        %v2040 = vld [vmem:[%s1025 + $0x68] sm:$0xff]
        %v2041 = vld [vmem:[%s1025 + $0x70] sm:$0xff]
        %v2042 = vld [vmem:[%s1025 + $0x78] sm:$0xff]
        %v2043 = vld [vmem:[%s1159] sm:$0x3]
        %v2045 = vperm.slane %v2043, 0
        %v2046 = vperm.slane %v2043, 1
        %v2065 = vunpack.c.l.b16 %v2027
        %v2066 = vunpack.c.h.b16 %v2027
        %v2067 = vunpack.c.l.b16 %v2028
        %v2068 = vunpack.c.h.b16 %v2028
        %v2069 = vunpack.c.l.b16 %v2029
        %v2070 = vunpack.c.h.b16 %v2029
        %v2071 = vunpack.c.l.b16 %v2030
        %v2072 = vunpack.c.h.b16 %v2030
        %v2073 = vunpack.c.l.b16 %v2031
        %v2074 = vunpack.c.h.b16 %v2031
        %v2075 = vunpack.c.l.b16 %v2032
        %v2076 = vunpack.c.h.b16 %v2032
        %v2077 = vunpack.c.l.b16 %v2033
        %v2078 = vunpack.c.h.b16 %v2033
        %v2079 = vunpack.c.l.b16 %v2034
        %v2080 = vunpack.c.h.b16 %v2034
        %v2081 = vunpack.c.l.b16 %v2035
        %v2082 = vunpack.c.h.b16 %v2035
        %v2083 = vunpack.c.l.b16 %v2036
        %v2084 = vunpack.c.h.b16 %v2036
        %v2085 = vunpack.c.l.b16 %v2037
        %v2086 = vunpack.c.h.b16 %v2037
        %v2087 = vunpack.c.l.b16 %v2038
        %v2088 = vunpack.c.h.b16 %v2038
        %v2089 = vunpack.c.l.b16 %v2039
        %v2090 = vunpack.c.h.b16 %v2039
        %v2091 = vunpack.c.l.b16 %v2040
        %v2092 = vunpack.c.h.b16 %v2040
        %v2093 = vunpack.c.l.b16 %v2041
        %v2094 = vunpack.c.h.b16 %v2041
        %v2095 = vunpack.c.l.b16 %v2042
        %v2096 = vunpack.c.h.b16 %v2042
        %v2097 = vpack.c.b16 %v2067, %v2065
        %v2098 = vpack.c.b16 %v2068, %v2066
        %v2099 = vpack.c.b16 %v2071, %v2069
        %v2100 = vpack.c.b16 %v2072, %v2070
        %v2101 = vpack.c.b16 %v2075, %v2073
        %v2102 = vpack.c.b16 %v2076, %v2074
        %v2103 = vpack.c.b16 %v2079, %v2077
        %v2104 = vpack.c.b16 %v2080, %v2078
        %v2105 = vpack.c.b16 %v2083, %v2081
        %v2106 = vpack.c.b16 %v2084, %v2082
        %v2107 = vpack.c.b16 %v2087, %v2085
        %v2108 = vpack.c.b16 %v2088, %v2086
        %v2109 = vpack.c.b16 %v2091, %v2089
        %v2110 = vpack.c.b16 %v2092, %v2090
        %v2111 = vpack.c.b16 %v2095, %v2093
        %v2112 = vpack.c.b16 %v2096, %v2094
        %2129 = vmatpush.bf16.msra.mxu0 %v2111
        %2130 = vmatpush.bf16.msra.mxu0 %v2109
        %2131 = vmatpush.bf16.msra.mxu0 %v2107
        %2132 = vmatpush.bf16.msra.mxu0 %v2105
        %2133 = vmatpush.bf16.msra.mxu0 %v2103
        %2134 = vmatpush.bf16.msra.mxu0 %v2101
        %2135 = vmatpush.bf16.msra.mxu0 %v2099
        %2136 = vmatpush.bf16.msra.mxu0 %v2097
        %2137 = vmatmul.bf16.gmra.mxu0 %v2025
        %v2138 = vpop.f32.mrf.mxu0
        %v2139 = vadd.f32 %v2045, %v2138
        %v2140 = vpop.f32.mrf.mxu0
        %v2141 = vadd.f32 %v2045, %v2140
        %2142 = vmatmul.bf16.gmra.mxu0 %v2026
        %v2143 = vpop.f32.mrf.mxu0
        %v2144 = vadd.f32 %v2045, %v2143
        %v2145 = vpop.f32.mrf.mxu0
        %v2146 = vadd.f32 %v2045, %v2145
        %2147 = vdwg.mxu0
        %2148 = vmatpush.bf16.msra.mxu0 %v2112
        %2149 = vmatpush.bf16.msra.mxu0 %v2110
        %2150 = vmatpush.bf16.msra.mxu0 %v2108
        %2151 = vmatpush.bf16.msra.mxu0 %v2106
        %2152 = vmatpush.bf16.msra.mxu0 %v2104
        %2153 = vmatpush.bf16.msra.mxu0 %v2102
        %2154 = vmatpush.bf16.msra.mxu0 %v2100
        %2155 = vmatpush.bf16.msra.mxu0 %v2098
        %2156 = vmatmul.bf16.gmra.mxu0 %v2025
        %v2157 = vpop.f32.mrf.mxu0
        %v2158 = vadd.f32 %v2046, %v2157
        %v2159 = vpop.f32.mrf.mxu0
        %v2160 = vadd.f32 %v2046, %v2159
        %2161 = vmatmul.bf16.gmra.mxu0 %v2026
        %v2162 = vpop.f32.mrf.mxu0
        %v2163 = vadd.f32 %v2046, %v2162
        %v2164 = vpop.f32.mrf.mxu0
        %v2165 = vadd.f32 %v2046, %v2164
        %2166 = vdwg.mxu0
        %v2167 = vmul.f32 %v2139, %v2139
        %v2168 = vmul.f32 %v2158, %v2158
        %v2169 = vmul.f32 %v2141, %v2141
        %v2170 = vmul.f32 %v2160, %v2160
        %v2171 = vmul.f32 %v2144, %v2144
        %v2172 = vmul.f32 %v2163, %v2163
        %v2173 = vmul.f32 %v2146, %v2146
        %v2174 = vmul.f32 %v2165, %v2165
        %v2175 = vmul.f32 %v2139, %v2167
        %v2176 = vmul.f32 %v2158, %v2168
        %v2177 = vmul.f32 %v2141, %v2169
        %v2178 = vmul.f32 %v2160, %v2170
        %v2179 = vmul.f32 %v2144, %v2171
        %v2180 = vmul.f32 %v2163, %v2172
        %v2181 = vmul.f32 %v2146, %v2173
        %v2182 = vmul.f32 %v2165, %v2174
        %v2183 = vmul.f32 %v2175, 0.044715
        %v2184 = vmul.f32 %v2176, 0.044715
        %v2185 = vmul.f32 %v2177, 0.044715
        %v2186 = vmul.f32 %v2178, 0.044715
        %v2187 = vmul.f32 %v2179, 0.044715
        %v2188 = vmul.f32 %v2180, 0.044715
        %v2189 = vmul.f32 %v2181, 0.044715
        %v2190 = vmul.f32 %v2182, 0.044715
        %v2191 = vadd.f32 %v2139, %v2183
        %v2192 = vadd.f32 %v2158, %v2184
        %v2193 = vadd.f32 %v2141, %v2185
        %v2194 = vadd.f32 %v2160, %v2186
        %v2195 = vadd.f32 %v2144, %v2187
        %v2196 = vadd.f32 %v2163, %v2188
        %v2197 = vadd.f32 %v2146, %v2189
        %v2198 = vadd.f32 %v2165, %v2190
        %v2199 = vmul.f32 %v2191, 0.7978846
        %v2200 = vmul.f32 %v2192, 0.7978846
        %v2201 = vmul.f32 %v2193, 0.7978846
        %v2202 = vmul.f32 %v2194, 0.7978846
        %v2203 = vmul.f32 %v2195, 0.7978846
        %v2204 = vmul.f32 %v2196, 0.7978846
        %v2205 = vmul.f32 %v2197, 0.7978846
        %v2206 = vmul.f32 %v2198, 0.7978846
        %v2207 = vtanh.pop %v2199
        %v2208 = vtanh.pop %v2200
        %v2209 = vtanh.pop %v2201
        %v2210 = vtanh.pop %v2202
        %v2211 = vtanh.pop %v2203
        %v2212 = vtanh.pop %v2204
        %v2213 = vtanh.pop %v2205
        %v2214 = vtanh.pop %v2206
        %v2215 = vadd.f32 %v2207, 1.0
        %v2216 = vadd.f32 %v2208, 1.0
        %v2217 = vadd.f32 %v2209, 1.0
        %v2218 = vadd.f32 %v2210, 1.0
        %v2219 = vadd.f32 %v2211, 1.0
        %v2220 = vadd.f32 %v2212, 1.0
        %v2221 = vadd.f32 %v2213, 1.0
        %v2222 = vadd.f32 %v2214, 1.0
        %v2223 = vmul.f32 %v2215, 0.5
        %v2224 = vmul.f32 %v2216, 0.5
        %v2225 = vmul.f32 %v2217, 0.5
        %v2226 = vmul.f32 %v2218, 0.5
        %v2227 = vmul.f32 %v2219, 0.5
        %v2228 = vmul.f32 %v2220, 0.5
        %v2229 = vmul.f32 %v2221, 0.5
        %v2230 = vmul.f32 %v2222, 0.5
        %v2231 = vmul.f32 %v2139, %v2223
        %v2232 = vmul.f32 %v2158, %v2224
        %v2233 = vmul.f32 %v2141, %v2225
        %v2234 = vmul.f32 %v2160, %v2226
        %v2235 = vmul.f32 %v2144, %v2227
        %v2236 = vmul.f32 %v2163, %v2228
        %v2237 = vmul.f32 %v2146, %v2229
        %v2238 = vmul.f32 %v2165, %v2230
        %v2239 = vpack.c.bf16 %v2233, %v2231
        %v2240 = vpack.c.bf16 %v2234, %v2232
        %v2241 = vpack.c.bf16 %v2237, %v2235
        %v2242 = vpack.c.bf16 %v2238, %v2236
        %v2243 = vld [vmem:[%s1035] sm:$0xf]
        %v2244 = vld [vmem:[%s1035 + $0x4] sm:$0xf]
        %v2245 = vld [vmem:[%s1035 + $0x8] sm:$0xf]
        %v2246 = vld [vmem:[%s1035 + $0xc] sm:$0xf]
        %v2247 = vld [vmem:[%s1035 + $0x10] sm:$0xf]
        %v2248 = vld [vmem:[%s1035 + $0x14] sm:$0xf]
        %v2249 = vld [vmem:[%s1035 + $0x18] sm:$0xf]
        %v2250 = vld [vmem:[%s1035 + $0x1c] sm:$0xf]
        %v2251 = vld [vmem:[%s1035 + $0x20] sm:$0xf]
        %v2252 = vld [vmem:[%s1035 + $0x24] sm:$0xf]
        %v2253 = vld [vmem:[%s1035 + $0x28] sm:$0xf]
        %v2254 = vld [vmem:[%s1035 + $0x2c] sm:$0xf]
        %v2255 = vld [vmem:[%s1035 + $0x30] sm:$0xf]
        %v2256 = vld [vmem:[%s1035 + $0x34] sm:$0xf]
        %v2257 = vld [vmem:[%s1035 + $0x38] sm:$0xf]
        %v2258 = vld [vmem:[%s1035 + $0x3c] sm:$0xf]
        %v2259 = vld [vmem:[%s1035 + $0x40] sm:$0xf]
        %v2260 = vld [vmem:[%s1035 + $0x44] sm:$0xf]
        %v2261 = vld [vmem:[%s1035 + $0x48] sm:$0xf]
        %v2262 = vld [vmem:[%s1035 + $0x4c] sm:$0xf]
        %v2263 = vld [vmem:[%s1035 + $0x50] sm:$0xf]
        %v2264 = vld [vmem:[%s1035 + $0x54] sm:$0xf]
        %v2265 = vld [vmem:[%s1035 + $0x58] sm:$0xf]
        %v2266 = vld [vmem:[%s1035 + $0x5c] sm:$0xf]
        %v2267 = vld [vmem:[%s1035 + $0x60] sm:$0xf]
        %v2268 = vld [vmem:[%s1035 + $0x64] sm:$0xf]
        %v2269 = vld [vmem:[%s1035 + $0x68] sm:$0xf]
        %v2270 = vld [vmem:[%s1035 + $0x6c] sm:$0xf]
        %v2271 = vld [vmem:[%s1035 + $0x70] sm:$0xf]
        %v2272 = vld [vmem:[%s1035 + $0x74] sm:$0xf]
        %v2273 = vld [vmem:[%s1035 + $0x78] sm:$0xf]
        %v2274 = vld [vmem:[%s1035 + $0x7c] sm:$0xf]
        %v2307 = vunpack.c.l.b16 %v2243
        %v2308 = vunpack.c.l.b16 %v2244
        %v2309 = vunpack.c.l.b16 %v2245
        %v2310 = vunpack.c.l.b16 %v2246
        %v2311 = vunpack.c.l.b16 %v2247
        %v2312 = vunpack.c.l.b16 %v2248
        %v2313 = vunpack.c.l.b16 %v2249
        %v2314 = vunpack.c.l.b16 %v2250
        %v2315 = vunpack.c.l.b16 %v2251
        %v2316 = vunpack.c.l.b16 %v2252
        %v2317 = vunpack.c.l.b16 %v2253
        %v2318 = vunpack.c.l.b16 %v2254
        %v2319 = vunpack.c.l.b16 %v2255
        %v2320 = vunpack.c.l.b16 %v2256
        %v2321 = vunpack.c.l.b16 %v2257
        %v2322 = vunpack.c.l.b16 %v2258
        %v2323 = vunpack.c.l.b16 %v2259
        %v2324 = vunpack.c.l.b16 %v2260
        %v2325 = vunpack.c.l.b16 %v2261
        %v2326 = vunpack.c.l.b16 %v2262
        %v2327 = vunpack.c.l.b16 %v2263
        %v2328 = vunpack.c.l.b16 %v2264
        %v2329 = vunpack.c.l.b16 %v2265
        %v2330 = vunpack.c.l.b16 %v2266
        %v2331 = vunpack.c.l.b16 %v2267
        %v2332 = vunpack.c.l.b16 %v2268
        %v2333 = vunpack.c.l.b16 %v2269
        %v2334 = vunpack.c.l.b16 %v2270
        %v2335 = vunpack.c.l.b16 %v2271
        %v2336 = vunpack.c.l.b16 %v2272
        %v2337 = vunpack.c.l.b16 %v2273
        %v2338 = vunpack.c.l.b16 %v2274
        %v2339 = vpack.c.b16 %v2308, %v2307
        %v2340 = vpack.c.b16 %v2310, %v2309
        %v2341 = vpack.c.b16 %v2312, %v2311
        %v2342 = vpack.c.b16 %v2314, %v2313
        %v2343 = vpack.c.b16 %v2316, %v2315
        %v2344 = vpack.c.b16 %v2318, %v2317
        %v2345 = vpack.c.b16 %v2320, %v2319
        %v2346 = vpack.c.b16 %v2322, %v2321
        %v2347 = vpack.c.b16 %v2324, %v2323
        %v2348 = vpack.c.b16 %v2326, %v2325
        %v2349 = vpack.c.b16 %v2328, %v2327
        %v2350 = vpack.c.b16 %v2330, %v2329
        %v2351 = vpack.c.b16 %v2332, %v2331
        %v2352 = vpack.c.b16 %v2334, %v2333
        %v2353 = vpack.c.b16 %v2336, %v2335
        %v2354 = vpack.c.b16 %v2338, %v2337
        %2371 = vmatpush.bf16.msra.mxu0 %v2346
        %2372 = vmatpush.bf16.msra.mxu0 %v2345
        %2373 = vmatpush.bf16.msra.mxu0 %v2344
        %2374 = vmatpush.bf16.msra.mxu0 %v2343
        %2375 = vmatpush.bf16.msra.mxu0 %v2342
        %2376 = vmatpush.bf16.msra.mxu0 %v2341
        %2377 = vmatpush.bf16.msra.mxu0 %v2340
        %2378 = vmatpush.bf16.msra.mxu0 %v2339
        %2379 = vmatmul.bf16.gmra.mxu0 %v2239
        %v2380 = vpop.f32.mrf.mxu0
        %v2381 = vadd.f32 0.0, %v2380
        %v2382 = vpop.f32.mrf.mxu0
        %v2383 = vadd.f32 0.0, %v2382
        %2384 = vmatmul.bf16.gmra.mxu0 %v2241
        %v2385 = vpop.f32.mrf.mxu0
        %v2386 = vadd.f32 0.0, %v2385
        %v2387 = vpop.f32.mrf.mxu0
        %v2388 = vadd.f32 0.0, %v2387
        %2389 = vdwg.mxu0
        %2390 = vmatpush.bf16.msra.mxu0 %v2354
        %2391 = vmatpush.bf16.msra.mxu0 %v2353
        %2392 = vmatpush.bf16.msra.mxu0 %v2352
        %2393 = vmatpush.bf16.msra.mxu0 %v2351
        %2394 = vmatpush.bf16.msra.mxu0 %v2350
        %2395 = vmatpush.bf16.msra.mxu0 %v2349
        %2396 = vmatpush.bf16.msra.mxu0 %v2348
        %2397 = vmatpush.bf16.msra.mxu0 %v2347
        %2398 = vmatmul.bf16.gmra.mxu0 %v2240
        %v2399 = vpop.f32.mrf.mxu0
        %v2400 = vadd.f32 %v2381, %v2399
        %v2401 = vpop.f32.mrf.mxu0
        %v2402 = vadd.f32 %v2383, %v2401
        %2403 = vmatmul.bf16.gmra.mxu0 %v2242
        %v2404 = vpop.f32.mrf.mxu0
        %v2405 = vadd.f32 %v2386, %v2404
        %v2406 = vpop.f32.mrf.mxu0
        %v2407 = vadd.f32 %v2388, %v2406
        %2408 = vdwg.mxu0
        %v2409 = vadd.f32 %v1925, %v2400
        %v2410 = vadd.f32 %v1926, %v2402
        %v2411 = vadd.f32 %v1927, %v2405
        %v2412 = vadd.f32 %v1928, %v2407
        %v2413 = vld [vmem:[%s1162] sm:$0x1]
        %v2415 = vperm.slane %v2413, 0
        %v2417 = vadd.f32 %v2409, %v2415
        %v2418 = vadd.f32 %v2410, %v2415
        %v2419 = vadd.f32 %v2411, %v2415
        %v2420 = vadd.f32 %v2412, %v2415
        %2421 = vst [vmem:[#allocation2] sm:$0xff] %v2417
        %2422 = vst [vmem:[#allocation2 + $0x8] sm:$0xff] %v2418
        %2423 = vst [vmem:[#allocation2 + $0x10] sm:$0xff] %v2419
        %2424 = vst [vmem:[#allocation2 + $0x18] sm:$0xff] %v2420
        %p2425 = scmp.eq.s32.totalorder %s39, 1
        // Predicated region
        $region181: #{tpu_custom_call.1} parent=115 // pred_check
          %p2426 = pneg %p2425
        $region182: #{tpu_custom_call.1} parent=115 // pred_check_branch
          %2428 = sbr.rel (%p2426) target = $region184
        $region183: #{tpu_custom_call.1} parent=115 // pred_region
          %v2429 = vld [vmem:[%s16] sm:$0x1]
          %v2430 = vld [vmem:[%s17] sm:$0x1]
          %2431 = vadd.xlane.f32.xlu0 %v2417
          %v2432 = vpop.xlane.xlu0 %2431
          %2433 = vadd.xlane.f32.xlu0 %v2418
          %v2434 = vpop.xlane.xlu0 %2433
          %2435 = vadd.xlane.f32.xlu0 %v2419
          %v2436 = vpop.xlane.xlu0 %2435
          %2437 = vadd.xlane.f32.xlu0 %v2420
          %v2438 = vpop.xlane.xlu0 %2437
          %v2439 = vmul.f32 %v2432, %v1299
          %v2440 = vmul.f32 %v2434, %v1299
          %v2441 = vmul.f32 %v2436, %v1299
          %v2442 = vmul.f32 %v2438, %v1299
          %v2443 = vsub.f32 %v2417, %v2439
          %v2444 = vsub.f32 %v2418, %v2440
          %v2445 = vsub.f32 %v2419, %v2441
          %v2446 = vsub.f32 %v2420, %v2442
          %v2447 = vmul.f32 %v2443, %v2443
          %v2448 = vmul.f32 %v2444, %v2444
          %v2449 = vmul.f32 %v2445, %v2445
          %v2450 = vmul.f32 %v2446, %v2446
          %2451 = vadd.xlane.f32.xlu0 %v2447
          %v2452 = vpop.xlane.xlu0 %2451
          %2453 = vadd.xlane.f32.xlu0 %v2448
          %v2454 = vpop.xlane.xlu0 %2453
          %2455 = vadd.xlane.f32.xlu0 %v2449
          %v2456 = vpop.xlane.xlu0 %2455
          %2457 = vadd.xlane.f32.xlu0 %v2450
          %v2458 = vpop.xlane.xlu0 %2457
          %v2459 = vmul.f32 %v2452, %v1299
          %v2460 = vmul.f32 %v2454, %v1299
          %v2461 = vmul.f32 %v2456, %v1299
          %v2462 = vmul.f32 %v2458, %v1299
          %v2463 = vadd.f32 %v2459, 1e-05
          %v2464 = vadd.f32 %v2460, 1e-05
          %v2465 = vadd.f32 %v2461, 1e-05
          %v2466 = vadd.f32 %v2462, 1e-05
          %v2467 = vrsqrt.pop %v2463
          %v2468 = vmul.f32 %v2467, %v2463
          %v2469 = vmul.f32 %v2468, %v2467
          %v2470 = vmul.f32 0.5, %v2469
          %v2471 = vsub.f32 1.5, %v2470
          %v2472 = vmul.f32 %v2467, %v2471
          %vm2473 = vweird.f32 %v2463
          %vm2474 = vweird.f32 %v2467
          %vm2475 = vmor %vm2473, %vm2474
          %v2476 = vsel %vm2475, %v2467, %v2472
          %v2477 = vrsqrt.pop %v2464
          %v2478 = vmul.f32 %v2477, %v2464
          %v2479 = vmul.f32 %v2478, %v2477
          %v2480 = vmul.f32 0.5, %v2479
          %v2481 = vsub.f32 1.5, %v2480
          %v2482 = vmul.f32 %v2477, %v2481
          %vm2483 = vweird.f32 %v2464
          %vm2484 = vweird.f32 %v2477
          %vm2485 = vmor %vm2483, %vm2484
          %v2486 = vsel %vm2485, %v2477, %v2482
          %v2487 = vrsqrt.pop %v2465
          %v2488 = vmul.f32 %v2487, %v2465
          %v2489 = vmul.f32 %v2488, %v2487
          %v2490 = vmul.f32 0.5, %v2489
          %v2491 = vsub.f32 1.5, %v2490
          %v2492 = vmul.f32 %v2487, %v2491
          %vm2493 = vweird.f32 %v2465
          %vm2494 = vweird.f32 %v2487
          %vm2495 = vmor %vm2493, %vm2494
          %v2496 = vsel %vm2495, %v2487, %v2492
          %v2497 = vrsqrt.pop %v2466
          %v2498 = vmul.f32 %v2497, %v2466
          %v2499 = vmul.f32 %v2498, %v2497
          %v2500 = vmul.f32 0.5, %v2499
          %v2501 = vsub.f32 1.5, %v2500
          %v2502 = vmul.f32 %v2497, %v2501
          %vm2503 = vweird.f32 %v2466
          %vm2504 = vweird.f32 %v2497
          %vm2505 = vmor %vm2503, %vm2504
          %v2506 = vsel %vm2505, %v2497, %v2502
          %v2507 = vmul.f32 %v2443, %v2476
          %v2508 = vmul.f32 %v2444, %v2486
          %v2509 = vmul.f32 %v2445, %v2496
          %v2510 = vmul.f32 %v2446, %v2506
          %v2512 = vperm.slane %v2429, 0
          %v2514 = vmul.f32 %v2507, %v2512
          %v2515 = vmul.f32 %v2508, %v2512
          %v2516 = vmul.f32 %v2509, %v2512
          %v2517 = vmul.f32 %v2510, %v2512
          %v2519 = vperm.slane %v2430, 0
          %v2521 = vadd.f32 %v2514, %v2519
          %v2522 = vadd.f32 %v2515, %v2519
          %v2523 = vadd.f32 %v2516, %v2519
          %v2524 = vadd.f32 %v2517, %v2519
          %v2525 = vadd.f32 %v2521, %v2522
          %v2526 = vadd.f32 %v2525, %v2523
          %v2527 = vadd.f32 %v2526, %v2524
          %v2528 = vrot.slane %v2527, 4
          %v2529 = vadd.f32 %v2527, %v2528
          %v2530 = vrot.slane %v2529, 2
          %v2531 = vadd.f32 %v2529, %v2530
          %v2532 = vrot.slane %v2531, 1
          %v2533 = vadd.f32 %v2531, %v2532
          %v2534 = vrcp.pop 32.0
          %v2535 = vmul.f32 32.0, %v2534
          %v2536 = vsub.f32 1.0, %v2535
          %v2537 = vmul.f32 %v2534, %v2536
          %v2538 = vadd.f32 %v2534, %v2537
          %vm2539 = vweird.f32 %v2534
          %v2540 = vsel %vm2539, %v2534, %v2538
          %v2541 = vmul.f32 %v2533, %v2540
          %v2542 = vsub.f32 %v2521, %v2541
          %v2543 = vsub.f32 %v2522, %v2541
          %v2544 = vsub.f32 %v2523, %v2541
          %v2545 = vsub.f32 %v2524, %v2541
          %v2546 = vmul.f32 %v2542, %v2542
          %v2547 = vmul.f32 %v2543, %v2543
          %v2548 = vmul.f32 %v2544, %v2544
          %v2549 = vmul.f32 %v2545, %v2545
          %v2550 = vadd.f32 %v2546, %v2547
          %v2551 = vadd.f32 %v2550, %v2548
          %v2552 = vadd.f32 %v2551, %v2549
          %v2553 = vrot.slane %v2552, 4
          %v2554 = vadd.f32 %v2552, %v2553
          %v2555 = vrot.slane %v2554, 2
          %v2556 = vadd.f32 %v2554, %v2555
          %v2557 = vrot.slane %v2556, 1
          %v2558 = vadd.f32 %v2556, %v2557
          %v2559 = vmul.f32 %v2558, %v2540
          %v2560 = vadd.f32 %v2559, 1e-05
          %v2561 = vrsqrt.pop %v2560
          %v2562 = vmul.f32 %v2561, %v2560
          %v2563 = vmul.f32 %v2562, %v2561
          %v2564 = vmul.f32 0.5, %v2563
          %v2565 = vsub.f32 1.5, %v2564
          %v2566 = vmul.f32 %v2561, %v2565
          %vm2567 = vweird.f32 %v2560
          %vm2568 = vweird.f32 %v2561
          %vm2569 = vmor %vm2567, %vm2568
          %v2570 = vsel %vm2569, %v2561, %v2566
          %v2571 = vmul.f32 %v2542, %v2570
          %v2572 = vmul.f32 %v2543, %v2570
          %v2573 = vmul.f32 %v2544, %v2570
          %v2574 = vmul.f32 %v2545, %v2570
          %v2575 = vld [vmem:[%s18] sm:$0x1]
          %v2577 = vperm.slane %v2575, 0
          %v2579 = vmul.f32 %v2571, %v2577
          %v2580 = vmul.f32 %v2572, %v2577
          %v2581 = vmul.f32 %v2573, %v2577
          %v2582 = vmul.f32 %v2574, %v2577
          %v2583 = vld [vmem:[%s19] sm:$0x1]
          %v2585 = vperm.slane %v2583, 0
          %v2587 = vadd.f32 %v2579, %v2585
          %v2588 = vadd.f32 %v2580, %v2585
          %v2589 = vadd.f32 %v2581, %v2585
          %v2590 = vadd.f32 %v2582, %v2585
          %v2591 = vlaneseq
          %v2592 = vshrl.u32 %v2591, 7
          %v2593 = vadd.s32 %v2592, 8
          %v2594 = vadd.s32 %v2592, 16
          %v2595 = vadd.s32 %v2592, 24
          %vm2596 = vcmp.lt.s32.totalorder %v2592, 0
          %v2597 = vsub.s32 0, %v2592
          %v2598 = vsel %vm2596, %v2597, %v2592
          %v2599 = vshrl.u32 %v2598, 4
          %v2600 = vand.u32 %v2598, 15
          %v2601 = vsub.s32 0, %v2600
          %v2602 = vsel %vm2596, %v2601, %v2600
          %vm2603 = vcmp.lt.s32.totalorder %v2593, 0
          %v2604 = vsub.s32 0, %v2593
          %v2605 = vsel %vm2603, %v2604, %v2593
          %v2606 = vshrl.u32 %v2605, 4
          %v2607 = vand.u32 %v2605, 15
          %v2608 = vsub.s32 0, %v2607
          %v2609 = vsel %vm2603, %v2608, %v2607
          %vm2610 = vcmp.lt.s32.totalorder %v2594, 0
          %v2611 = vsub.s32 0, %v2594
          %v2612 = vsel %vm2610, %v2611, %v2594
          %v2613 = vshrl.u32 %v2612, 4
          %v2614 = vand.u32 %v2612, 15
          %v2615 = vsub.s32 0, %v2614
          %v2616 = vsel %vm2610, %v2615, %v2614
          %vm2617 = vcmp.lt.s32.totalorder %v2595, 0
          %v2618 = vsub.s32 0, %v2595
          %v2619 = vsel %vm2617, %v2618, %v2595
          %v2620 = vshrl.u32 %v2619, 4
          %v2621 = vand.u32 %v2619, 15
          %v2622 = vsub.s32 0, %v2621
          %v2623 = vsel %vm2617, %v2622, %v2621
          %vm2624 = vcmp.ne.s32.totalorder %v2602, 0
          %vm2625 = vcmp.ne.s32.totalorder %v2609, 0
          %vm2626 = vcmp.ne.s32.totalorder %v2616, 0
          %vm2627 = vcmp.ne.s32.totalorder %v2623, 0
          %vm2628 = vcmp.lt.s32.totalorder %v2602, 0
          %vm2629 = vcmp.lt.s32.totalorder %v2609, 0
          %vm2630 = vcmp.lt.s32.totalorder %v2616, 0
          %vm2631 = vcmp.lt.s32.totalorder %v2623, 0
          %vm2632 = vmand %vm2628, %vm2624
          %vm2633 = vmand %vm2629, %vm2625
          %vm2634 = vmand %vm2630, %vm2626
          %vm2635 = vmand %vm2631, %vm2627
          %v2636 = vadd.s32 %v2602, 16
          %v2637 = vadd.s32 %v2609, 16
          %v2638 = vadd.s32 %v2616, 16
          %v2639 = vadd.s32 %v2623, 16
          %v2640 = vsel %vm2632, %v2636, %v2602
          %v2641 = vsel %vm2633, %v2637, %v2609
          %v2642 = vsel %vm2634, %v2638, %v2616
          %v2643 = vsel %vm2635, %v2639, %v2623
          %v2644 = vpack.c.bf16 %v2588, %v2587
          %v2645 = vpack.c.bf16 %v2590, %v2589
          %s2646 = scalar_lea.vmem [#allocation20], 128
          %v2647 = vld [vmem:[%s2646] sm:$0xf]
          %v2648 = vld [vmem:[%s2646 + $0x4] sm:$0xf]
          %v2649 = vld [vmem:[%s2646 + $0x8] sm:$0xf]
          %v2650 = vld [vmem:[%s2646 + $0xc] sm:$0xf]
          %v2651 = vld [vmem:[%s2646 + $0x10] sm:$0xf]
          %v2652 = vld [vmem:[%s2646 + $0x14] sm:$0xf]
          %v2653 = vld [vmem:[%s2646 + $0x18] sm:$0xf]
          %v2654 = vld [vmem:[%s2646 + $0x1c] sm:$0xf]
          %v2655 = vld [vmem:[%s2646 + $0x20] sm:$0xf]
          %v2656 = vld [vmem:[%s2646 + $0x24] sm:$0xf]
          %v2657 = vld [vmem:[%s2646 + $0x28] sm:$0xf]
          %v2658 = vld [vmem:[%s2646 + $0x2c] sm:$0xf]
          %v2659 = vld [vmem:[%s2646 + $0x30] sm:$0xf]
          %v2660 = vld [vmem:[%s2646 + $0x34] sm:$0xf]
          %v2661 = vld [vmem:[%s2646 + $0x38] sm:$0xf]
          %v2662 = vld [vmem:[%s2646 + $0x3c] sm:$0xf]
          %v2663 = vld [vmem:[%s21] sm:$0x1]
          %v2665 = vperm.slane %v2663, 0
          %v2683 = vunpack.c.l.b16 %v2647
          %v2684 = vunpack.c.l.b16 %v2648
          %v2685 = vunpack.c.l.b16 %v2649
          %v2686 = vunpack.c.l.b16 %v2650
          %v2687 = vunpack.c.l.b16 %v2651
          %v2688 = vunpack.c.l.b16 %v2652
          %v2689 = vunpack.c.l.b16 %v2653
          %v2690 = vunpack.c.l.b16 %v2654
          %v2691 = vunpack.c.l.b16 %v2655
          %v2692 = vunpack.c.l.b16 %v2656
          %v2693 = vunpack.c.l.b16 %v2657
          %v2694 = vunpack.c.l.b16 %v2658
          %v2695 = vunpack.c.l.b16 %v2659
          %v2696 = vunpack.c.l.b16 %v2660
          %v2697 = vunpack.c.l.b16 %v2661
          %v2698 = vunpack.c.l.b16 %v2662
          %v2699 = vpack.c.b16 %v2684, %v2683
          %v2700 = vpack.c.b16 %v2686, %v2685
          %v2701 = vpack.c.b16 %v2688, %v2687
          %v2702 = vpack.c.b16 %v2690, %v2689
          %v2703 = vpack.c.b16 %v2692, %v2691
          %v2704 = vpack.c.b16 %v2694, %v2693
          %v2705 = vpack.c.b16 %v2696, %v2695
          %v2706 = vpack.c.b16 %v2698, %v2697
          %2715 = vmatpush.bf16.msra.mxu0 %v2706
          %2716 = vmatpush.bf16.msra.mxu0 %v2705
          %2717 = vmatpush.bf16.msra.mxu0 %v2704
          %2718 = vmatpush.bf16.msra.mxu0 %v2703
          %2719 = vmatpush.bf16.msra.mxu0 %v2702
          %2720 = vmatpush.bf16.msra.mxu0 %v2701
          %2721 = vmatpush.bf16.msra.mxu0 %v2700
          %2722 = vmatpush.bf16.msra.mxu0 %v2699
          %2723 = vmatmul.bf16.gmra.mxu0 %v2644
          %v2724 = vpop.f32.mrf.mxu0
          %v2725 = vadd.f32 %v2665, %v2724
          %v2726 = vpop.f32.mrf.mxu0
          %v2727 = vadd.f32 %v2665, %v2726
          %2728 = vmatmul.bf16.gmra.mxu0 %v2645
          %v2729 = vpop.f32.mrf.mxu0
          %v2730 = vadd.f32 %v2665, %v2729
          %v2731 = vpop.f32.mrf.mxu0
          %v2732 = vadd.f32 %v2665, %v2731
          %2733 = vdwg.mxu0
          %v2734 = vrot.slane %v2587, 6
          %v2735 = vrot.slane %v2588, 6
          %v2736 = vrot.slane %v2589, 6
          %v2737 = vrot.slane %v2590, 6
          %vm2738 = vcmp.lt.s32.totalorder %v2592, 2
          %v2739 = vsel %vm2738, %v2736, %v2737
          %v2740 = vsel %vm2738, %v2735, %v2736
          %v2741 = vsel %vm2738, %v2734, %v2735
          %v2742 = vsel %vm2738, %v2737, %v2734
          %v2743 = vadd.s32 %v2640, 4294967294
          %v2744 = vadd.s32 %v2641, 4294967294
          %v2745 = vadd.s32 %v2642, 4294967294
          %v2746 = vadd.s32 %v2643, 4294967294
          %vm2747 = vcmp.ge.s32.totalorder %v2743, 0
          %vm2748 = vcmp.ge.s32.totalorder %v2744, 0
          %vm2749 = vcmp.ge.s32.totalorder %v2745, 0
          %vm2750 = vcmp.ge.s32.totalorder %v2746, 0
          %vm2751 = vcmp.lt.s32.totalorder %v2743, 16
          %vm2752 = vcmp.lt.s32.totalorder %v2744, 16
          %vm2753 = vcmp.lt.s32.totalorder %v2745, 16
          %vm2754 = vcmp.lt.s32.totalorder %v2746, 16
          %vm2755 = vmand %vm2747, %vm2751
          %vm2756 = vmand %vm2748, %vm2752
          %vm2757 = vmand %vm2749, %vm2753
          %vm2758 = vmand %vm2750, %vm2754
          %v2759 = vsel %vm2755, 1, 0
          %v2760 = vsel %vm2756, 1, 0
          %v2761 = vsel %vm2757, 1, 0
          %v2762 = vsel %vm2758, 1, 0
          %vm2763 = vcmp.eq.s32.totalorder %v2759, 1
          %vm2764 = vcmp.eq.s32.totalorder %v2760, 1
          %vm2765 = vcmp.eq.s32.totalorder %v2761, 1
          %vm2766 = vcmp.eq.s32.totalorder %v2762, 1
          %v2767 = vsel %vm2763, %v2742, 0.0
          %v2768 = vsel %vm2764, %v2741, 0.0
          %v2769 = vsel %vm2765, %v2740, 0.0
          %v2770 = vsel %vm2766, %v2739, 0.0
          %v2771 = vpack.c.bf16 %v2768, %v2767
          %v2772 = vpack.c.bf16 %v2770, %v2769
          %v2773 = vld [vmem:[#allocation20] sm:$0xf]
          %v2774 = vld [vmem:[#allocation20 + $0x4] sm:$0xf]
          %v2775 = vld [vmem:[#allocation20 + $0x8] sm:$0xf]
          %v2776 = vld [vmem:[#allocation20 + $0xc] sm:$0xf]
          %v2777 = vld [vmem:[#allocation20 + $0x10] sm:$0xf]
          %v2778 = vld [vmem:[#allocation20 + $0x14] sm:$0xf]
          %v2779 = vld [vmem:[#allocation20 + $0x18] sm:$0xf]
          %v2780 = vld [vmem:[#allocation20 + $0x1c] sm:$0xf]
          %v2781 = vld [vmem:[#allocation20 + $0x20] sm:$0xf]
          %v2782 = vld [vmem:[#allocation20 + $0x24] sm:$0xf]
          %v2783 = vld [vmem:[#allocation20 + $0x28] sm:$0xf]
          %v2784 = vld [vmem:[#allocation20 + $0x2c] sm:$0xf]
          %v2785 = vld [vmem:[#allocation20 + $0x30] sm:$0xf]
          %v2786 = vld [vmem:[#allocation20 + $0x34] sm:$0xf]
          %v2787 = vld [vmem:[#allocation20 + $0x38] sm:$0xf]
          %v2788 = vld [vmem:[#allocation20 + $0x3c] sm:$0xf]
          %v2805 = vunpack.c.l.b16 %v2773
          %v2806 = vunpack.c.l.b16 %v2774
          %v2807 = vunpack.c.l.b16 %v2775
          %v2808 = vunpack.c.l.b16 %v2776
          %v2809 = vunpack.c.l.b16 %v2777
          %v2810 = vunpack.c.l.b16 %v2778
          %v2811 = vunpack.c.l.b16 %v2779
          %v2812 = vunpack.c.l.b16 %v2780
          %v2813 = vunpack.c.l.b16 %v2781
          %v2814 = vunpack.c.l.b16 %v2782
          %v2815 = vunpack.c.l.b16 %v2783
          %v2816 = vunpack.c.l.b16 %v2784
          %v2817 = vunpack.c.l.b16 %v2785
          %v2818 = vunpack.c.l.b16 %v2786
          %v2819 = vunpack.c.l.b16 %v2787
          %v2820 = vunpack.c.l.b16 %v2788
          %v2821 = vpack.c.b16 %v2806, %v2805
          %v2822 = vpack.c.b16 %v2808, %v2807
          %v2823 = vpack.c.b16 %v2810, %v2809
          %v2824 = vpack.c.b16 %v2812, %v2811
          %v2825 = vpack.c.b16 %v2814, %v2813
          %v2826 = vpack.c.b16 %v2816, %v2815
          %v2827 = vpack.c.b16 %v2818, %v2817
          %v2828 = vpack.c.b16 %v2820, %v2819
          %2837 = vmatpush.bf16.msra.mxu0 %v2828
          %2838 = vmatpush.bf16.msra.mxu0 %v2827
          %2839 = vmatpush.bf16.msra.mxu0 %v2826
          %2840 = vmatpush.bf16.msra.mxu0 %v2825
          %2841 = vmatpush.bf16.msra.mxu0 %v2824
          %2842 = vmatpush.bf16.msra.mxu0 %v2823
          %2843 = vmatpush.bf16.msra.mxu0 %v2822
          %2844 = vmatpush.bf16.msra.mxu0 %v2821
          %2845 = vmatmul.bf16.gmra.mxu0 %v2771
          %v2846 = vpop.f32.mrf.mxu0
          %v2847 = vadd.f32 0.0, %v2846
          %v2848 = vpop.f32.mrf.mxu0
          %v2849 = vadd.f32 0.0, %v2848
          %2850 = vmatmul.bf16.gmra.mxu0 %v2772
          %v2851 = vpop.f32.mrf.mxu0
          %v2852 = vadd.f32 0.0, %v2851
          %v2853 = vpop.f32.mrf.mxu0
          %v2854 = vadd.f32 0.0, %v2853
          %2855 = vdwg.mxu0
          %v2856 = vadd.f32 %v2725, %v2847
          %v2857 = vadd.f32 %v2727, %v2849
          %v2858 = vadd.f32 %v2730, %v2852
          %v2859 = vadd.f32 %v2732, %v2854
          %v2860 = vrot.slane %v2587, 7
          %v2861 = vrot.slane %v2588, 7
          %v2862 = vrot.slane %v2589, 7
          %v2863 = vrot.slane %v2590, 7
          %vm2864 = vcmp.lt.s32.totalorder %v2592, 1
          %v2865 = vsel %vm2864, %v2862, %v2863
          %v2866 = vsel %vm2864, %v2861, %v2862
          %v2867 = vsel %vm2864, %v2860, %v2861
          %v2868 = vsel %vm2864, %v2863, %v2860
          %v2869 = vadd.s32 %v2640, 4294967295
          %v2870 = vadd.s32 %v2641, 4294967295
          %v2871 = vadd.s32 %v2642, 4294967295
          %v2872 = vadd.s32 %v2643, 4294967295
          %vm2873 = vcmp.ge.s32.totalorder %v2869, 0
          %vm2874 = vcmp.ge.s32.totalorder %v2870, 0
          %vm2875 = vcmp.ge.s32.totalorder %v2871, 0
          %vm2876 = vcmp.ge.s32.totalorder %v2872, 0
          %vm2877 = vcmp.lt.s32.totalorder %v2869, 16
          %vm2878 = vcmp.lt.s32.totalorder %v2870, 16
          %vm2879 = vcmp.lt.s32.totalorder %v2871, 16
          %vm2880 = vcmp.lt.s32.totalorder %v2872, 16
          %vm2881 = vmand %vm2873, %vm2877
          %vm2882 = vmand %vm2874, %vm2878
          %vm2883 = vmand %vm2875, %vm2879
          %vm2884 = vmand %vm2876, %vm2880
          %v2885 = vsel %vm2881, 1, 0
          %v2886 = vsel %vm2882, 1, 0
          %v2887 = vsel %vm2883, 1, 0
          %v2888 = vsel %vm2884, 1, 0
          %vm2889 = vcmp.eq.s32.totalorder %v2885, 1
          %vm2890 = vcmp.eq.s32.totalorder %v2886, 1
          %vm2891 = vcmp.eq.s32.totalorder %v2887, 1
          %vm2892 = vcmp.eq.s32.totalorder %v2888, 1
          %v2893 = vsel %vm2889, %v2868, 0.0
          %v2894 = vsel %vm2890, %v2867, 0.0
          %v2895 = vsel %vm2891, %v2866, 0.0
          %v2896 = vsel %vm2892, %v2865, 0.0
          %v2897 = vpack.c.bf16 %v2894, %v2893
          %v2898 = vpack.c.bf16 %v2896, %v2895
          %s2899 = scalar_lea.vmem [#allocation20], 64
          %v2900 = vld [vmem:[%s2899] sm:$0xf]
          %v2901 = vld [vmem:[%s2899 + $0x4] sm:$0xf]
          %v2902 = vld [vmem:[%s2899 + $0x8] sm:$0xf]
          %v2903 = vld [vmem:[%s2899 + $0xc] sm:$0xf]
          %v2904 = vld [vmem:[%s2899 + $0x10] sm:$0xf]
          %v2905 = vld [vmem:[%s2899 + $0x14] sm:$0xf]
          %v2906 = vld [vmem:[%s2899 + $0x18] sm:$0xf]
          %v2907 = vld [vmem:[%s2899 + $0x1c] sm:$0xf]
          %v2908 = vld [vmem:[%s2899 + $0x20] sm:$0xf]
          %v2909 = vld [vmem:[%s2899 + $0x24] sm:$0xf]
          %v2910 = vld [vmem:[%s2899 + $0x28] sm:$0xf]
          %v2911 = vld [vmem:[%s2899 + $0x2c] sm:$0xf]
          %v2912 = vld [vmem:[%s2899 + $0x30] sm:$0xf]
          %v2913 = vld [vmem:[%s2899 + $0x34] sm:$0xf]
          %v2914 = vld [vmem:[%s2899 + $0x38] sm:$0xf]
          %v2915 = vld [vmem:[%s2899 + $0x3c] sm:$0xf]
          %v2932 = vunpack.c.l.b16 %v2900
          %v2933 = vunpack.c.l.b16 %v2901
          %v2934 = vunpack.c.l.b16 %v2902
          %v2935 = vunpack.c.l.b16 %v2903
          %v2936 = vunpack.c.l.b16 %v2904
          %v2937 = vunpack.c.l.b16 %v2905
          %v2938 = vunpack.c.l.b16 %v2906
          %v2939 = vunpack.c.l.b16 %v2907
          %v2940 = vunpack.c.l.b16 %v2908
          %v2941 = vunpack.c.l.b16 %v2909
          %v2942 = vunpack.c.l.b16 %v2910
          %v2943 = vunpack.c.l.b16 %v2911
          %v2944 = vunpack.c.l.b16 %v2912
          %v2945 = vunpack.c.l.b16 %v2913
          %v2946 = vunpack.c.l.b16 %v2914
          %v2947 = vunpack.c.l.b16 %v2915
          %v2948 = vpack.c.b16 %v2933, %v2932
          %v2949 = vpack.c.b16 %v2935, %v2934
          %v2950 = vpack.c.b16 %v2937, %v2936
          %v2951 = vpack.c.b16 %v2939, %v2938
          %v2952 = vpack.c.b16 %v2941, %v2940
          %v2953 = vpack.c.b16 %v2943, %v2942
          %v2954 = vpack.c.b16 %v2945, %v2944
          %v2955 = vpack.c.b16 %v2947, %v2946
          %2964 = vmatpush.bf16.msra.mxu0 %v2955
          %2965 = vmatpush.bf16.msra.mxu0 %v2954
          %2966 = vmatpush.bf16.msra.mxu0 %v2953
          %2967 = vmatpush.bf16.msra.mxu0 %v2952
          %2968 = vmatpush.bf16.msra.mxu0 %v2951
          %2969 = vmatpush.bf16.msra.mxu0 %v2950
          %2970 = vmatpush.bf16.msra.mxu0 %v2949
          %2971 = vmatpush.bf16.msra.mxu0 %v2948
          %2972 = vmatmul.bf16.gmra.mxu0 %v2897
          %v2973 = vpop.f32.mrf.mxu0
          %v2974 = vadd.f32 0.0, %v2973
          %v2975 = vpop.f32.mrf.mxu0
          %v2976 = vadd.f32 0.0, %v2975
          %2977 = vmatmul.bf16.gmra.mxu0 %v2898
          %v2978 = vpop.f32.mrf.mxu0
          %v2979 = vadd.f32 0.0, %v2978
          %v2980 = vpop.f32.mrf.mxu0
          %v2981 = vadd.f32 0.0, %v2980
          %2982 = vdwg.mxu0
          %v2983 = vadd.f32 %v2856, %v2974
          %v2984 = vadd.f32 %v2857, %v2976
          %v2985 = vadd.f32 %v2858, %v2979
          %v2986 = vadd.f32 %v2859, %v2981
          %v2987 = vrot.slane %v2587, 1
          %v2988 = vrot.slane %v2588, 1
          %v2989 = vrot.slane %v2589, 1
          %v2990 = vrot.slane %v2590, 1
          %vm2991 = vcmp.lt.s32.totalorder %v2592, 7
          %v2992 = vsel %vm2991, %v2989, %v2990
          %v2993 = vsel %vm2991, %v2988, %v2989
          %v2994 = vsel %vm2991, %v2987, %v2988
          %v2995 = vsel %vm2991, %v2990, %v2987
          %v2996 = vadd.s32 %v2640, 1
          %v2997 = vadd.s32 %v2641, 1
          %v2998 = vadd.s32 %v2642, 1
          %v2999 = vadd.s32 %v2643, 1
          %vm3000 = vcmp.ge.s32.totalorder %v2996, 0
          %vm3001 = vcmp.ge.s32.totalorder %v2997, 0
          %vm3002 = vcmp.ge.s32.totalorder %v2998, 0
          %vm3003 = vcmp.ge.s32.totalorder %v2999, 0
          %vm3004 = vcmp.lt.s32.totalorder %v2996, 16
          %vm3005 = vcmp.lt.s32.totalorder %v2997, 16
          %vm3006 = vcmp.lt.s32.totalorder %v2998, 16
          %vm3007 = vcmp.lt.s32.totalorder %v2999, 16
          %vm3008 = vmand %vm3000, %vm3004
          %vm3009 = vmand %vm3001, %vm3005
          %vm3010 = vmand %vm3002, %vm3006
          %vm3011 = vmand %vm3003, %vm3007
          %v3012 = vsel %vm3008, 1, 0
          %v3013 = vsel %vm3009, 1, 0
          %v3014 = vsel %vm3010, 1, 0
          %v3015 = vsel %vm3011, 1, 0
          %vm3016 = vcmp.eq.s32.totalorder %v3012, 1
          %vm3017 = vcmp.eq.s32.totalorder %v3013, 1
          %vm3018 = vcmp.eq.s32.totalorder %v3014, 1
          %vm3019 = vcmp.eq.s32.totalorder %v3015, 1
          %v3020 = vsel %vm3016, %v2994, 0.0
          %v3021 = vsel %vm3017, %v2993, 0.0
          %v3022 = vsel %vm3018, %v2992, 0.0
          %v3023 = vsel %vm3019, %v2995, 0.0
          %v3024 = vpack.c.bf16 %v3021, %v3020
          %v3025 = vpack.c.bf16 %v3023, %v3022
          %s3026 = scalar_lea.vmem [#allocation20], 192
          %v3027 = vld [vmem:[%s3026] sm:$0xf]
          %v3028 = vld [vmem:[%s3026 + $0x4] sm:$0xf]
          %v3029 = vld [vmem:[%s3026 + $0x8] sm:$0xf]
          %v3030 = vld [vmem:[%s3026 + $0xc] sm:$0xf]
          %v3031 = vld [vmem:[%s3026 + $0x10] sm:$0xf]
          %v3032 = vld [vmem:[%s3026 + $0x14] sm:$0xf]
          %v3033 = vld [vmem:[%s3026 + $0x18] sm:$0xf]
          %v3034 = vld [vmem:[%s3026 + $0x1c] sm:$0xf]
          %v3035 = vld [vmem:[%s3026 + $0x20] sm:$0xf]
          %v3036 = vld [vmem:[%s3026 + $0x24] sm:$0xf]
          %v3037 = vld [vmem:[%s3026 + $0x28] sm:$0xf]
          %v3038 = vld [vmem:[%s3026 + $0x2c] sm:$0xf]
          %v3039 = vld [vmem:[%s3026 + $0x30] sm:$0xf]
          %v3040 = vld [vmem:[%s3026 + $0x34] sm:$0xf]
          %v3041 = vld [vmem:[%s3026 + $0x38] sm:$0xf]
          %v3042 = vld [vmem:[%s3026 + $0x3c] sm:$0xf]
          %v3059 = vunpack.c.l.b16 %v3027
          %v3060 = vunpack.c.l.b16 %v3028
          %v3061 = vunpack.c.l.b16 %v3029
          %v3062 = vunpack.c.l.b16 %v3030
          %v3063 = vunpack.c.l.b16 %v3031
          %v3064 = vunpack.c.l.b16 %v3032
          %v3065 = vunpack.c.l.b16 %v3033
          %v3066 = vunpack.c.l.b16 %v3034
          %v3067 = vunpack.c.l.b16 %v3035
          %v3068 = vunpack.c.l.b16 %v3036
          %v3069 = vunpack.c.l.b16 %v3037
          %v3070 = vunpack.c.l.b16 %v3038
          %v3071 = vunpack.c.l.b16 %v3039
          %v3072 = vunpack.c.l.b16 %v3040
          %v3073 = vunpack.c.l.b16 %v3041
          %v3074 = vunpack.c.l.b16 %v3042
          %v3075 = vpack.c.b16 %v3060, %v3059
          %v3076 = vpack.c.b16 %v3062, %v3061
          %v3077 = vpack.c.b16 %v3064, %v3063
          %v3078 = vpack.c.b16 %v3066, %v3065
          %v3079 = vpack.c.b16 %v3068, %v3067
          %v3080 = vpack.c.b16 %v3070, %v3069
          %v3081 = vpack.c.b16 %v3072, %v3071
          %v3082 = vpack.c.b16 %v3074, %v3073
          %3091 = vmatpush.bf16.msra.mxu0 %v3082
          %3092 = vmatpush.bf16.msra.mxu0 %v3081
          %3093 = vmatpush.bf16.msra.mxu0 %v3080
          %3094 = vmatpush.bf16.msra.mxu0 %v3079
          %3095 = vmatpush.bf16.msra.mxu0 %v3078
          %3096 = vmatpush.bf16.msra.mxu0 %v3077
          %3097 = vmatpush.bf16.msra.mxu0 %v3076
          %3098 = vmatpush.bf16.msra.mxu0 %v3075
          %3099 = vmatmul.bf16.gmra.mxu0 %v3024
          %v3100 = vpop.f32.mrf.mxu0
          %v3101 = vadd.f32 0.0, %v3100
          %v3102 = vpop.f32.mrf.mxu0
          %v3103 = vadd.f32 0.0, %v3102
          %3104 = vmatmul.bf16.gmra.mxu0 %v3025
          %v3105 = vpop.f32.mrf.mxu0
          %v3106 = vadd.f32 0.0, %v3105
          %v3107 = vpop.f32.mrf.mxu0
          %v3108 = vadd.f32 0.0, %v3107
          %3109 = vdwg.mxu0
          %v3110 = vadd.f32 %v2983, %v3101
          %v3111 = vadd.f32 %v2984, %v3103
          %v3112 = vadd.f32 %v2985, %v3106
          %v3113 = vadd.f32 %v2986, %v3108
          %v3114 = vrot.slane %v2587, 2
          %v3115 = vrot.slane %v2588, 2
          %v3116 = vrot.slane %v2589, 2
          %v3117 = vrot.slane %v2590, 2
          %vm3118 = vcmp.lt.s32.totalorder %v2592, 6
          %v3119 = vsel %vm3118, %v3116, %v3117
          %v3120 = vsel %vm3118, %v3115, %v3116
          %v3121 = vsel %vm3118, %v3114, %v3115
          %v3122 = vsel %vm3118, %v3117, %v3114
          %v3123 = vadd.s32 %v2640, 2
          %v3124 = vadd.s32 %v2641, 2
          %v3125 = vadd.s32 %v2642, 2
          %v3126 = vadd.s32 %v2643, 2
          %vm3127 = vcmp.ge.s32.totalorder %v3123, 0
          %vm3128 = vcmp.ge.s32.totalorder %v3124, 0
          %vm3129 = vcmp.ge.s32.totalorder %v3125, 0
          %vm3130 = vcmp.ge.s32.totalorder %v3126, 0
          %vm3131 = vcmp.lt.s32.totalorder %v3123, 16
          %vm3132 = vcmp.lt.s32.totalorder %v3124, 16
          %vm3133 = vcmp.lt.s32.totalorder %v3125, 16
          %vm3134 = vcmp.lt.s32.totalorder %v3126, 16
          %vm3135 = vmand %vm3127, %vm3131
          %vm3136 = vmand %vm3128, %vm3132
          %vm3137 = vmand %vm3129, %vm3133
          %vm3138 = vmand %vm3130, %vm3134
          %v3139 = vsel %vm3135, 1, 0
          %v3140 = vsel %vm3136, 1, 0
          %v3141 = vsel %vm3137, 1, 0
          %v3142 = vsel %vm3138, 1, 0
          %vm3143 = vcmp.eq.s32.totalorder %v3139, 1
          %vm3144 = vcmp.eq.s32.totalorder %v3140, 1
          %vm3145 = vcmp.eq.s32.totalorder %v3141, 1
          %vm3146 = vcmp.eq.s32.totalorder %v3142, 1
          %v3147 = vsel %vm3143, %v3121, 0.0
          %v3148 = vsel %vm3144, %v3120, 0.0
          %v3149 = vsel %vm3145, %v3119, 0.0
          %v3150 = vsel %vm3146, %v3122, 0.0
          %v3151 = vpack.c.bf16 %v3148, %v3147
          %v3152 = vpack.c.bf16 %v3150, %v3149
          %s3153 = scalar_lea.vmem [#allocation20], 256
          %v3154 = vld [vmem:[%s3153] sm:$0xf]
          %v3155 = vld [vmem:[%s3153 + $0x4] sm:$0xf]
          %v3156 = vld [vmem:[%s3153 + $0x8] sm:$0xf]
          %v3157 = vld [vmem:[%s3153 + $0xc] sm:$0xf]
          %v3158 = vld [vmem:[%s3153 + $0x10] sm:$0xf]
          %v3159 = vld [vmem:[%s3153 + $0x14] sm:$0xf]
          %v3160 = vld [vmem:[%s3153 + $0x18] sm:$0xf]
          %v3161 = vld [vmem:[%s3153 + $0x1c] sm:$0xf]
          %v3162 = vld [vmem:[%s3153 + $0x20] sm:$0xf]
          %v3163 = vld [vmem:[%s3153 + $0x24] sm:$0xf]
          %v3164 = vld [vmem:[%s3153 + $0x28] sm:$0xf]
          %v3165 = vld [vmem:[%s3153 + $0x2c] sm:$0xf]
          %v3166 = vld [vmem:[%s3153 + $0x30] sm:$0xf]
          %v3167 = vld [vmem:[%s3153 + $0x34] sm:$0xf]
          %v3168 = vld [vmem:[%s3153 + $0x38] sm:$0xf]
          %v3169 = vld [vmem:[%s3153 + $0x3c] sm:$0xf]
          %v3186 = vunpack.c.l.b16 %v3154
          %v3187 = vunpack.c.l.b16 %v3155
          %v3188 = vunpack.c.l.b16 %v3156
          %v3189 = vunpack.c.l.b16 %v3157
          %v3190 = vunpack.c.l.b16 %v3158
          %v3191 = vunpack.c.l.b16 %v3159
          %v3192 = vunpack.c.l.b16 %v3160
          %v3193 = vunpack.c.l.b16 %v3161
          %v3194 = vunpack.c.l.b16 %v3162
          %v3195 = vunpack.c.l.b16 %v3163
          %v3196 = vunpack.c.l.b16 %v3164
          %v3197 = vunpack.c.l.b16 %v3165
          %v3198 = vunpack.c.l.b16 %v3166
          %v3199 = vunpack.c.l.b16 %v3167
          %v3200 = vunpack.c.l.b16 %v3168
          %v3201 = vunpack.c.l.b16 %v3169
          %v3202 = vpack.c.b16 %v3187, %v3186
          %v3203 = vpack.c.b16 %v3189, %v3188
          %v3204 = vpack.c.b16 %v3191, %v3190
          %v3205 = vpack.c.b16 %v3193, %v3192
          %v3206 = vpack.c.b16 %v3195, %v3194
          %v3207 = vpack.c.b16 %v3197, %v3196
          %v3208 = vpack.c.b16 %v3199, %v3198
          %v3209 = vpack.c.b16 %v3201, %v3200
          %3218 = vmatpush.bf16.msra.mxu0 %v3209
          %3219 = vmatpush.bf16.msra.mxu0 %v3208
          %3220 = vmatpush.bf16.msra.mxu0 %v3207
          %3221 = vmatpush.bf16.msra.mxu0 %v3206
          %3222 = vmatpush.bf16.msra.mxu0 %v3205
          %3223 = vmatpush.bf16.msra.mxu0 %v3204
          %3224 = vmatpush.bf16.msra.mxu0 %v3203
          %3225 = vmatpush.bf16.msra.mxu0 %v3202
          %3226 = vmatmul.bf16.gmra.mxu0 %v3151
          %v3227 = vpop.f32.mrf.mxu0
          %v3228 = vadd.f32 0.0, %v3227
          %v3229 = vpop.f32.mrf.mxu0
          %v3230 = vadd.f32 0.0, %v3229
          %3231 = vmatmul.bf16.gmra.mxu0 %v3152
          %v3232 = vpop.f32.mrf.mxu0
          %v3233 = vadd.f32 0.0, %v3232
          %v3234 = vpop.f32.mrf.mxu0
          %v3235 = vadd.f32 0.0, %v3234
          %3236 = vdwg.mxu0
          %v3237 = vadd.f32 %v3110, %v3228
          %v3238 = vadd.f32 %v3111, %v3230
          %v3239 = vadd.f32 %v3112, %v3233
          %v3240 = vadd.f32 %v3113, %v3235
          %v3241 = vmax.f32 %v3237, 0.0
          %v3242 = vmax.f32 %v3238, 0.0
          %v3243 = vmax.f32 %v3239, 0.0
          %v3244 = vmax.f32 %v3240, 0.0
          %v3245 = vpack.c.bf16 %v3242, %v3241
          %v3246 = vpack.c.bf16 %v3244, %v3243
          %s3247 = scalar_lea.vmem [#allocation21], 64
          %v3248 = vld [vmem:[%s3247] sm:$0xf]
          %v3249 = vld [vmem:[%s3247 + $0x4] sm:$0xf]
          %v3250 = vld [vmem:[%s3247 + $0x8] sm:$0xf]
          %v3251 = vld [vmem:[%s3247 + $0xc] sm:$0xf]
          %v3252 = vld [vmem:[%s3247 + $0x10] sm:$0xf]
          %v3253 = vld [vmem:[%s3247 + $0x14] sm:$0xf]
          %v3254 = vld [vmem:[%s3247 + $0x18] sm:$0xf]
          %v3255 = vld [vmem:[%s3247 + $0x1c] sm:$0xf]
          %v3256 = vld [vmem:[%s3247 + $0x20] sm:$0xf]
          %v3257 = vld [vmem:[%s3247 + $0x24] sm:$0xf]
          %v3258 = vld [vmem:[%s3247 + $0x28] sm:$0xf]
          %v3259 = vld [vmem:[%s3247 + $0x2c] sm:$0xf]
          %v3260 = vld [vmem:[%s3247 + $0x30] sm:$0xf]
          %v3261 = vld [vmem:[%s3247 + $0x34] sm:$0xf]
          %v3262 = vld [vmem:[%s3247 + $0x38] sm:$0xf]
          %v3263 = vld [vmem:[%s3247 + $0x3c] sm:$0xf]
          %v3264 = vld [vmem:[%s23] sm:$0x1]
          %v3266 = vperm.slane %v3264, 0
          %v3284 = vunpack.c.l.b16 %v3248
          %v3285 = vunpack.c.l.b16 %v3249
          %v3286 = vunpack.c.l.b16 %v3250
          %v3287 = vunpack.c.l.b16 %v3251
          %v3288 = vunpack.c.l.b16 %v3252
          %v3289 = vunpack.c.l.b16 %v3253
          %v3290 = vunpack.c.l.b16 %v3254
          %v3291 = vunpack.c.l.b16 %v3255
          %v3292 = vunpack.c.l.b16 %v3256
          %v3293 = vunpack.c.l.b16 %v3257
          %v3294 = vunpack.c.l.b16 %v3258
          %v3295 = vunpack.c.l.b16 %v3259
          %v3296 = vunpack.c.l.b16 %v3260
          %v3297 = vunpack.c.l.b16 %v3261
          %v3298 = vunpack.c.l.b16 %v3262
          %v3299 = vunpack.c.l.b16 %v3263
          %v3300 = vpack.c.b16 %v3285, %v3284
          %v3301 = vpack.c.b16 %v3287, %v3286
          %v3302 = vpack.c.b16 %v3289, %v3288
          %v3303 = vpack.c.b16 %v3291, %v3290
          %v3304 = vpack.c.b16 %v3293, %v3292
          %v3305 = vpack.c.b16 %v3295, %v3294
          %v3306 = vpack.c.b16 %v3297, %v3296
          %v3307 = vpack.c.b16 %v3299, %v3298
          %3316 = vmatpush.bf16.msra.mxu0 %v3307
          %3317 = vmatpush.bf16.msra.mxu0 %v3306
          %3318 = vmatpush.bf16.msra.mxu0 %v3305
          %3319 = vmatpush.bf16.msra.mxu0 %v3304
          %3320 = vmatpush.bf16.msra.mxu0 %v3303
          %3321 = vmatpush.bf16.msra.mxu0 %v3302
          %3322 = vmatpush.bf16.msra.mxu0 %v3301
          %3323 = vmatpush.bf16.msra.mxu0 %v3300
          %3324 = vmatmul.bf16.gmra.mxu0 %v3245
          %v3325 = vpop.f32.mrf.mxu0
          %v3326 = vadd.f32 %v3266, %v3325
          %v3327 = vpop.f32.mrf.mxu0
          %v3328 = vadd.f32 %v3266, %v3327
          %3329 = vmatmul.bf16.gmra.mxu0 %v3246
          %v3330 = vpop.f32.mrf.mxu0
          %v3331 = vadd.f32 %v3266, %v3330
          %v3332 = vpop.f32.mrf.mxu0
          %v3333 = vadd.f32 %v3266, %v3332
          %3334 = vdwg.mxu0
          %v3335 = vrot.slane %v3241, 7
          %v3336 = vrot.slane %v3242, 7
          %v3337 = vrot.slane %v3243, 7
          %v3338 = vrot.slane %v3244, 7
          %v3339 = vsel %vm2864, %v3337, %v3338
          %v3340 = vsel %vm2864, %v3336, %v3337
          %v3341 = vsel %vm2864, %v3335, %v3336
          %v3342 = vsel %vm2864, %v3338, %v3335
          %v3343 = vsel %vm2889, %v3342, 0.0
          %v3344 = vsel %vm2890, %v3341, 0.0
          %v3345 = vsel %vm2891, %v3340, 0.0
          %v3346 = vsel %vm2892, %v3339, 0.0
          %v3347 = vpack.c.bf16 %v3344, %v3343
          %v3348 = vpack.c.bf16 %v3346, %v3345
          %v3349 = vld [vmem:[#allocation21] sm:$0xf]
          %v3350 = vld [vmem:[#allocation21 + $0x4] sm:$0xf]
          %v3351 = vld [vmem:[#allocation21 + $0x8] sm:$0xf]
          %v3352 = vld [vmem:[#allocation21 + $0xc] sm:$0xf]
          %v3353 = vld [vmem:[#allocation21 + $0x10] sm:$0xf]
          %v3354 = vld [vmem:[#allocation21 + $0x14] sm:$0xf]
          %v3355 = vld [vmem:[#allocation21 + $0x18] sm:$0xf]
          %v3356 = vld [vmem:[#allocation21 + $0x1c] sm:$0xf]
          %v3357 = vld [vmem:[#allocation21 + $0x20] sm:$0xf]
          %v3358 = vld [vmem:[#allocation21 + $0x24] sm:$0xf]
          %v3359 = vld [vmem:[#allocation21 + $0x28] sm:$0xf]
          %v3360 = vld [vmem:[#allocation21 + $0x2c] sm:$0xf]
          %v3361 = vld [vmem:[#allocation21 + $0x30] sm:$0xf]
          %v3362 = vld [vmem:[#allocation21 + $0x34] sm:$0xf]
          %v3363 = vld [vmem:[#allocation21 + $0x38] sm:$0xf]
          %v3364 = vld [vmem:[#allocation21 + $0x3c] sm:$0xf]
          %v3381 = vunpack.c.l.b16 %v3349
          %v3382 = vunpack.c.l.b16 %v3350
          %v3383 = vunpack.c.l.b16 %v3351
          %v3384 = vunpack.c.l.b16 %v3352
          %v3385 = vunpack.c.l.b16 %v3353
          %v3386 = vunpack.c.l.b16 %v3354
          %v3387 = vunpack.c.l.b16 %v3355
          %v3388 = vunpack.c.l.b16 %v3356
          %v3389 = vunpack.c.l.b16 %v3357
          %v3390 = vunpack.c.l.b16 %v3358
          %v3391 = vunpack.c.l.b16 %v3359
          %v3392 = vunpack.c.l.b16 %v3360
          %v3393 = vunpack.c.l.b16 %v3361
          %v3394 = vunpack.c.l.b16 %v3362
          %v3395 = vunpack.c.l.b16 %v3363
          %v3396 = vunpack.c.l.b16 %v3364
          %v3397 = vpack.c.b16 %v3382, %v3381
          %v3398 = vpack.c.b16 %v3384, %v3383
          %v3399 = vpack.c.b16 %v3386, %v3385
          %v3400 = vpack.c.b16 %v3388, %v3387
          %v3401 = vpack.c.b16 %v3390, %v3389
          %v3402 = vpack.c.b16 %v3392, %v3391
          %v3403 = vpack.c.b16 %v3394, %v3393
          %v3404 = vpack.c.b16 %v3396, %v3395
          %3413 = vmatpush.bf16.msra.mxu0 %v3404
          %3414 = vmatpush.bf16.msra.mxu0 %v3403
          %3415 = vmatpush.bf16.msra.mxu0 %v3402
          %3416 = vmatpush.bf16.msra.mxu0 %v3401
          %3417 = vmatpush.bf16.msra.mxu0 %v3400
          %3418 = vmatpush.bf16.msra.mxu0 %v3399
          %3419 = vmatpush.bf16.msra.mxu0 %v3398
          %3420 = vmatpush.bf16.msra.mxu0 %v3397
          %3421 = vmatmul.bf16.gmra.mxu0 %v3347
          %v3422 = vpop.f32.mrf.mxu0
          %v3423 = vadd.f32 0.0, %v3422
          %v3424 = vpop.f32.mrf.mxu0
          %v3425 = vadd.f32 0.0, %v3424
          %3426 = vmatmul.bf16.gmra.mxu0 %v3348
          %v3427 = vpop.f32.mrf.mxu0
          %v3428 = vadd.f32 0.0, %v3427
          %v3429 = vpop.f32.mrf.mxu0
          %v3430 = vadd.f32 0.0, %v3429
          %3431 = vdwg.mxu0
          %v3432 = vadd.f32 %v3326, %v3423
          %v3433 = vadd.f32 %v3328, %v3425
          %v3434 = vadd.f32 %v3331, %v3428
          %v3435 = vadd.f32 %v3333, %v3430
          %v3436 = vrot.slane %v3241, 1
          %v3437 = vrot.slane %v3242, 1
          %v3438 = vrot.slane %v3243, 1
          %v3439 = vrot.slane %v3244, 1
          %v3440 = vsel %vm2991, %v3438, %v3439
          %v3441 = vsel %vm2991, %v3437, %v3438
          %v3442 = vsel %vm2991, %v3436, %v3437
          %v3443 = vsel %vm2991, %v3439, %v3436
          %v3444 = vsel %vm3016, %v3442, 0.0
          %v3445 = vsel %vm3017, %v3441, 0.0
          %v3446 = vsel %vm3018, %v3440, 0.0
          %v3447 = vsel %vm3019, %v3443, 0.0
          %v3448 = vpack.c.bf16 %v3445, %v3444
          %v3449 = vpack.c.bf16 %v3447, %v3446
          %s3450 = scalar_lea.vmem [#allocation21], 128
          %v3451 = vld [vmem:[%s3450] sm:$0xf]
          %v3452 = vld [vmem:[%s3450 + $0x4] sm:$0xf]
          %v3453 = vld [vmem:[%s3450 + $0x8] sm:$0xf]
          %v3454 = vld [vmem:[%s3450 + $0xc] sm:$0xf]
          %v3455 = vld [vmem:[%s3450 + $0x10] sm:$0xf]
          %v3456 = vld [vmem:[%s3450 + $0x14] sm:$0xf]
          %v3457 = vld [vmem:[%s3450 + $0x18] sm:$0xf]
          %v3458 = vld [vmem:[%s3450 + $0x1c] sm:$0xf]
          %v3459 = vld [vmem:[%s3450 + $0x20] sm:$0xf]
          %v3460 = vld [vmem:[%s3450 + $0x24] sm:$0xf]
          %v3461 = vld [vmem:[%s3450 + $0x28] sm:$0xf]
          %v3462 = vld [vmem:[%s3450 + $0x2c] sm:$0xf]
          %v3463 = vld [vmem:[%s3450 + $0x30] sm:$0xf]
          %v3464 = vld [vmem:[%s3450 + $0x34] sm:$0xf]
          %v3465 = vld [vmem:[%s3450 + $0x38] sm:$0xf]
          %v3466 = vld [vmem:[%s3450 + $0x3c] sm:$0xf]
          %v3483 = vunpack.c.l.b16 %v3451
          %v3484 = vunpack.c.l.b16 %v3452
          %v3485 = vunpack.c.l.b16 %v3453
          %v3486 = vunpack.c.l.b16 %v3454
          %v3487 = vunpack.c.l.b16 %v3455
          %v3488 = vunpack.c.l.b16 %v3456
          %v3489 = vunpack.c.l.b16 %v3457
          %v3490 = vunpack.c.l.b16 %v3458
          %v3491 = vunpack.c.l.b16 %v3459
          %v3492 = vunpack.c.l.b16 %v3460
          %v3493 = vunpack.c.l.b16 %v3461
          %v3494 = vunpack.c.l.b16 %v3462
          %v3495 = vunpack.c.l.b16 %v3463
          %v3496 = vunpack.c.l.b16 %v3464
          %v3497 = vunpack.c.l.b16 %v3465
          %v3498 = vunpack.c.l.b16 %v3466
          %v3499 = vpack.c.b16 %v3484, %v3483
          %v3500 = vpack.c.b16 %v3486, %v3485
          %v3501 = vpack.c.b16 %v3488, %v3487
          %v3502 = vpack.c.b16 %v3490, %v3489
          %v3503 = vpack.c.b16 %v3492, %v3491
          %v3504 = vpack.c.b16 %v3494, %v3493
          %v3505 = vpack.c.b16 %v3496, %v3495
          %v3506 = vpack.c.b16 %v3498, %v3497
          %3515 = vmatpush.bf16.msra.mxu0 %v3506
          %3516 = vmatpush.bf16.msra.mxu0 %v3505
          %3517 = vmatpush.bf16.msra.mxu0 %v3504
          %3518 = vmatpush.bf16.msra.mxu0 %v3503
          %3519 = vmatpush.bf16.msra.mxu0 %v3502
          %3520 = vmatpush.bf16.msra.mxu0 %v3501
          %3521 = vmatpush.bf16.msra.mxu0 %v3500
          %3522 = vmatpush.bf16.msra.mxu0 %v3499
          %3523 = vmatmul.bf16.gmra.mxu0 %v3448
          %v3524 = vpop.f32.mrf.mxu0
          %v3525 = vadd.f32 0.0, %v3524
          %v3526 = vpop.f32.mrf.mxu0
          %v3527 = vadd.f32 0.0, %v3526
          %3528 = vmatmul.bf16.gmra.mxu0 %v3449
          %v3529 = vpop.f32.mrf.mxu0
          %v3530 = vadd.f32 0.0, %v3529
          %v3531 = vpop.f32.mrf.mxu0
          %v3532 = vadd.f32 0.0, %v3531
          %3533 = vdwg.mxu0
          %v3534 = vadd.f32 %v3432, %v3525
          %v3535 = vadd.f32 %v3433, %v3527
          %v3536 = vadd.f32 %v3434, %v3530
          %v3537 = vadd.f32 %v3435, %v3532
          %3538 = vst [vmem:[#allocation22] sm:$0xff] %v3534
          %3539 = vst [vmem:[#allocation22 + $0x8] sm:$0xff] %v3535
          %3540 = vst [vmem:[#allocation22 + $0x10] sm:$0xff] %v3536
          %3541 = vst [vmem:[#allocation22 + $0x18] sm:$0xff] %v3537
        $region184: #{tpu_custom_call.1} parent=115 // pred_fallthru
          _
        // Predicated region
        $region185: #{tpu_custom_call.1} parent=115 // pred_check
          %p3542 = pneg %p616
        $region186: #{tpu_custom_call.1} parent=115 // pred_check_branch
          %3544 = sbr.rel (%p3542) target = $region188
        $region187: #{tpu_custom_call.1} parent=115 // pred_region
          %3546 = vsyncadd [#allocation5], 0
          %s3547 = sshll.u32 [#allocation22], 4
          %s3548 = int_to_ptr.vmem [resolvable:$true] %s3547
          %s3549 = sshll.u32 %s24, 4
          %s3550 = int_to_ptr.hbm [resolvable:$true] %s3549
          %3555 = dma.vmem_to_hbm [thread:$0]  %s3548, 512, %s3550, [#allocation5], 128, 128, 8
        $region188: #{tpu_custom_call.1} parent=115 // pred_fallthru
          _
        // Predicated region
        $region189: #{tpu_custom_call.1} parent=115 // pred_check
          %p3556 = pneg %p616
        $region190: #{tpu_custom_call.1} parent=115 // pred_check_branch
          %3558 = sbr.rel (%p3556) target = $region192
        $region191: #{tpu_custom_call.1} parent=115 // pred_region
          %3560 = dma.done [#allocation5], 512
        $region192: #{tpu_custom_call.1} parent=115 // pred_fallthru
          _
      $region116: #{tpu_custom_call.1} parent=5 // pred_fallthru
        _
      %p3561 = scmp.le.s32.totalorder 2, %s34
      // Predicated region
      $region193: #{tpu_custom_call.1} parent=5 // pred_check
        %p3562 = pneg %p3561
      $region194: #{tpu_custom_call.1} parent=5 // pred_check_branch
        %3564 = sbr.rel (%p3562) target = $region196
      $region195: #{tpu_custom_call.1} parent=5 // pred_region
        %s3565 = ssub.s32 %s34, 2
      $region196: #{tpu_custom_call.1} parent=5 // pred_fallthru
        _
    $region6: #{tpu_custom_call.1} parent=1 // loop_footer
      %s38 = sadd.s32 1, %s34
    $region7: #{tpu_custom_call.1} parent=1 // loop_footer_branch
      %33 = sbr.rel target = $region3
    $region8: #{tpu_custom_call.1} parent=1 // loop_exit
      _
    %3566 = vsyncpa [#allocation4], 1
    %s3567 = scalar_lea.sflag [#allocation4], 1
    %3568 = vsyncpa %s3567, 1
    %3569 = vsyncpa [#allocation7], 1
    %3570 = vsyncpa [#allocation10], 1
    %3571 = vsyncpa [#allocation5], 1
    %s3572 = scalar_lea.sflag [#allocation5], 1
    %3573 = vsyncpa %s3572, 1

</llo_original>
